<compile_context>
chip_gen: v7x
topology: tpu7x:2x2x1
jax: 0.10.0
libtpu: 0.0.40
codegen_flags: <defaults>
</compile_context>

<pallas_src>
import jax
import jax.numpy as jnp
from jax.experimental import pallas as pl
from jax.experimental.pallas import tpu as pltpu

EPS = 1e-5  # nn.BatchNorm2d default eps


def _round_up(v, m):
    return ((v + m - 1) // m) * m


# ----------------------------- kernels ------------------------------------ #

def _conv_into_acc(x_ref, w_ref, acc_ref, *, kh, kw, stride, oh, ow):
    """Accumulate the conv output of this block into acc_ref (f32).

    x_ref:   (nb, Hp, Wp, Cin)        spatially padded NHWC activation block
    w_ref:   (KH, KW, Cin, Cout_pad)  per-tap weights (possibly BN-scale folded)
    acc_ref: (nb*OH*OW, Cout_pad)     f32 scratch accumulator
    """
    nb, _, _, cin = x_ref.shape
    first = True
    for i in range(kh):
        for j in range(kw):
            if stride == 1:
                patch = x_ref[:, pl.ds(i, oh), pl.ds(j, ow), :]
            else:
                patch = x_ref[:, pl.ds(i, oh, stride=stride),
                              pl.ds(j, ow, stride=stride), :]
            a = patch.reshape(nb * oh * ow, cin)
            contrib = jnp.dot(a, w_ref[i, j], preferred_element_type=jnp.float32)
            if first:
                acc_ref[...] = contrib
                first = False
            else:
                acc_ref[...] += contrib


def _make_stats_kernel(kh, kw, stride, oh, ow):
    """Pass 1: per-grid-step partial sum / sum-of-squares of the conv output."""
    def kernel(x_ref, w_ref, stats_ref, acc_ref):
        _conv_into_acc(x_ref, w_ref, acc_ref, kh=kh, kw=kw, stride=stride, oh=oh, ow=ow)
        y = acc_ref[...]
        stats_ref[0, 0:1, :] = jnp.sum(y, axis=0, keepdims=True)
        stats_ref[0, 1:2, :] = jnp.sum(y * y, axis=0, keepdims=True)
    return kernel


def _make_apply_kernel(kh, kw, stride, oh, ow):
    """Pass 2: recompute conv (scale pre-folded into weights) and add the BN shift."""
    def kernel(x_ref, w_ref, shift_ref, o_ref, acc_ref):
        _conv_into_acc(x_ref, w_ref, acc_ref, kh=kh, kw=kw, stride=stride, oh=oh, ow=ow)
        o_ref[0] = (acc_ref[...] + shift_ref[...]).astype(o_ref.dtype)
    return kernel


# ----------------------------- wrapper ------------------------------------ #

def conv_batchnorm_forward(x, weight, bias, gamma, beta, stride, padding,
                           *, batch_block=1, matmul_dtype=jnp.bfloat16, eps=EPS):
    """x: (N, Cin, H, W), weight: (Cout, Cin, KH, KW) -> (N, Cout, OH, OW) float32."""
    n, cin, h, w = x.shape
    cout, _, kh, kw = weight.shape
    oh = (h + 2 * padding - kh) // stride + 1
    ow = (w + 2 * padding - kw) // stride + 1
    hp, wp = h + 2 * padding, w + 2 * padding

    assert n % batch_block == 0, "batch_block must divide the batch size"
    grid_n = n // batch_block
    m_blk = batch_block * oh * ow        # conv-output rows per grid step
    m_total = n * oh * ow                # true M for the BN divisor (no padding rows)

    cout_pad = _round_up(cout, 128)      # lane-dense output channels

    # Conv bias cancels exactly under training-mode BN ((y+b) - mean(y+b) == y - mean(y)).
    del bias

    # Activation: spatially padded NHWC in the matmul dtype.  The only wrapper-side
    # activation materialization (the old (M, Cin*KH*KW) im2col matrix is gone).
    x_nhwc = jnp.pad(x, ((0, 0), (0, 0), (padding, padding), (padding, padding)))
    x_nhwc = jnp.transpose(x_nhwc, (0, 2, 3, 1)).astype(matmul_dtype)   # (N, Hp, Wp, Cin)

    # Weights: (Cout, Cin, KH, KW) -> (KH, KW, Cin, Cout_pad), kept in f32 for the fold.
    w_f32 = jnp.transpose(weight, (2, 3, 1, 0)).astype(jnp.float32)     # (KH, KW, Cin, Cout)
    w_f32 = jnp.zeros((kh, kw, cin, cout_pad), jnp.float32).at[..., :cout].set(w_f32)
    w_pass1 = w_f32.astype(matmul_dtype)

    # ---- VMEM budget with layout-padded dims; leave headroom under v7x's 64 MiB ----
    in_item = jnp.dtype(matmul_dtype).itemsize
    sub = 8 * (4 // in_item)                       # sublane packing: 8 (f32) / 16 (bf16)
    x_blk_bytes = batch_block * hp * _round_up(wp, sub) * _round_up(cin, 128) * in_item
    w_bytes = kh * kw * _round_up(cin, sub) * cout_pad * in_item
    m_blk_pad = _round_up(m_blk, 8)
    acc_bytes = m_blk_pad * cout_pad * 4
    out_blk_bytes = m_blk_pad * cout_pad * 4
    small_bytes = 2 * 8 * cout_pad * 4             # stats / shift blocks (sublane padded)
    needed = 2 * (x_blk_bytes + w_bytes + out_blk_bytes + small_bytes) + acc_bytes
    vmem_limit = int(min(needed + (8 << 20), 56 << 20))

    # ---- pass 1: partial per-channel sum / sum-sq per grid step (parallel axis) ----
    stats = pl.pallas_call(
        _make_stats_kernel(kh, kw, stride, oh, ow),
        out_shape=jax.ShapeDtypeStruct((grid_n, 2, cout_pad), jnp.float32),
        grid=(grid_n,),
        in_specs=[
            pl.BlockSpec((batch_block, hp, wp, cin), lambda i: (i, 0, 0, 0)),
            pl.BlockSpec((kh, kw, cin, cout_pad), lambda i: (0, 0, 0, 0)),   # resident
        ],
        out_specs=pl.BlockSpec((1, 2, cout_pad), lambda i: (i, 0, 0)),
        scratch_shapes=[pltpu.VMEM((m_blk, cout_pad), jnp.float32)],
        compiler_params=pltpu.CompilerParams(
            dimension_semantics=("parallel",),
            vmem_limit_bytes=vmem_limit,
        ),
    )(x_nhwc, w_pass1)

    # ---- tiny per-channel finalize in plain XLA ----
    ssum = jnp.sum(stats[:, 0, :], axis=0)
    ssq = jnp.sum(stats[:, 1, :], axis=0)
    mean = ssum / float(m_total)
    var = jnp.maximum(ssq / float(m_total) - mean * mean, 0.0)   # biased (training-mode) var
    inv = jax.lax.rsqrt(var + eps)
    gamma_pad = jnp.zeros((cout_pad,), jnp.float32).at[:cout].set(gamma.astype(jnp.float32))
    beta_pad = jnp.zeros((cout_pad,), jnp.float32).at[:cout].set(beta.astype(jnp.float32))
    scale = gamma_pad * inv
    shift = (beta_pad - mean * scale)[None, :]                   # (1, Cout_pad)
    w_pass2 = (w_f32 * scale).astype(matmul_dtype)               # fold BN scale into weights

    # ---- pass 2: recompute conv + add shift (parallel axis -> megacore) ----
    out = pl.pallas_call(
        _make_apply_kernel(kh, kw, stride, oh, ow),
        out_shape=jax.ShapeDtypeStruct((grid_n, m_blk, cout_pad), jnp.float32),
        grid=(grid_n,),
        in_specs=[
            pl.BlockSpec((batch_block, hp, wp, cin), lambda i: (i, 0, 0, 0)),
            pl.BlockSpec((kh, kw, cin, cout_pad), lambda i: (0, 0, 0, 0)),   # resident
            pl.BlockSpec((1, cout_pad), lambda i: (0, 0)),                   # resident
        ],
        out_specs=pl.BlockSpec((1, m_blk, cout_pad), lambda i: (i, 0, 0)),
        scratch_shapes=[pltpu.VMEM((m_blk, cout_pad), jnp.float32)],
        compiler_params=pltpu.CompilerParams(
            dimension_semantics=("parallel",),
            vmem_limit_bytes=vmem_limit,
        ),
    )(x_nhwc, w_pass2, shift)

    # (grid_n, batch_block*OH*OW, Cout_pad) -> (N, Cout, OH, OW)
    out = out.reshape(n, oh, ow, cout_pad)[..., :cout]
    return jnp.transpose(out, (0, 3, 1, 2))


# ----------------------------- reference ---------------------------------- #

def _reference(x, weight, bias, gamma, beta, stride, padding):
    y = jax.lax.conv_general_dilated(
        x, weight, window_strides=(stride, stride),
        padding=[(padding, padding), (padding, padding)],
        dimension_numbers=("NCHW", "OIHW", "NCHW"),
    ) + bias.reshape(1, -1, 1, 1)
    mean = jnp.mean(y, axis=(0, 2, 3), keepdims=True)
    var = jnp.mean((y - mean) ** 2, axis=(0, 2, 3), keepdims=True)
    return (y - mean) * jax.lax.rsqrt(var + EPS) * gamma.reshape(1, -1, 1, 1) + beta.reshape(1, -1, 1, 1)


if __name__ == "__main__":
    # ConvBatchNorm(in_channels=4, out_channels=8, kernel_size=3, stride=1, padding=1, bias=True)
    N, Cin, H, W = 2, 4, 16, 16
    Cout, KH, KW = 8, 3, 3
    stride, padding = 1, 1

    key = jax.random.PRNGKey(0)
    kx, kw_, kb, kg, kbe = jax.random.split(key, 5)
    x = jax.random.normal(kx, (N, Cin, H, W), dtype=jnp.float32)
    weight = jax.random.normal(kw_, (Cout, Cin, KH, KW), dtype=jnp.float32) * 0.1
    bias = jax.random.normal(kb, (Cout,), dtype=jnp.float32) * 0.1
    gamma = jax.random.normal(kg, (Cout,), dtype=jnp.float32) * 0.1 + 1.0
    beta = jax.random.normal(kbe, (Cout,), dtype=jnp.float32) * 0.1

    ref = _reference(x, weight, bias, gamma, beta, stride, padding)

    # f32 matmul path: tight semantic check of conv + training-mode BN.
    out_f32 = conv_batchnorm_forward(x, weight, bias, gamma, beta, stride, padding,
                                     matmul_dtype=jnp.float32)
    out_f32 = jax.block_until_ready(out_f32)
    assert out_f32.shape == (N, Cout, H, W), out_f32.shape
    err_f32 = float(jnp.max(jnp.abs(out_f32 - ref)))
    assert jnp.allclose(out_f32, ref, atol=2e-4, rtol=2e-4), err_f32

    # Default bf16 matmul path (performance config); tolerance widened for bf16 rounding
    # of activations and scale-folded weights (accumulation stays f32).
    out_bf16 = conv_batchnorm_forward(x, weight, bias, gamma, beta, stride, padding)
    out_bf16 = jax.block_until_ready(out_bf16)
    assert out_bf16.shape == (N, Cout, H, W), out_bf16.shape
    err_bf16 = float(jnp.max(jnp.abs(out_bf16 - ref)))
    assert jnp.allclose(out_bf16, ref, atol=5e-2, rtol=5e-2), err_bf16

    print("KERNEL_OK")
</pallas_src>

<mosaic_0001>
module attributes {stable_mosaic.version = 11 : i64} {
  func.func @kernel(%arg0: i32, %arg1: memref<1x18x18x4xf32, #tpu.memory_space<vmem>>, %arg2: memref<3x3x4x128xf32, #tpu.memory_space<vmem>>, %arg3: memref<1x2x128xf32, #tpu.memory_space<vmem>>, %arg4: memref<256x128xf32, #tpu.memory_space<vmem>>) attributes {dimension_semantics = [#tpu.dimension_semantics<parallel>], iteration_bounds = array<i64: 2>, scalar_prefetch = 0 : i64, scratch_operands = 1 : i64, tpu.core_type = #tpu.core_type<tc>, window_params = [{transform_indices = @transform_0, window_bounds = array<i64: 1, 18, 18, 4>}, {pipeline_mode = #tpu.pipeline_mode<synchronous>, transform_indices = @transform_1, window_bounds = array<i64: 3, 3, 4, 128>}, {transform_indices = @transform_2, window_bounds = array<i64: 1, 2, 128>}]} {
    %c0 = arith.constant 0 : index
    %c0_0 = arith.constant 0 : index
    %c0_1 = arith.constant 0 : index
    %c0_2 = arith.constant 0 : index
    %0 = vector.load %arg1[%c0, %c0_0, %c0_1, %c0_2] : memref<1x18x18x4xf32, #tpu.memory_space<vmem>>, vector<1x16x16x4xf32>
    %1 = vector.shape_cast %0 : vector<1x16x16x4xf32> to vector<256x4xf32>
    %c0_3 = arith.constant 0 : index
    %c0_4 = arith.constant 0 : index
    %c0_5 = arith.constant 0 : index
    %c0_6 = arith.constant 0 : index
    %2 = vector.load %arg2[%c0_3, %c0_4, %c0_5, %c0_6] : memref<3x3x4x128xf32, #tpu.memory_space<vmem>>, vector<1x1x4x128xf32>
    %3 = vector.shape_cast %2 : vector<1x1x4x128xf32> to vector<4x128xf32>
    %cst = arith.constant dense<0.000000e+00> : vector<256x128xf32>
    %4 = tpu.matmul %1, %3, %cst {dimension_numbers = #tpu.dot_dimension_numbers<[1], [0], [0], [1], [0, 0, 1, 1], [], []>} : vector<256x4xf32>, vector<4x128xf32>, vector<256x128xf32> -> vector<256x128xf32>
    %c0_7 = arith.constant 0 : index
    %c0_8 = arith.constant 0 : index
    %5 = vector.load %arg4[%c0_7, %c0_8] : memref<256x128xf32, #tpu.memory_space<vmem>>, vector<256x128xf32>
    tpu.vector_store %arg4[%c0_7, %c0_8], %4 {strides = array<i32>} : memref<256x128xf32, #tpu.memory_space<vmem>>, vector<256x128xf32>,
    %c0_9 = arith.constant 0 : index
    %c0_10 = arith.constant 0 : index
    %c1 = arith.constant 1 : index
    %c0_11 = arith.constant 0 : index
    %6 = vector.load %arg1[%c0_9, %c0_10, %c1, %c0_11] : memref<1x18x18x4xf32, #tpu.memory_space<vmem>>, vector<1x16x16x4xf32>
    %7 = vector.shape_cast %6 : vector<1x16x16x4xf32> to vector<256x4xf32>
    %c0_12 = arith.constant 0 : index
    %c1_13 = arith.constant 1 : index
    %c0_14 = arith.constant 0 : index
    %c0_15 = arith.constant 0 : index
    %8 = vector.load %arg2[%c0_12, %c1_13, %c0_14, %c0_15] : memref<3x3x4x128xf32, #tpu.memory_space<vmem>>, vector<1x1x4x128xf32>
    %9 = vector.shape_cast %8 : vector<1x1x4x128xf32> to vector<4x128xf32>
    %cst_16 = arith.constant dense<0.000000e+00> : vector<256x128xf32>
    %10 = tpu.matmul %7, %9, %cst_16 {dimension_numbers = #tpu.dot_dimension_numbers<[1], [0], [0], [1], [0, 0, 1, 1], [], []>} : vector<256x4xf32>, vector<4x128xf32>, vector<256x128xf32> -> vector<256x128xf32>
    %c0_17 = arith.constant 0 : index
    %c0_18 = arith.constant 0 : index
    %11 = vector.load %arg4[%c0_17, %c0_18] : memref<256x128xf32, #tpu.memory_space<vmem>>, vector<256x128xf32>
    %12 = arith.addf %11, %10 : vector<256x128xf32>
    %c0_19 = arith.constant 0 : index
    %c0_20 = arith.constant 0 : index
    %13 = vector.load %arg4[%c0_19, %c0_20] : memref<256x128xf32, #tpu.memory_space<vmem>>, vector<256x128xf32>
    tpu.vector_store %arg4[%c0_19, %c0_20], %12 {strides = array<i32>} : memref<256x128xf32, #tpu.memory_space<vmem>>, vector<256x128xf32>,
    %c0_21 = arith.constant 0 : index
    %c0_22 = arith.constant 0 : index
    %c2 = arith.constant 2 : index
    %c0_23 = arith.constant 0 : index
    %14 = vector.load %arg1[%c0_21, %c0_22, %c2, %c0_23] : memref<1x18x18x4xf32, #tpu.memory_space<vmem>>, vector<1x16x16x4xf32>
    %15 = vector.shape_cast %14 : vector<1x16x16x4xf32> to vector<256x4xf32>
    %c0_24 = arith.constant 0 : index
    %c2_25 = arith.constant 2 : index
    %c0_26 = arith.constant 0 : index
    %c0_27 = arith.constant 0 : index
    %16 = vector.load %arg2[%c0_24, %c2_25, %c0_26, %c0_27] : memref<3x3x4x128xf32, #tpu.memory_space<vmem>>, vector<1x1x4x128xf32>
    %17 = vector.shape_cast %16 : vector<1x1x4x128xf32> to vector<4x128xf32>
    %cst_28 = arith.constant dense<0.000000e+00> : vector<256x128xf32>
    %18 = tpu.matmul %15, %17, %cst_28 {dimension_numbers = #tpu.dot_dimension_numbers<[1], [0], [0], [1], [0, 0, 1, 1], [], []>} : vector<256x4xf32>, vector<4x128xf32>, vector<256x128xf32> -> vector<256x128xf32>
    %c0_29 = arith.constant 0 : index
    %c0_30 = arith.constant 0 : index
    %19 = vector.load %arg4[%c0_29, %c0_30] : memref<256x128xf32, #tpu.memory_space<vmem>>, vector<256x128xf32>
    %20 = arith.addf %19, %18 : vector<256x128xf32>
    %c0_31 = arith.constant 0 : index
    %c0_32 = arith.constant 0 : index
    %21 = vector.load %arg4[%c0_31, %c0_32] : memref<256x128xf32, #tpu.memory_space<vmem>>, vector<256x128xf32>
    tpu.vector_store %arg4[%c0_31, %c0_32], %20 {strides = array<i32>} : memref<256x128xf32, #tpu.memory_space<vmem>>, vector<256x128xf32>,
    %c0_33 = arith.constant 0 : index
    %c1_34 = arith.constant 1 : index
    %c0_35 = arith.constant 0 : index
    %c0_36 = arith.constant 0 : index
    %22 = vector.load %arg1[%c0_33, %c1_34, %c0_35, %c0_36] : memref<1x18x18x4xf32, #tpu.memory_space<vmem>>, vector<1x16x16x4xf32>
    %23 = vector.shape_cast %22 : vector<1x16x16x4xf32> to vector<256x4xf32>
    %c1_37 = arith.constant 1 : index
    %c0_38 = arith.constant 0 : index
    %c0_39 = arith.constant 0 : index
    %c0_40 = arith.constant 0 : index
    %24 = vector.load %arg2[%c1_37, %c0_38, %c0_39, %c0_40] : memref<3x3x4x128xf32, #tpu.memory_space<vmem>>, vector<1x1x4x128xf32>
    %25 = vector.shape_cast %24 : vector<1x1x4x128xf32> to vector<4x128xf32>
    %cst_41 = arith.constant dense<0.000000e+00> : vector<256x128xf32>
    %26 = tpu.matmul %23, %25, %cst_41 {dimension_numbers = #tpu.dot_dimension_numbers<[1], [0], [0], [1], [0, 0, 1, 1], [], []>} : vector<256x4xf32>, vector<4x128xf32>, vector<256x128xf32> -> vector<256x128xf32>
    %c0_42 = arith.constant 0 : index
    %c0_43 = arith.constant 0 : index
    %27 = vector.load %arg4[%c0_42, %c0_43] : memref<256x128xf32, #tpu.memory_space<vmem>>, vector<256x128xf32>
    %28 = arith.addf %27, %26 : vector<256x128xf32>
    %c0_44 = arith.constant 0 : index
    %c0_45 = arith.constant 0 : index
    %29 = vector.load %arg4[%c0_44, %c0_45] : memref<256x128xf32, #tpu.memory_space<vmem>>, vector<256x128xf32>
    tpu.vector_store %arg4[%c0_44, %c0_45], %28 {strides = array<i32>} : memref<256x128xf32, #tpu.memory_space<vmem>>, vector<256x128xf32>,
    %c0_46 = arith.constant 0 : index
    %c1_47 = arith.constant 1 : index
    %c1_48 = arith.constant 1 : index
    %c0_49 = arith.constant 0 : index
    %30 = vector.load %arg1[%c0_46, %c1_47, %c1_48, %c0_49] : memref<1x18x18x4xf32, #tpu.memory_space<vmem>>, vector<1x16x16x4xf32>
    %31 = vector.shape_cast %30 : vector<1x16x16x4xf32> to vector<256x4xf32>
    %c1_50 = arith.constant 1 : index
    %c1_51 = arith.constant 1 : index
    %c0_52 = arith.constant 0 : index
    %c0_53 = arith.constant 0 : index
    %32 = vector.load %arg2[%c1_50, %c1_51, %c0_52, %c0_53] : memref<3x3x4x128xf32, #tpu.memory_space<vmem>>, vector<1x1x4x128xf32>
    %33 = vector.shape_cast %32 : vector<1x1x4x128xf32> to vector<4x128xf32>
    %cst_54 = arith.constant dense<0.000000e+00> : vector<256x128xf32>
    %34 = tpu.matmul %31, %33, %cst_54 {dimension_numbers = #tpu.dot_dimension_numbers<[1], [0], [0], [1], [0, 0, 1, 1], [], []>} : vector<256x4xf32>, vector<4x128xf32>, vector<256x128xf32> -> vector<256x128xf32>
    %c0_55 = arith.constant 0 : index
    %c0_56 = arith.constant 0 : index
    %35 = vector.load %arg4[%c0_55, %c0_56] : memref<256x128xf32, #tpu.memory_space<vmem>>, vector<256x128xf32>
    %36 = arith.addf %35, %34 : vector<256x128xf32>
    %c0_57 = arith.constant 0 : index
    %c0_58 = arith.constant 0 : index
    %37 = vector.load %arg4[%c0_57, %c0_58] : memref<256x128xf32, #tpu.memory_space<vmem>>, vector<256x128xf32>
    tpu.vector_store %arg4[%c0_57, %c0_58], %36 {strides = array<i32>} : memref<256x128xf32, #tpu.memory_space<vmem>>, vector<256x128xf32>,
    %c0_59 = arith.constant 0 : index
    %c1_60 = arith.constant 1 : index
    %c2_61 = arith.constant 2 : index
    %c0_62 = arith.constant 0 : index
    %38 = vector.load %arg1[%c0_59, %c1_60, %c2_61, %c0_62] : memref<1x18x18x4xf32, #tpu.memory_space<vmem>>, vector<1x16x16x4xf32>
    %39 = vector.shape_cast %38 : vector<1x16x16x4xf32> to vector<256x4xf32>
    %c1_63 = arith.constant 1 : index
    %c2_64 = arith.constant 2 : index
    %c0_65 = arith.constant 0 : index
    %c0_66 = arith.constant 0 : index
    %40 = vector.load %arg2[%c1_63, %c2_64, %c0_65, %c0_66] : memref<3x3x4x128xf32, #tpu.memory_space<vmem>>, vector<1x1x4x128xf32>
    %41 = vector.shape_cast %40 : vector<1x1x4x128xf32> to vector<4x128xf32>
    %cst_67 = arith.constant dense<0.000000e+00> : vector<256x128xf32>
    %42 = tpu.matmul %39, %41, %cst_67 {dimension_numbers = #tpu.dot_dimension_numbers<[1], [0], [0], [1], [0, 0, 1, 1], [], []>} : vector<256x4xf32>, vector<4x128xf32>, vector<256x128xf32> -> vector<256x128xf32>
    %c0_68 = arith.constant 0 : index
    %c0_69 = arith.constant 0 : index
    %43 = vector.load %arg4[%c0_68, %c0_69] : memref<256x128xf32, #tpu.memory_space<vmem>>, vector<256x128xf32>
    %44 = arith.addf %43, %42 : vector<256x128xf32>
    %c0_70 = arith.constant 0 : index
    %c0_71 = arith.constant 0 : index
    %45 = vector.load %arg4[%c0_70, %c0_71] : memref<256x128xf32, #tpu.memory_space<vmem>>, vector<256x128xf32>
    tpu.vector_store %arg4[%c0_70, %c0_71], %44 {strides = array<i32>} : memref<256x128xf32, #tpu.memory_space<vmem>>, vector<256x128xf32>,
    %c0_72 = arith.constant 0 : index
    %c2_73 = arith.constant 2 : index
    %c0_74 = arith.constant 0 : index
    %c0_75 = arith.constant 0 : index
    %46 = vector.load %arg1[%c0_72, %c2_73, %c0_74, %c0_75] : memref<1x18x18x4xf32, #tpu.memory_space<vmem>>, vector<1x16x16x4xf32>
    %47 = vector.shape_cast %46 : vector<1x16x16x4xf32> to vector<256x4xf32>
    %c2_76 = arith.constant 2 : index
    %c0_77 = arith.constant 0 : index
    %c0_78 = arith.constant 0 : index
    %c0_79 = arith.constant 0 : index
    %48 = vector.load %arg2[%c2_76, %c0_77, %c0_78, %c0_79] : memref<3x3x4x128xf32, #tpu.memory_space<vmem>>, vector<1x1x4x128xf32>
    %49 = vector.shape_cast %48 : vector<1x1x4x128xf32> to vector<4x128xf32>
    %cst_80 = arith.constant dense<0.000000e+00> : vector<256x128xf32>
    %50 = tpu.matmul %47, %49, %cst_80 {dimension_numbers = #tpu.dot_dimension_numbers<[1], [0], [0], [1], [0, 0, 1, 1], [], []>} : vector<256x4xf32>, vector<4x128xf32>, vector<256x128xf32> -> vector<256x128xf32>
    %c0_81 = arith.constant 0 : index
    %c0_82 = arith.constant 0 : index
    %51 = vector.load %arg4[%c0_81, %c0_82] : memref<256x128xf32, #tpu.memory_space<vmem>>, vector<256x128xf32>
    %52 = arith.addf %51, %50 : vector<256x128xf32>
    %c0_83 = arith.constant 0 : index
    %c0_84 = arith.constant 0 : index
    %53 = vector.load %arg4[%c0_83, %c0_84] : memref<256x128xf32, #tpu.memory_space<vmem>>, vector<256x128xf32>
    tpu.vector_store %arg4[%c0_83, %c0_84], %52 {strides = array<i32>} : memref<256x128xf32, #tpu.memory_space<vmem>>, vector<256x128xf32>,
    %c0_85 = arith.constant 0 : index
    %c2_86 = arith.constant 2 : index
    %c1_87 = arith.constant 1 : index
    %c0_88 = arith.constant 0 : index
    %54 = vector.load %arg1[%c0_85, %c2_86, %c1_87, %c0_88] : memref<1x18x18x4xf32, #tpu.memory_space<vmem>>, vector<1x16x16x4xf32>
    %55 = vector.shape_cast %54 : vector<1x16x16x4xf32> to vector<256x4xf32>
    %c2_89 = arith.constant 2 : index
    %c1_90 = arith.constant 1 : index
    %c0_91 = arith.constant 0 : index
    %c0_92 = arith.constant 0 : index
    %56 = vector.load %arg2[%c2_89, %c1_90, %c0_91, %c0_92] : memref<3x3x4x128xf32, #tpu.memory_space<vmem>>, vector<1x1x4x128xf32>
    %57 = vector.shape_cast %56 : vector<1x1x4x128xf32> to vector<4x128xf32>
    %cst_93 = arith.constant dense<0.000000e+00> : vector<256x128xf32>
    %58 = tpu.matmul %55, %57, %cst_93 {dimension_numbers = #tpu.dot_dimension_numbers<[1], [0], [0], [1], [0, 0, 1, 1], [], []>} : vector<256x4xf32>, vector<4x128xf32>, vector<256x128xf32> -> vector<256x128xf32>
    %c0_94 = arith.constant 0 : index
    %c0_95 = arith.constant 0 : index
    %59 = vector.load %arg4[%c0_94, %c0_95] : memref<256x128xf32, #tpu.memory_space<vmem>>, vector<256x128xf32>
    %60 = arith.addf %59, %58 : vector<256x128xf32>
    %c0_96 = arith.constant 0 : index
    %c0_97 = arith.constant 0 : index
    %61 = vector.load %arg4[%c0_96, %c0_97] : memref<256x128xf32, #tpu.memory_space<vmem>>, vector<256x128xf32>
    tpu.vector_store %arg4[%c0_96, %c0_97], %60 {strides = array<i32>} : memref<256x128xf32, #tpu.memory_space<vmem>>, vector<256x128xf32>,
    %c0_98 = arith.constant 0 : index
    %c2_99 = arith.constant 2 : index
    %c2_100 = arith.constant 2 : index
    %c0_101 = arith.constant 0 : index
    %62 = vector.load %arg1[%c0_98, %c2_99, %c2_100, %c0_101] : memref<1x18x18x4xf32, #tpu.memory_space<vmem>>, vector<1x16x16x4xf32>
    %63 = vector.shape_cast %62 : vector<1x16x16x4xf32> to vector<256x4xf32>
    %c2_102 = arith.constant 2 : index
    %c2_103 = arith.constant 2 : index
    %c0_104 = arith.constant 0 : index
    %c0_105 = arith.constant 0 : index
    %64 = vector.load %arg2[%c2_102, %c2_103, %c0_104, %c0_105] : memref<3x3x4x128xf32, #tpu.memory_space<vmem>>, vector<1x1x4x128xf32>
    %65 = vector.shape_cast %64 : vector<1x1x4x128xf32> to vector<4x128xf32>
    %cst_106 = arith.constant dense<0.000000e+00> : vector<256x128xf32>
    %66 = tpu.matmul %63, %65, %cst_106 {dimension_numbers = #tpu.dot_dimension_numbers<[1], [0], [0], [1], [0, 0, 1, 1], [], []>} : vector<256x4xf32>, vector<4x128xf32>, vector<256x128xf32> -> vector<256x128xf32>
    %c0_107 = arith.constant 0 : index
    %c0_108 = arith.constant 0 : index
    %67 = vector.load %arg4[%c0_107, %c0_108] : memref<256x128xf32, #tpu.memory_space<vmem>>, vector<256x128xf32>
    %68 = arith.addf %67, %66 : vector<256x128xf32>
    %c0_109 = arith.constant 0 : index
    %c0_110 = arith.constant 0 : index
    %69 = vector.load %arg4[%c0_109, %c0_110] : memref<256x128xf32, #tpu.memory_space<vmem>>, vector<256x128xf32>
    tpu.vector_store %arg4[%c0_109, %c0_110], %68 {strides = array<i32>} : memref<256x128xf32, #tpu.memory_space<vmem>>, vector<256x128xf32>,
    %c0_111 = arith.constant 0 : index
    %c0_112 = arith.constant 0 : index
    %70 = vector.load %arg4[%c0_111, %c0_112] : memref<256x128xf32, #tpu.memory_space<vmem>>, vector<256x128xf32>
    %cst_113 = arith.constant dense<0.000000e+00> : vector<128xf32>
    %71 = vector.multi_reduction <add>, %70, %cst_113 [0] : vector<256x128xf32> to vector<128xf32>
    %72 = vector.shape_cast %71 : vector<128xf32> to vector<1x128xf32>
    %c0_114 = arith.constant 0 : index
    %c0_115 = arith.constant 0 : index
    %c0_116 = arith.constant 0 : index
    %73 = vector.load %arg3[%c0_114, %c0_115, %c0_116] : memref<1x2x128xf32, #tpu.memory_space<vmem>>, vector<1x1x128xf32>
    %74 = vector.shape_cast %73 : vector<1x1x128xf32> to vector<1x128xf32>
    %75 = vector.shape_cast %72 : vector<1x128xf32> to vector<1x1x128xf32>
    tpu.vector_store %arg3[%c0_114, %c0_115, %c0_116], %75 {strides = array<i32>} : memref<1x2x128xf32, #tpu.memory_space<vmem>>, vector<1x1x128xf32>,
    %76 = arith.mulf %70, %70 : vector<256x128xf32>
    %cst_117 = arith.constant dense<0.000000e+00> : vector<128xf32>
    %77 = vector.multi_reduction <add>, %76, %cst_117 [0] : vector<256x128xf32> to vector<128xf32>
    %78 = vector.shape_cast %77 : vector<128xf32> to vector<1x128xf32>
    %c0_118 = arith.constant 0 : index
    %c1_119 = arith.constant 1 : index
    %c0_120 = arith.constant 0 : index
    %79 = vector.load %arg3[%c0_118, %c1_119, %c0_120] : memref<1x2x128xf32, #tpu.memory_space<vmem>>, vector<1x1x128xf32>
    %80 = vector.shape_cast %79 : vector<1x1x128xf32> to vector<1x128xf32>
    %81 = vector.shape_cast %78 : vector<1x128xf32> to vector<1x1x128xf32>
    tpu.vector_store %arg3[%c0_118, %c1_119, %c0_120], %81 {strides = array<i32>} : memref<1x2x128xf32, #tpu.memory_space<vmem>>, vector<1x1x128xf32>,
    return
  }
  func.func @transform_0(%arg0: i32) -> (i32, i32, i32, i32) {
    %c0_i32 = arith.constant 0 : i32
    %c0_i32_0 = arith.constant 0 : i32
    %c0_i32_1 = arith.constant 0 : i32
    %c0_i32_2 = arith.constant 0 : i32
    return %arg0, %c0_i32, %c0_i32_0, %c0_i32_1 : i32, i32, i32, i32
  }
  func.func @transform_1(%arg0: i32) -> (i32, i32, i32, i32) {
    %c0_i32 = arith.constant 0 : i32
    %c0_i32_0 = arith.constant 0 : i32
    %c0_i32_1 = arith.constant 0 : i32
    %c0_i32_2 = arith.constant 0 : i32
    %c0_i32_3 = arith.constant 0 : i32
    return %c0_i32, %c0_i32_0, %c0_i32_1, %c0_i32_2 : i32, i32, i32, i32
  }
  func.func @transform_2(%arg0: i32) -> (i32, i32, i32) {
    %c0_i32 = arith.constant 0 : i32
    %c0_i32_0 = arith.constant 0 : i32
    %c0_i32_1 = arith.constant 0 : i32
    return %arg0, %c0_i32, %c0_i32_0 : i32, i32, i32
  }
}

</mosaic_0001>

<llo_original>
// kernel: tpu_custom_call.1
$region0: #{tpu_custom_call.1}
  #allocation0 [shape = 'u32[]', space=smem, size = 0x4, offset = 0x4, fixed_abs, tag = 'smem constant byte address 0x4 - core index']
  #allocation1 [shape = 'u32[144,128]{1,0:T(1,128)}', space=vmem, size = 0x12000, scoped, tag = 'internal scratch']
  #allocation2 [shape = 'f32[256,128]{1,0:T(8,128)}', space=vmem, size = 0x20000, scoped, tag = 'scratch operand']
  %s0 = inlined_call_operand.vmem [shape: f32[2,18,18,4], index: 0, kind: input, shape index: {}]
  %s1 = inlined_call_operand.vmem [shape: f32[3,3,4,128], index: 1, kind: input, shape index: {}]
  %s2 = inlined_call_operand.hbm [shape: f32[2,2,128], index: 2, kind: output, shape index: {}]
  %s3 = sld [smem:[#allocation0]]
  $region41: #{tpu_custom_call.1} parent=0
    _
  %s5 = ssub.s32 1, %s3
  %s6 = scalar_select 0, %s5, %s3
  $region1: #{tpu_custom_call.1} parent=0
    #allocation3 [shape = 'u8[2048]{0}', space=vmem, size = 0x800, scoped, tag = 'output window, operand 0']
    #allocation4 [shape = 's32[2]{0}', space=sflag, size = 0x8, scoped, tag = 'scoped memory for tpu_custom_call.1']
    %7 = vsyncpa [#allocation4], 0
    %s8 = scalar_lea.sflag [#allocation4], 1
    %9 = vsyncpa %s8, 0
    loop: start=0, step=1, limit=4
    $region2: #{tpu_custom_call.1} parent=1 // loop_pre_header
      _
    $region3: #{tpu_custom_call.1} parent=1 // loop_header
      %s11 = sphi 0, %s15
      %p12 = scmp.ge.s32.totalorder %s11, 4
      %s21 = sphi 0, %s23
      %s24 = sphi 0, %s21
      %s25 = sphi 0, %s24
      %s41 = sphi 0, %s25
      %s45 = sphi 0, %s45
      %s47 = sphi 0, %s45
      %s48 = sphi 0, %s47
      %s62 = sphi 0, %s48
      %s68 = sphi 0, %s70
      %s71 = sphi 0, %s68
      %s72 = sphi 0, %s71
      %s88 = sphi 0, %s72
    $region4: #{tpu_custom_call.1} parent=1 // loop_header_branch
      %14 = sbr.rel (%p12) target = $region8
    $region5: #{tpu_custom_call.1} parent=1 // loop_body
      %s16 = ssub.s32 %s11, 1
      %s17 = ssub.s32 %s11, 2
      %s18 = sadd.s32 %s11, 1
      %s19 = ssub.s32 %s11, %s18
      %p20 = scmp.eq.s32.totalorder %s19, 0
      %s22 = sadd.s32 %s21, 1
      %s23 = scalar_select %p20, %s21, %s22
      %p26 = pneg %p20
      %p27 = scmp.eq.s32.totalorder %s11, 1
      %p28 = por %p26, %p27
      %p29 = scmp.ne.s32.totalorder %s21, %s24
      %p30 = scmp.eq.s32.totalorder %s11, 0
      %p31 = por %p29, %p30
      %p32 = scmp.ne.s32.totalorder %s21, %s24
      %p33 = scmp.eq.s32.totalorder %s16, 1
      %p34 = por %p32, %p33
      %p35 = scmp.ne.s32.totalorder %s24, %s25
      %p36 = scmp.eq.s32.totalorder %s16, 0
      %p37 = por %p35, %p36
      %p38 = scmp.ne.s32.totalorder %s24, %s25
      %p39 = scmp.eq.s32.totalorder %s17, 1
      %p40 = por %p38, %p39
      %p42 = scmp.ne.s32.totalorder %s25, %s41
      %p43 = scmp.eq.s32.totalorder %s17, 0
      %p44 = por %p42, %p43
      %s46 = sadd.s32 %s45, 1
      %p49 = scmp.eq.s32.totalorder %s11, 1
      %p50 = scmp.ne.s32.totalorder %s45, %s47
      %p51 = scmp.eq.s32.totalorder %s11, 0
      %p52 = por %p50, %p51
      %p53 = scmp.ne.s32.totalorder %s45, %s47
      %p54 = scmp.eq.s32.totalorder %s16, 1
      %p55 = por %p53, %p54
      %p56 = scmp.ne.s32.totalorder %s47, %s48
      %p57 = scmp.eq.s32.totalorder %s16, 0
      %p58 = por %p56, %p57
      %p59 = scmp.ne.s32.totalorder %s47, %s48
      %p60 = scmp.eq.s32.totalorder %s17, 1
      %p61 = por %p59, %p60
      %p63 = scmp.ne.s32.totalorder %s48, %s62
      %p64 = scmp.eq.s32.totalorder %s17, 0
      %p65 = por %p63, %p64
      %s66 = ssub.s32 %s11, %s18
      %p67 = scmp.eq.s32.totalorder %s66, 0
      %s69 = sadd.s32 %s68, 1
      %s70 = scalar_select %p67, %s68, %s69
      %p73 = pneg %p67
      %p74 = scmp.eq.s32.totalorder %s11, 1
      %p75 = por %p73, %p74
      %p76 = scmp.ne.s32.totalorder %s68, %s71
      %p77 = scmp.eq.s32.totalorder %s11, 0
      %p78 = por %p76, %p77
      %p79 = scmp.ne.s32.totalorder %s68, %s71
      %p80 = scmp.eq.s32.totalorder %s16, 1
      %p81 = por %p79, %p80
      %p82 = scmp.ne.s32.totalorder %s71, %s72
      %p83 = scmp.eq.s32.totalorder %s16, 0
      %p84 = por %p82, %p83
      %p85 = scmp.ne.s32.totalorder %s71, %s72
      %p86 = scmp.eq.s32.totalorder %s17, 1
      %p87 = por %p85, %p86
      %p89 = scmp.ne.s32.totalorder %s72, %s88
      %p90 = scmp.eq.s32.totalorder %s17, 0
      %p91 = por %p89, %p90
      %p92 = scmp.le.s32.totalorder 1, %s11
      %p93 = scmp.lt.s32.totalorder %s11, 3
      %p94 = pnand %p92, %p93
      %p95 = pneg %p94
      // Predicated region
      $region9: #{tpu_custom_call.1} parent=5 // pred_check
        _
      $region10: #{tpu_custom_call.1} parent=5 // pred_check_branch
        %97 = sbr.rel (%p94) target = $region12
      $region11: #{tpu_custom_call.1} parent=5 // pred_region
        %s98 = ssub.s32 %s11, 1
        // Predicated region
        $region13: #{tpu_custom_call.1} parent=11 // pred_check
          %p99 = pneg %p58
        $region14: #{tpu_custom_call.1} parent=11 // pred_check_branch
          %101 = sbr.rel (%p99) target = $region16
        $region15: #{tpu_custom_call.1} parent=11 // pred_region
          _
        $region16: #{tpu_custom_call.1} parent=11 // pred_fallthru
          _
      $region12: #{tpu_custom_call.1} parent=5 // pred_fallthru
        _
      %p102 = scmp.lt.s32.totalorder %s11, 2
      // Predicated region
      $region17: #{tpu_custom_call.1} parent=5 // pred_check
        %p103 = pneg %p102
      $region18: #{tpu_custom_call.1} parent=5 // pred_check_branch
        %105 = sbr.rel (%p103) target = $region20
      $region19: #{tpu_custom_call.1} parent=5 // pred_region
        // Predicated region
        $region21: #{tpu_custom_call.1} parent=19 // pred_check
          %p106 = pneg %p31
        $region22: #{tpu_custom_call.1} parent=19 // pred_check_branch
          %108 = sbr.rel (%p106) target = $region24
        $region23: #{tpu_custom_call.1} parent=19 // pred_region
          %p109 = scmp.lt.s32.totalorder %s11, 1
          %s110 = scalar_select %p109, %s11, 1
          %s111 = smul.addr %s110, 54
          %s112 = smul.addr %s111, 8
          %s113 = scalar_lea.vmem %s0, %s112
        $region24: #{tpu_custom_call.1} parent=19 // pred_fallthru
          _
      $region20: #{tpu_custom_call.1} parent=5 // pred_fallthru
        _
      %p114 = scmp.le.s32.totalorder 1, %s11
      %p115 = scmp.lt.s32.totalorder %s11, 3
      %p116 = pnand %p114, %p115
      %p117 = pneg %p116
      // Predicated region
      $region25: #{tpu_custom_call.1} parent=5 // pred_check
        _
      $region26: #{tpu_custom_call.1} parent=5 // pred_check_branch
        %119 = sbr.rel (%p116) target = $region28
      $region27: #{tpu_custom_call.1} parent=5 // pred_region
        %s120 = ssub.s32 %s11, 1
        %p121 = scmp.lt.s32.totalorder %s16, 1
        %s122 = scalar_select %p121, %s16, 1
        %s123 = smul.addr %s122, 54
        %s124 = smul.addr %s123, 8
        %s125 = scalar_lea.vmem %s0, %s124
        %p126 = pneg %p37
        %p127 = pneg %p34
        %p128 = pneg %p58
        %p129 = pneg %p55
        %p130 = pneg %p84
        %p131 = pneg %p81
        %s132 = sand.u32 %s71, 1
        %s133 = scalar_lea.sflag [#allocation4], %s132
        %s134 = sand.u32 %s71, 1
        %s135 = smul.addr %s134, 2
        %s136 = scalar_lea.vmem [#allocation3], %s135
        %p137 = scmp.lt.s32.totalorder %s16, 1
        %s138 = scalar_select %p137, %s16, 1
        %s139 = smul.addr %s138, 54
        %s140 = smul.addr %s139, 8
        %s141 = scalar_lea.vmem %s0, %s140
        %v142 = vld [vmem:[%s141] sm:$0xff]
        %v143 = vld [vmem:[%s141 + $0x8] sm:$0xff]
        %v144 = vld [vmem:[%s141 + $0x18] sm:$0xff]
        %v145 = vld [vmem:[%s141 + $0x20] sm:$0xff]
        %v146 = vld [vmem:[%s141 + $0x30] sm:$0xff]
        %v147 = vld [vmem:[%s141 + $0x38] sm:$0xff]
        %v148 = vld [vmem:[%s141 + $0x48] sm:$0xff]
        %v149 = vld [vmem:[%s141 + $0x50] sm:$0xff]
        %v150 = vld [vmem:[%s141 + $0x60] sm:$0xff]
        %v151 = vld [vmem:[%s141 + $0x68] sm:$0xff]
        %v152 = vld [vmem:[%s141 + $0x78] sm:$0xff]
        %v153 = vld [vmem:[%s141 + $0x80] sm:$0xff]
        %v154 = vld [vmem:[%s141 + $0x90] sm:$0xff]
        %v155 = vld [vmem:[%s141 + $0x98] sm:$0xff]
        %v156 = vld [vmem:[%s141 + $0xa8] sm:$0xff]
        %v157 = vld [vmem:[%s141 + $0xb0] sm:$0xff]
        %v158 = vld [vmem:[%s141 + $0xc0] sm:$0xff]
        %v159 = vld [vmem:[%s141 + $0xc8] sm:$0xff]
        %v160 = vld [vmem:[%s141 + $0xd8] sm:$0xff]
        %v161 = vld [vmem:[%s141 + $0xe0] sm:$0xff]
        %v162 = vld [vmem:[%s141 + $0xf0] sm:$0xff]
        %v163 = vld [vmem:[%s141 + $0xf8] sm:$0xff]
        %v164 = vld [vmem:[%s141 + $0x108] sm:$0xff]
        %v165 = vld [vmem:[%s141 + $0x110] sm:$0xff]
        %v166 = vld [vmem:[%s141 + $0x120] sm:$0xff]
        %v167 = vld [vmem:[%s141 + $0x128] sm:$0xff]
        %v168 = vld [vmem:[%s141 + $0x138] sm:$0xff]
        %v169 = vld [vmem:[%s141 + $0x140] sm:$0xff]
        %v170 = vld [vmem:[%s141 + $0x150] sm:$0xff]
        %v171 = vld [vmem:[%s141 + $0x158] sm:$0xff]
        %v172 = vld [vmem:[%s141 + $0x168] sm:$0xff]
        %v173 = vld [vmem:[%s141 + $0x170] sm:$0xff]
        %v174 = vld [vmem:[%s1] sm:$0xf]
        %vm175 = vcmask 31744
        %v177 = vsel %vm175, %v142, 0
        %v180 = vsel %vm175, %v143, 0
        %v183 = vsel %vm175, %v144, 0
        %v186 = vsel %vm175, %v145, 0
        %v189 = vsel %vm175, %v146, 0
        %v192 = vsel %vm175, %v147, 0
        %v195 = vsel %vm175, %v148, 0
        %v198 = vsel %vm175, %v149, 0
        %v201 = vsel %vm175, %v150, 0
        %v204 = vsel %vm175, %v151, 0
        %v207 = vsel %vm175, %v152, 0
        %v210 = vsel %vm175, %v153, 0
        %v213 = vsel %vm175, %v154, 0
        %v216 = vsel %vm175, %v155, 0
        %v219 = vsel %vm175, %v156, 0
        %v222 = vsel %vm175, %v157, 0
        %v225 = vsel %vm175, %v158, 0
        %v228 = vsel %vm175, %v159, 0
        %v231 = vsel %vm175, %v160, 0
        %v234 = vsel %vm175, %v161, 0
        %v237 = vsel %vm175, %v162, 0
        %v240 = vsel %vm175, %v163, 0
        %v243 = vsel %vm175, %v164, 0
        %v246 = vsel %vm175, %v165, 0
        %v249 = vsel %vm175, %v166, 0
        %v252 = vsel %vm175, %v167, 0
        %v255 = vsel %vm175, %v168, 0
        %v258 = vsel %vm175, %v169, 0
        %v261 = vsel %vm175, %v170, 0
        %v264 = vsel %vm175, %v171, 0
        %v267 = vsel %vm175, %v172, 0
        %v270 = vsel %vm175, %v173, 0
        %vm272 = vcmask 1043456
        %v274 = vsel %vm272, %v174, 0
        %276 = vmatprep.subr.mxu0 0.0
        %277 = vmatpush1.msra.mxu0 %v274
        %278 = vmatprep.subr.mxu0 0.0
        %279 = vmatpush1.msra.mxu0 0.0
        %280 = vmatprep.subr.mxu0 0.0
        %281 = vmatpush1.msra.mxu0 0.0
        %282 = vmatprep.subr.mxu0 0.0
        %283 = vmatpush1.msra.mxu0 0.0
        %284 = vmatprep.subr.mxu0 0.0
        %285 = vmatpush1.msra.mxu0 0.0
        %286 = vmatprep.subr.mxu0 0.0
        %287 = vmatpush1.msra.mxu0 0.0
        %288 = vmatprep.subr.mxu0 0.0
        %289 = vmatpush1.msra.mxu0 0.0
        %290 = vmatprep.subr.mxu0 0.0
        %291 = vmatpush1.msra.mxu0 0.0
        %292 = vmatprep.subr.mxu0 0.0
        %293 = vmatpush1.msra.mxu0 0.0
        %294 = vmatprep.subr.mxu0 0.0
        %295 = vmatpush1.msra.mxu0 0.0
        %296 = vmatprep.subr.mxu0 0.0
        %297 = vmatpush1.msra.mxu0 0.0
        %298 = vmatprep.subr.mxu0 0.0
        %299 = vmatpush1.msra.mxu0 0.0
        %300 = vmatprep.subr.mxu0 0.0
        %301 = vmatpush1.msra.mxu0 0.0
        %302 = vmatprep.subr.mxu0 0.0
        %303 = vmatpush1.msra.mxu0 0.0
        %304 = vmatprep.subr.mxu0 0.0
        %305 = vmatpush1.msra.mxu0 0.0
        %306 = vmatprep.subr.mxu0 0.0
        %307 = vmatpush1.msra.mxu0 0.0
        %308 = vmatprep.subr.mxu0 0.0
        %309 = vmatpush1.msra.mxu0 0.0
        %310 = vmatprep.subr.mxu0 0.0
        %311 = vmatpush1.msra.mxu0 0.0
        %312 = vmatprep.subr.mxu0 0.0
        %313 = vmatpush1.msra.mxu0 0.0
        %314 = vmatprep.subr.mxu0 0.0
        %315 = vmatpush1.msra.mxu0 0.0
        %316 = vmatprep.subr.mxu0 0.0
        %317 = vmatpush1.msra.mxu0 0.0
        %318 = vmatprep.subr.mxu0 0.0
        %319 = vmatpush1.msra.mxu0 0.0
        %320 = vmatprep.subr.mxu0 0.0
        %321 = vmatpush1.msra.mxu0 0.0
        %322 = vmatprep.subr.mxu0 0.0
        %323 = vmatpush1.msra.mxu0 0.0
        %324 = vmatprep.subr.mxu0 0.0
        %325 = vmatpush1.msra.mxu0 0.0
        %326 = vmatprep.subr.mxu0 0.0
        %327 = vmatpush1.msra.mxu0 0.0
        %328 = vmatprep.subr.mxu0 0.0
        %329 = vmatpush1.msra.mxu0 0.0
        %330 = vmatprep.subr.mxu0 0.0
        %331 = vmatpush1.msra.mxu0 0.0
        %332 = vmatprep.subr.mxu0 0.0
        %333 = vmatpush1.msra.mxu0 0.0
        %334 = vmatprep.subr.mxu0 0.0
        %335 = vmatpush1.msra.mxu0 0.0
        %336 = vmatprep.subr.mxu0 0.0
        %337 = vmatpush1.msra.mxu0 0.0
        %338 = vmatprep.subr.mxu0 0.0
        %339 = vmatpush1.msra.mxu0 0.0
        %340 = vmatprep.mubr.f32.mxu0 0.0
        %341 = vmatmul.mubr.f32.gmra.mrb[0].mxu0 %v177
        %v342 = vpop.f32.mrb[0].mxu0
        %v343 = vadd.f32 0.0, %v342
        %v344 = vpop.f32.mrb[0].mxu0
        %345 = vmatprep.mubr.f32.mxu0 0.0
        %346 = vmatmul.mubr.f32.gmra.mrb[0].mxu0 %v180
        %v347 = vpop.f32.mrb[0].mxu0
        %v348 = vadd.f32 0.0, %v347
        %v349 = vpop.f32.mrb[0].mxu0
        %350 = vmatprep.mubr.f32.mxu0 0.0
        %351 = vmatmul.mubr.f32.gmra.mrb[0].mxu0 %v183
        %v352 = vpop.f32.mrb[0].mxu0
        %v353 = vadd.f32 0.0, %v352
        %v354 = vpop.f32.mrb[0].mxu0
        %355 = vmatprep.mubr.f32.mxu0 0.0
        %356 = vmatmul.mubr.f32.gmra.mrb[0].mxu0 %v186
        %v357 = vpop.f32.mrb[0].mxu0
        %v358 = vadd.f32 0.0, %v357
        %v359 = vpop.f32.mrb[0].mxu0
        %360 = vmatprep.mubr.f32.mxu0 0.0
        %361 = vmatmul.mubr.f32.gmra.mrb[0].mxu0 %v189
        %v362 = vpop.f32.mrb[0].mxu0
        %v363 = vadd.f32 0.0, %v362
        %v364 = vpop.f32.mrb[0].mxu0
        %365 = vmatprep.mubr.f32.mxu0 0.0
        %366 = vmatmul.mubr.f32.gmra.mrb[0].mxu0 %v192
        %v367 = vpop.f32.mrb[0].mxu0
        %v368 = vadd.f32 0.0, %v367
        %v369 = vpop.f32.mrb[0].mxu0
        %370 = vmatprep.mubr.f32.mxu0 0.0
        %371 = vmatmul.mubr.f32.gmra.mrb[0].mxu0 %v195
        %v372 = vpop.f32.mrb[0].mxu0
        %v373 = vadd.f32 0.0, %v372
        %v374 = vpop.f32.mrb[0].mxu0
        %375 = vmatprep.mubr.f32.mxu0 0.0
        %376 = vmatmul.mubr.f32.gmra.mrb[0].mxu0 %v198
        %v377 = vpop.f32.mrb[0].mxu0
        %v378 = vadd.f32 0.0, %v377
        %v379 = vpop.f32.mrb[0].mxu0
        %380 = vmatprep.mubr.f32.mxu0 0.0
        %381 = vmatmul.mubr.f32.gmra.mrb[0].mxu0 %v201
        %v382 = vpop.f32.mrb[0].mxu0
        %v383 = vadd.f32 0.0, %v382
        %v384 = vpop.f32.mrb[0].mxu0
        %385 = vmatprep.mubr.f32.mxu0 0.0
        %386 = vmatmul.mubr.f32.gmra.mrb[0].mxu0 %v204
        %v387 = vpop.f32.mrb[0].mxu0
        %v388 = vadd.f32 0.0, %v387
        %v389 = vpop.f32.mrb[0].mxu0
        %390 = vmatprep.mubr.f32.mxu0 0.0
        %391 = vmatmul.mubr.f32.gmra.mrb[0].mxu0 %v207
        %v392 = vpop.f32.mrb[0].mxu0
        %v393 = vadd.f32 0.0, %v392
        %v394 = vpop.f32.mrb[0].mxu0
        %395 = vmatprep.mubr.f32.mxu0 0.0
        %396 = vmatmul.mubr.f32.gmra.mrb[0].mxu0 %v210
        %v397 = vpop.f32.mrb[0].mxu0
        %v398 = vadd.f32 0.0, %v397
        %v399 = vpop.f32.mrb[0].mxu0
        %400 = vmatprep.mubr.f32.mxu0 0.0
        %401 = vmatmul.mubr.f32.gmra.mrb[0].mxu0 %v213
        %v402 = vpop.f32.mrb[0].mxu0
        %v403 = vadd.f32 0.0, %v402
        %v404 = vpop.f32.mrb[0].mxu0
        %405 = vmatprep.mubr.f32.mxu0 0.0
        %406 = vmatmul.mubr.f32.gmra.mrb[0].mxu0 %v216
        %v407 = vpop.f32.mrb[0].mxu0
        %v408 = vadd.f32 0.0, %v407
        %v409 = vpop.f32.mrb[0].mxu0
        %410 = vmatprep.mubr.f32.mxu0 0.0
        %411 = vmatmul.mubr.f32.gmra.mrb[0].mxu0 %v219
        %v412 = vpop.f32.mrb[0].mxu0
        %v413 = vadd.f32 0.0, %v412
        %v414 = vpop.f32.mrb[0].mxu0
        %415 = vmatprep.mubr.f32.mxu0 0.0
        %416 = vmatmul.mubr.f32.gmra.mrb[0].mxu0 %v222
        %v417 = vpop.f32.mrb[0].mxu0
        %v418 = vadd.f32 0.0, %v417
        %v419 = vpop.f32.mrb[0].mxu0
        %420 = vmatprep.mubr.f32.mxu0 0.0
        %421 = vmatmul.mubr.f32.gmra.mrb[0].mxu0 %v225
        %v422 = vpop.f32.mrb[0].mxu0
        %v423 = vadd.f32 0.0, %v422
        %v424 = vpop.f32.mrb[0].mxu0
        %425 = vmatprep.mubr.f32.mxu0 0.0
        %426 = vmatmul.mubr.f32.gmra.mrb[0].mxu0 %v228
        %v427 = vpop.f32.mrb[0].mxu0
        %v428 = vadd.f32 0.0, %v427
        %v429 = vpop.f32.mrb[0].mxu0
        %430 = vmatprep.mubr.f32.mxu0 0.0
        %431 = vmatmul.mubr.f32.gmra.mrb[0].mxu0 %v231
        %v432 = vpop.f32.mrb[0].mxu0
        %v433 = vadd.f32 0.0, %v432
        %v434 = vpop.f32.mrb[0].mxu0
        %435 = vmatprep.mubr.f32.mxu0 0.0
        %436 = vmatmul.mubr.f32.gmra.mrb[0].mxu0 %v234
        %v437 = vpop.f32.mrb[0].mxu0
        %v438 = vadd.f32 0.0, %v437
        %v439 = vpop.f32.mrb[0].mxu0
        %440 = vmatprep.mubr.f32.mxu0 0.0
        %441 = vmatmul.mubr.f32.gmra.mrb[0].mxu0 %v237
        %v442 = vpop.f32.mrb[0].mxu0
        %v443 = vadd.f32 0.0, %v442
        %v444 = vpop.f32.mrb[0].mxu0
        %445 = vmatprep.mubr.f32.mxu0 0.0
        %446 = vmatmul.mubr.f32.gmra.mrb[0].mxu0 %v240
        %v447 = vpop.f32.mrb[0].mxu0
        %v448 = vadd.f32 0.0, %v447
        %v449 = vpop.f32.mrb[0].mxu0
        %450 = vmatprep.mubr.f32.mxu0 0.0
        %451 = vmatmul.mubr.f32.gmra.mrb[0].mxu0 %v243
        %v452 = vpop.f32.mrb[0].mxu0
        %v453 = vadd.f32 0.0, %v452
        %v454 = vpop.f32.mrb[0].mxu0
        %455 = vmatprep.mubr.f32.mxu0 0.0
        %456 = vmatmul.mubr.f32.gmra.mrb[0].mxu0 %v246
        %v457 = vpop.f32.mrb[0].mxu0
        %v458 = vadd.f32 0.0, %v457
        %v459 = vpop.f32.mrb[0].mxu0
        %460 = vmatprep.mubr.f32.mxu0 0.0
        %461 = vmatmul.mubr.f32.gmra.mrb[0].mxu0 %v249
        %v462 = vpop.f32.mrb[0].mxu0
        %v463 = vadd.f32 0.0, %v462
        %v464 = vpop.f32.mrb[0].mxu0
        %465 = vmatprep.mubr.f32.mxu0 0.0
        %466 = vmatmul.mubr.f32.gmra.mrb[0].mxu0 %v252
        %v467 = vpop.f32.mrb[0].mxu0
        %v468 = vadd.f32 0.0, %v467
        %v469 = vpop.f32.mrb[0].mxu0
        %470 = vmatprep.mubr.f32.mxu0 0.0
        %471 = vmatmul.mubr.f32.gmra.mrb[0].mxu0 %v255
        %v472 = vpop.f32.mrb[0].mxu0
        %v473 = vadd.f32 0.0, %v472
        %v474 = vpop.f32.mrb[0].mxu0
        %475 = vmatprep.mubr.f32.mxu0 0.0
        %476 = vmatmul.mubr.f32.gmra.mrb[0].mxu0 %v258
        %v477 = vpop.f32.mrb[0].mxu0
        %v478 = vadd.f32 0.0, %v477
        %v479 = vpop.f32.mrb[0].mxu0
        %480 = vmatprep.mubr.f32.mxu0 0.0
        %481 = vmatmul.mubr.f32.gmra.mrb[0].mxu0 %v261
        %v482 = vpop.f32.mrb[0].mxu0
        %v483 = vadd.f32 0.0, %v482
        %v484 = vpop.f32.mrb[0].mxu0
        %485 = vmatprep.mubr.f32.mxu0 0.0
        %486 = vmatmul.mubr.f32.gmra.mrb[0].mxu0 %v264
        %v487 = vpop.f32.mrb[0].mxu0
        %v488 = vadd.f32 0.0, %v487
        %v489 = vpop.f32.mrb[0].mxu0
        %490 = vmatprep.mubr.f32.mxu0 0.0
        %491 = vmatmul.mubr.f32.gmra.mrb[0].mxu0 %v267
        %v492 = vpop.f32.mrb[0].mxu0
        %v493 = vadd.f32 0.0, %v492
        %v494 = vpop.f32.mrb[0].mxu0
        %495 = vmatprep.mubr.f32.mxu0 0.0
        %496 = vmatmul.mubr.f32.gmra.mrb[0].mxu0 %v270
        %v497 = vpop.f32.mrb[0].mxu0
        %v498 = vadd.f32 0.0, %v497
        %v499 = vpop.f32.mrb[0].mxu0
        %500 = vdwg.mxu0
        %501 = vst [vmem:[#allocation2] sm:$0xff] %v343
        %502 = vst [vmem:[#allocation2 + $0x8] sm:$0xff] %v348
        %503 = vst [vmem:[#allocation2 + $0x10] sm:$0xff] %v353
        %504 = vst [vmem:[#allocation2 + $0x18] sm:$0xff] %v358
        %505 = vst [vmem:[#allocation2 + $0x20] sm:$0xff] %v363
        %506 = vst [vmem:[#allocation2 + $0x28] sm:$0xff] %v368
        %507 = vst [vmem:[#allocation2 + $0x30] sm:$0xff] %v373
        %508 = vst [vmem:[#allocation2 + $0x38] sm:$0xff] %v378
        %509 = vst [vmem:[#allocation2 + $0x40] sm:$0xff] %v383
        %510 = vst [vmem:[#allocation2 + $0x48] sm:$0xff] %v388
        %511 = vst [vmem:[#allocation2 + $0x50] sm:$0xff] %v393
        %512 = vst [vmem:[#allocation2 + $0x58] sm:$0xff] %v398
        %513 = vst [vmem:[#allocation2 + $0x60] sm:$0xff] %v403
        %514 = vst [vmem:[#allocation2 + $0x68] sm:$0xff] %v408
        %515 = vst [vmem:[#allocation2 + $0x70] sm:$0xff] %v413
        %516 = vst [vmem:[#allocation2 + $0x78] sm:$0xff] %v418
        %517 = vst [vmem:[#allocation2 + $0x80] sm:$0xff] %v423
        %518 = vst [vmem:[#allocation2 + $0x88] sm:$0xff] %v428
        %519 = vst [vmem:[#allocation2 + $0x90] sm:$0xff] %v433
        %520 = vst [vmem:[#allocation2 + $0x98] sm:$0xff] %v438
        %521 = vst [vmem:[#allocation2 + $0xa0] sm:$0xff] %v443
        %522 = vst [vmem:[#allocation2 + $0xa8] sm:$0xff] %v448
        %523 = vst [vmem:[#allocation2 + $0xb0] sm:$0xff] %v453
        %524 = vst [vmem:[#allocation2 + $0xb8] sm:$0xff] %v458
        %525 = vst [vmem:[#allocation2 + $0xc0] sm:$0xff] %v463
        %526 = vst [vmem:[#allocation2 + $0xc8] sm:$0xff] %v468
        %527 = vst [vmem:[#allocation2 + $0xd0] sm:$0xff] %v473
        %528 = vst [vmem:[#allocation2 + $0xd8] sm:$0xff] %v478
        %529 = vst [vmem:[#allocation2 + $0xe0] sm:$0xff] %v483
        %530 = vst [vmem:[#allocation2 + $0xe8] sm:$0xff] %v488
        %531 = vst [vmem:[#allocation2 + $0xf0] sm:$0xff] %v493
        %532 = vst [vmem:[#allocation2 + $0xf8] sm:$0xff] %v498
        %v533 = vld [vmem:[%s141 + $0x1] sm:$0xff]
        %v534 = vld [vmem:[%s141 + $0x9] sm:$0xff]
        %v535 = vld [vmem:[%s141 + $0x19] sm:$0xff]
        %v536 = vld [vmem:[%s141 + $0x21] sm:$0xff]
        %v537 = vld [vmem:[%s141 + $0x31] sm:$0xff]
        %v538 = vld [vmem:[%s141 + $0x39] sm:$0xff]
        %v539 = vld [vmem:[%s141 + $0x49] sm:$0xff]
        %v540 = vld [vmem:[%s141 + $0x51] sm:$0xff]
        %v541 = vld [vmem:[%s141 + $0x61] sm:$0xff]
        %v542 = vld [vmem:[%s141 + $0x69] sm:$0xff]
        %v543 = vld [vmem:[%s141 + $0x79] sm:$0xff]
        %v544 = vld [vmem:[%s141 + $0x81] sm:$0xff]
        %v545 = vld [vmem:[%s141 + $0x91] sm:$0xff]
        %v546 = vld [vmem:[%s141 + $0x99] sm:$0xff]
        %v547 = vld [vmem:[%s141 + $0xa9] sm:$0xff]
        %v548 = vld [vmem:[%s141 + $0xb1] sm:$0xff]
        %v549 = vld [vmem:[%s141 + $0xc1] sm:$0xff]
        %v550 = vld [vmem:[%s141 + $0xc9] sm:$0xff]
        %v551 = vld [vmem:[%s141 + $0xd9] sm:$0xff]
        %v552 = vld [vmem:[%s141 + $0xe1] sm:$0xff]
        %v553 = vld [vmem:[%s141 + $0xf1] sm:$0xff]
        %v554 = vld [vmem:[%s141 + $0xf9] sm:$0xff]
        %v555 = vld [vmem:[%s141 + $0x109] sm:$0xff]
        %v556 = vld [vmem:[%s141 + $0x111] sm:$0xff]
        %v557 = vld [vmem:[%s141 + $0x121] sm:$0xff]
        %v558 = vld [vmem:[%s141 + $0x129] sm:$0xff]
        %v559 = vld [vmem:[%s141 + $0x139] sm:$0xff]
        %v560 = vld [vmem:[%s141 + $0x141] sm:$0xff]
        %v561 = vld [vmem:[%s141 + $0x151] sm:$0xff]
        %v562 = vld [vmem:[%s141 + $0x159] sm:$0xff]
        %v563 = vld [vmem:[%s141 + $0x169] sm:$0xff]
        %v564 = vld [vmem:[%s141 + $0x171] sm:$0xff]
        %s565 = scalar_lea.vmem %s1, 4
        %v566 = vld [vmem:[%s565] sm:$0xf]
        %v568 = vsel %vm175, %v533, 0
        %v571 = vsel %vm175, %v534, 0
        %v574 = vsel %vm175, %v535, 0
        %v577 = vsel %vm175, %v536, 0
        %v580 = vsel %vm175, %v537, 0
        %v583 = vsel %vm175, %v538, 0
        %v586 = vsel %vm175, %v539, 0
        %v589 = vsel %vm175, %v540, 0
        %v592 = vsel %vm175, %v541, 0
        %v595 = vsel %vm175, %v542, 0
        %v598 = vsel %vm175, %v543, 0
        %v601 = vsel %vm175, %v544, 0
        %v604 = vsel %vm175, %v545, 0
        %v607 = vsel %vm175, %v546, 0
        %v610 = vsel %vm175, %v547, 0
        %v613 = vsel %vm175, %v548, 0
        %v616 = vsel %vm175, %v549, 0
        %v619 = vsel %vm175, %v550, 0
        %v622 = vsel %vm175, %v551, 0
        %v625 = vsel %vm175, %v552, 0
        %v628 = vsel %vm175, %v553, 0
        %v631 = vsel %vm175, %v554, 0
        %v634 = vsel %vm175, %v555, 0
        %v637 = vsel %vm175, %v556, 0
        %v640 = vsel %vm175, %v557, 0
        %v643 = vsel %vm175, %v558, 0
        %v646 = vsel %vm175, %v559, 0
        %v649 = vsel %vm175, %v560, 0
        %v652 = vsel %vm175, %v561, 0
        %v655 = vsel %vm175, %v562, 0
        %v658 = vsel %vm175, %v563, 0
        %v661 = vsel %vm175, %v564, 0
        %v664 = vsel %vm272, %v566, 0
        %666 = vmatprep.subr.mxu0 0.0
        %667 = vmatpush1.msra.mxu0 %v664
        %668 = vmatprep.subr.mxu0 0.0
        %669 = vmatpush1.msra.mxu0 0.0
        %670 = vmatprep.subr.mxu0 0.0
        %671 = vmatpush1.msra.mxu0 0.0
        %672 = vmatprep.subr.mxu0 0.0
        %673 = vmatpush1.msra.mxu0 0.0
        %674 = vmatprep.subr.mxu0 0.0
        %675 = vmatpush1.msra.mxu0 0.0
        %676 = vmatprep.subr.mxu0 0.0
        %677 = vmatpush1.msra.mxu0 0.0
        %678 = vmatprep.subr.mxu0 0.0
        %679 = vmatpush1.msra.mxu0 0.0
        %680 = vmatprep.subr.mxu0 0.0
        %681 = vmatpush1.msra.mxu0 0.0
        %682 = vmatprep.subr.mxu0 0.0
        %683 = vmatpush1.msra.mxu0 0.0
        %684 = vmatprep.subr.mxu0 0.0
        %685 = vmatpush1.msra.mxu0 0.0
        %686 = vmatprep.subr.mxu0 0.0
        %687 = vmatpush1.msra.mxu0 0.0
        %688 = vmatprep.subr.mxu0 0.0
        %689 = vmatpush1.msra.mxu0 0.0
        %690 = vmatprep.subr.mxu0 0.0
        %691 = vmatpush1.msra.mxu0 0.0
        %692 = vmatprep.subr.mxu0 0.0
        %693 = vmatpush1.msra.mxu0 0.0
        %694 = vmatprep.subr.mxu0 0.0
        %695 = vmatpush1.msra.mxu0 0.0
        %696 = vmatprep.subr.mxu0 0.0
        %697 = vmatpush1.msra.mxu0 0.0
        %698 = vmatprep.subr.mxu0 0.0
        %699 = vmatpush1.msra.mxu0 0.0
        %700 = vmatprep.subr.mxu0 0.0
        %701 = vmatpush1.msra.mxu0 0.0
        %702 = vmatprep.subr.mxu0 0.0
        %703 = vmatpush1.msra.mxu0 0.0
        %704 = vmatprep.subr.mxu0 0.0
        %705 = vmatpush1.msra.mxu0 0.0
        %706 = vmatprep.subr.mxu0 0.0
        %707 = vmatpush1.msra.mxu0 0.0
        %708 = vmatprep.subr.mxu0 0.0
        %709 = vmatpush1.msra.mxu0 0.0
        %710 = vmatprep.subr.mxu0 0.0
        %711 = vmatpush1.msra.mxu0 0.0
        %712 = vmatprep.subr.mxu0 0.0
        %713 = vmatpush1.msra.mxu0 0.0
        %714 = vmatprep.subr.mxu0 0.0
        %715 = vmatpush1.msra.mxu0 0.0
        %716 = vmatprep.subr.mxu0 0.0
        %717 = vmatpush1.msra.mxu0 0.0
        %718 = vmatprep.subr.mxu0 0.0
        %719 = vmatpush1.msra.mxu0 0.0
        %720 = vmatprep.subr.mxu0 0.0
        %721 = vmatpush1.msra.mxu0 0.0
        %722 = vmatprep.subr.mxu0 0.0
        %723 = vmatpush1.msra.mxu0 0.0
        %724 = vmatprep.subr.mxu0 0.0
        %725 = vmatpush1.msra.mxu0 0.0
        %726 = vmatprep.subr.mxu0 0.0
        %727 = vmatpush1.msra.mxu0 0.0
        %728 = vmatprep.subr.mxu0 0.0
        %729 = vmatpush1.msra.mxu0 0.0
        %730 = vmatprep.mubr.f32.mxu0 0.0
        %731 = vmatmul.mubr.f32.gmra.mrb[0].mxu0 %v568
        %v732 = vpop.f32.mrb[0].mxu0
        %v733 = vadd.f32 0.0, %v732
        %v734 = vpop.f32.mrb[0].mxu0
        %735 = vmatprep.mubr.f32.mxu0 0.0
        %736 = vmatmul.mubr.f32.gmra.mrb[0].mxu0 %v571
        %v737 = vpop.f32.mrb[0].mxu0
        %v738 = vadd.f32 0.0, %v737
        %v739 = vpop.f32.mrb[0].mxu0
        %740 = vmatprep.mubr.f32.mxu0 0.0
        %741 = vmatmul.mubr.f32.gmra.mrb[0].mxu0 %v574
        %v742 = vpop.f32.mrb[0].mxu0
        %v743 = vadd.f32 0.0, %v742
        %v744 = vpop.f32.mrb[0].mxu0
        %745 = vmatprep.mubr.f32.mxu0 0.0
        %746 = vmatmul.mubr.f32.gmra.mrb[0].mxu0 %v577
        %v747 = vpop.f32.mrb[0].mxu0
        %v748 = vadd.f32 0.0, %v747
        %v749 = vpop.f32.mrb[0].mxu0
        %750 = vmatprep.mubr.f32.mxu0 0.0
        %751 = vmatmul.mubr.f32.gmra.mrb[0].mxu0 %v580
        %v752 = vpop.f32.mrb[0].mxu0
        %v753 = vadd.f32 0.0, %v752
        %v754 = vpop.f32.mrb[0].mxu0
        %755 = vmatprep.mubr.f32.mxu0 0.0
        %756 = vmatmul.mubr.f32.gmra.mrb[0].mxu0 %v583
        %v757 = vpop.f32.mrb[0].mxu0
        %v758 = vadd.f32 0.0, %v757
        %v759 = vpop.f32.mrb[0].mxu0
        %760 = vmatprep.mubr.f32.mxu0 0.0
        %761 = vmatmul.mubr.f32.gmra.mrb[0].mxu0 %v586
        %v762 = vpop.f32.mrb[0].mxu0
        %v763 = vadd.f32 0.0, %v762
        %v764 = vpop.f32.mrb[0].mxu0
        %765 = vmatprep.mubr.f32.mxu0 0.0
        %766 = vmatmul.mubr.f32.gmra.mrb[0].mxu0 %v589
        %v767 = vpop.f32.mrb[0].mxu0
        %v768 = vadd.f32 0.0, %v767
        %v769 = vpop.f32.mrb[0].mxu0
        %770 = vmatprep.mubr.f32.mxu0 0.0
        %771 = vmatmul.mubr.f32.gmra.mrb[0].mxu0 %v592
        %v772 = vpop.f32.mrb[0].mxu0
        %v773 = vadd.f32 0.0, %v772
        %v774 = vpop.f32.mrb[0].mxu0
        %775 = vmatprep.mubr.f32.mxu0 0.0
        %776 = vmatmul.mubr.f32.gmra.mrb[0].mxu0 %v595
        %v777 = vpop.f32.mrb[0].mxu0
        %v778 = vadd.f32 0.0, %v777
        %v779 = vpop.f32.mrb[0].mxu0
        %780 = vmatprep.mubr.f32.mxu0 0.0
        %781 = vmatmul.mubr.f32.gmra.mrb[0].mxu0 %v598
        %v782 = vpop.f32.mrb[0].mxu0
        %v783 = vadd.f32 0.0, %v782
        %v784 = vpop.f32.mrb[0].mxu0
        %785 = vmatprep.mubr.f32.mxu0 0.0
        %786 = vmatmul.mubr.f32.gmra.mrb[0].mxu0 %v601
        %v787 = vpop.f32.mrb[0].mxu0
        %v788 = vadd.f32 0.0, %v787
        %v789 = vpop.f32.mrb[0].mxu0
        %790 = vmatprep.mubr.f32.mxu0 0.0
        %791 = vmatmul.mubr.f32.gmra.mrb[0].mxu0 %v604
        %v792 = vpop.f32.mrb[0].mxu0
        %v793 = vadd.f32 0.0, %v792
        %v794 = vpop.f32.mrb[0].mxu0
        %795 = vmatprep.mubr.f32.mxu0 0.0
        %796 = vmatmul.mubr.f32.gmra.mrb[0].mxu0 %v607
        %v797 = vpop.f32.mrb[0].mxu0
        %v798 = vadd.f32 0.0, %v797
        %v799 = vpop.f32.mrb[0].mxu0
        %800 = vmatprep.mubr.f32.mxu0 0.0
        %801 = vmatmul.mubr.f32.gmra.mrb[0].mxu0 %v610
        %v802 = vpop.f32.mrb[0].mxu0
        %v803 = vadd.f32 0.0, %v802
        %v804 = vpop.f32.mrb[0].mxu0
        %805 = vmatprep.mubr.f32.mxu0 0.0
        %806 = vmatmul.mubr.f32.gmra.mrb[0].mxu0 %v613
        %v807 = vpop.f32.mrb[0].mxu0
        %v808 = vadd.f32 0.0, %v807
        %v809 = vpop.f32.mrb[0].mxu0
        %810 = vmatprep.mubr.f32.mxu0 0.0
        %811 = vmatmul.mubr.f32.gmra.mrb[0].mxu0 %v616
        %v812 = vpop.f32.mrb[0].mxu0
        %v813 = vadd.f32 0.0, %v812
        %v814 = vpop.f32.mrb[0].mxu0
        %815 = vmatprep.mubr.f32.mxu0 0.0
        %816 = vmatmul.mubr.f32.gmra.mrb[0].mxu0 %v619
        %v817 = vpop.f32.mrb[0].mxu0
        %v818 = vadd.f32 0.0, %v817
        %v819 = vpop.f32.mrb[0].mxu0
        %820 = vmatprep.mubr.f32.mxu0 0.0
        %821 = vmatmul.mubr.f32.gmra.mrb[0].mxu0 %v622
        %v822 = vpop.f32.mrb[0].mxu0
        %v823 = vadd.f32 0.0, %v822
        %v824 = vpop.f32.mrb[0].mxu0
        %825 = vmatprep.mubr.f32.mxu0 0.0
        %826 = vmatmul.mubr.f32.gmra.mrb[0].mxu0 %v625
        %v827 = vpop.f32.mrb[0].mxu0
        %v828 = vadd.f32 0.0, %v827
        %v829 = vpop.f32.mrb[0].mxu0
        %830 = vmatprep.mubr.f32.mxu0 0.0
        %831 = vmatmul.mubr.f32.gmra.mrb[0].mxu0 %v628
        %v832 = vpop.f32.mrb[0].mxu0
        %v833 = vadd.f32 0.0, %v832
        %v834 = vpop.f32.mrb[0].mxu0
        %835 = vmatprep.mubr.f32.mxu0 0.0
        %836 = vmatmul.mubr.f32.gmra.mrb[0].mxu0 %v631
        %v837 = vpop.f32.mrb[0].mxu0
        %v838 = vadd.f32 0.0, %v837
        %v839 = vpop.f32.mrb[0].mxu0
        %840 = vmatprep.mubr.f32.mxu0 0.0
        %841 = vmatmul.mubr.f32.gmra.mrb[0].mxu0 %v634
        %v842 = vpop.f32.mrb[0].mxu0
        %v843 = vadd.f32 0.0, %v842
        %v844 = vpop.f32.mrb[0].mxu0
        %845 = vmatprep.mubr.f32.mxu0 0.0
        %846 = vmatmul.mubr.f32.gmra.mrb[0].mxu0 %v637
        %v847 = vpop.f32.mrb[0].mxu0
        %v848 = vadd.f32 0.0, %v847
        %v849 = vpop.f32.mrb[0].mxu0
        %850 = vmatprep.mubr.f32.mxu0 0.0
        %851 = vmatmul.mubr.f32.gmra.mrb[0].mxu0 %v640
        %v852 = vpop.f32.mrb[0].mxu0
        %v853 = vadd.f32 0.0, %v852
        %v854 = vpop.f32.mrb[0].mxu0
        %855 = vmatprep.mubr.f32.mxu0 0.0
        %856 = vmatmul.mubr.f32.gmra.mrb[0].mxu0 %v643
        %v857 = vpop.f32.mrb[0].mxu0
        %v858 = vadd.f32 0.0, %v857
        %v859 = vpop.f32.mrb[0].mxu0
        %860 = vmatprep.mubr.f32.mxu0 0.0
        %861 = vmatmul.mubr.f32.gmra.mrb[0].mxu0 %v646
        %v862 = vpop.f32.mrb[0].mxu0
        %v863 = vadd.f32 0.0, %v862
        %v864 = vpop.f32.mrb[0].mxu0
        %865 = vmatprep.mubr.f32.mxu0 0.0
        %866 = vmatmul.mubr.f32.gmra.mrb[0].mxu0 %v649
        %v867 = vpop.f32.mrb[0].mxu0
        %v868 = vadd.f32 0.0, %v867
        %v869 = vpop.f32.mrb[0].mxu0
        %870 = vmatprep.mubr.f32.mxu0 0.0
        %871 = vmatmul.mubr.f32.gmra.mrb[0].mxu0 %v652
        %v872 = vpop.f32.mrb[0].mxu0
        %v873 = vadd.f32 0.0, %v872
        %v874 = vpop.f32.mrb[0].mxu0
        %875 = vmatprep.mubr.f32.mxu0 0.0
        %876 = vmatmul.mubr.f32.gmra.mrb[0].mxu0 %v655
        %v877 = vpop.f32.mrb[0].mxu0
        %v878 = vadd.f32 0.0, %v877
        %v879 = vpop.f32.mrb[0].mxu0
        %880 = vmatprep.mubr.f32.mxu0 0.0
        %881 = vmatmul.mubr.f32.gmra.mrb[0].mxu0 %v658
        %v882 = vpop.f32.mrb[0].mxu0
        %v883 = vadd.f32 0.0, %v882
        %v884 = vpop.f32.mrb[0].mxu0
        %885 = vmatprep.mubr.f32.mxu0 0.0
        %886 = vmatmul.mubr.f32.gmra.mrb[0].mxu0 %v661
        %v887 = vpop.f32.mrb[0].mxu0
        %v888 = vadd.f32 0.0, %v887
        %v889 = vpop.f32.mrb[0].mxu0
        %890 = vdwg.mxu0
        %v891 = vld [vmem:[#allocation2] sm:$0xff]
        %v892 = vld [vmem:[#allocation2 + $0x8] sm:$0xff]
        %v893 = vld [vmem:[#allocation2 + $0x10] sm:$0xff]
        %v894 = vld [vmem:[#allocation2 + $0x18] sm:$0xff]
        %v895 = vld [vmem:[#allocation2 + $0x20] sm:$0xff]
        %v896 = vld [vmem:[#allocation2 + $0x28] sm:$0xff]
        %v897 = vld [vmem:[#allocation2 + $0x30] sm:$0xff]
        %v898 = vld [vmem:[#allocation2 + $0x38] sm:$0xff]
        %v899 = vld [vmem:[#allocation2 + $0x40] sm:$0xff]
        %v900 = vld [vmem:[#allocation2 + $0x48] sm:$0xff]
        %v901 = vld [vmem:[#allocation2 + $0x50] sm:$0xff]
        %v902 = vld [vmem:[#allocation2 + $0x58] sm:$0xff]
        %v903 = vld [vmem:[#allocation2 + $0x60] sm:$0xff]
        %v904 = vld [vmem:[#allocation2 + $0x68] sm:$0xff]
        %v905 = vld [vmem:[#allocation2 + $0x70] sm:$0xff]
        %v906 = vld [vmem:[#allocation2 + $0x78] sm:$0xff]
        %v907 = vld [vmem:[#allocation2 + $0x80] sm:$0xff]
        %v908 = vld [vmem:[#allocation2 + $0x88] sm:$0xff]
        %v909 = vld [vmem:[#allocation2 + $0x90] sm:$0xff]
        %v910 = vld [vmem:[#allocation2 + $0x98] sm:$0xff]
        %v911 = vld [vmem:[#allocation2 + $0xa0] sm:$0xff]
        %v912 = vld [vmem:[#allocation2 + $0xa8] sm:$0xff]
        %v913 = vld [vmem:[#allocation2 + $0xb0] sm:$0xff]
        %v914 = vld [vmem:[#allocation2 + $0xb8] sm:$0xff]
        %v915 = vld [vmem:[#allocation2 + $0xc0] sm:$0xff]
        %v916 = vld [vmem:[#allocation2 + $0xc8] sm:$0xff]
        %v917 = vld [vmem:[#allocation2 + $0xd0] sm:$0xff]
        %v918 = vld [vmem:[#allocation2 + $0xd8] sm:$0xff]
        %v919 = vld [vmem:[#allocation2 + $0xe0] sm:$0xff]
        %v920 = vld [vmem:[#allocation2 + $0xe8] sm:$0xff]
        %v921 = vld [vmem:[#allocation2 + $0xf0] sm:$0xff]
        %v922 = vld [vmem:[#allocation2 + $0xf8] sm:$0xff]
        %v923 = vadd.f32 %v891, %v733
        %v924 = vadd.f32 %v892, %v738
        %v925 = vadd.f32 %v893, %v743
        %v926 = vadd.f32 %v894, %v748
        %v927 = vadd.f32 %v895, %v753
        %v928 = vadd.f32 %v896, %v758
        %v929 = vadd.f32 %v897, %v763
        %v930 = vadd.f32 %v898, %v768
        %v931 = vadd.f32 %v899, %v773
        %v932 = vadd.f32 %v900, %v778
        %v933 = vadd.f32 %v901, %v783
        %v934 = vadd.f32 %v902, %v788
        %v935 = vadd.f32 %v903, %v793
        %v936 = vadd.f32 %v904, %v798
        %v937 = vadd.f32 %v905, %v803
        %v938 = vadd.f32 %v906, %v808
        %v939 = vadd.f32 %v907, %v813
        %v940 = vadd.f32 %v908, %v818
        %v941 = vadd.f32 %v909, %v823
        %v942 = vadd.f32 %v910, %v828
        %v943 = vadd.f32 %v911, %v833
        %v944 = vadd.f32 %v912, %v838
        %v945 = vadd.f32 %v913, %v843
        %v946 = vadd.f32 %v914, %v848
        %v947 = vadd.f32 %v915, %v853
        %v948 = vadd.f32 %v916, %v858
        %v949 = vadd.f32 %v917, %v863
        %v950 = vadd.f32 %v918, %v868
        %v951 = vadd.f32 %v919, %v873
        %v952 = vadd.f32 %v920, %v878
        %v953 = vadd.f32 %v921, %v883
        %v954 = vadd.f32 %v922, %v888
        %955 = vst [vmem:[#allocation2] sm:$0xff] %v923
        %956 = vst [vmem:[#allocation2 + $0x8] sm:$0xff] %v924
        %957 = vst [vmem:[#allocation2 + $0x10] sm:$0xff] %v925
        %958 = vst [vmem:[#allocation2 + $0x18] sm:$0xff] %v926
        %959 = vst [vmem:[#allocation2 + $0x20] sm:$0xff] %v927
        %960 = vst [vmem:[#allocation2 + $0x28] sm:$0xff] %v928
        %961 = vst [vmem:[#allocation2 + $0x30] sm:$0xff] %v929
        %962 = vst [vmem:[#allocation2 + $0x38] sm:$0xff] %v930
        %963 = vst [vmem:[#allocation2 + $0x40] sm:$0xff] %v931
        %964 = vst [vmem:[#allocation2 + $0x48] sm:$0xff] %v932
        %965 = vst [vmem:[#allocation2 + $0x50] sm:$0xff] %v933
        %966 = vst [vmem:[#allocation2 + $0x58] sm:$0xff] %v934
        %967 = vst [vmem:[#allocation2 + $0x60] sm:$0xff] %v935
        %968 = vst [vmem:[#allocation2 + $0x68] sm:$0xff] %v936
        %969 = vst [vmem:[#allocation2 + $0x70] sm:$0xff] %v937
        %970 = vst [vmem:[#allocation2 + $0x78] sm:$0xff] %v938
        %971 = vst [vmem:[#allocation2 + $0x80] sm:$0xff] %v939
        %972 = vst [vmem:[#allocation2 + $0x88] sm:$0xff] %v940
        %973 = vst [vmem:[#allocation2 + $0x90] sm:$0xff] %v941
        %974 = vst [vmem:[#allocation2 + $0x98] sm:$0xff] %v942
        %975 = vst [vmem:[#allocation2 + $0xa0] sm:$0xff] %v943
        %976 = vst [vmem:[#allocation2 + $0xa8] sm:$0xff] %v944
        %977 = vst [vmem:[#allocation2 + $0xb0] sm:$0xff] %v945
        %978 = vst [vmem:[#allocation2 + $0xb8] sm:$0xff] %v946
        %979 = vst [vmem:[#allocation2 + $0xc0] sm:$0xff] %v947
        %980 = vst [vmem:[#allocation2 + $0xc8] sm:$0xff] %v948
        %981 = vst [vmem:[#allocation2 + $0xd0] sm:$0xff] %v949
        %982 = vst [vmem:[#allocation2 + $0xd8] sm:$0xff] %v950
        %983 = vst [vmem:[#allocation2 + $0xe0] sm:$0xff] %v951
        %984 = vst [vmem:[#allocation2 + $0xe8] sm:$0xff] %v952
        %985 = vst [vmem:[#allocation2 + $0xf0] sm:$0xff] %v953
        %986 = vst [vmem:[#allocation2 + $0xf8] sm:$0xff] %v954
        %v987 = vld [vmem:[%s141 + $0x2] sm:$0xff]
        %v988 = vld [vmem:[%s141 + $0xa] sm:$0xff]
        %v989 = vld [vmem:[%s141 + $0x1a] sm:$0xff]
        %v990 = vld [vmem:[%s141 + $0x22] sm:$0xff]
        %v991 = vld [vmem:[%s141 + $0x32] sm:$0xff]
        %v992 = vld [vmem:[%s141 + $0x3a] sm:$0xff]
        %v993 = vld [vmem:[%s141 + $0x4a] sm:$0xff]
        %v994 = vld [vmem:[%s141 + $0x52] sm:$0xff]
        %v995 = vld [vmem:[%s141 + $0x62] sm:$0xff]
        %v996 = vld [vmem:[%s141 + $0x6a] sm:$0xff]
        %v997 = vld [vmem:[%s141 + $0x7a] sm:$0xff]
        %v998 = vld [vmem:[%s141 + $0x82] sm:$0xff]
        %v999 = vld [vmem:[%s141 + $0x92] sm:$0xff]
        %v1000 = vld [vmem:[%s141 + $0x9a] sm:$0xff]
        %v1001 = vld [vmem:[%s141 + $0xaa] sm:$0xff]
        %v1002 = vld [vmem:[%s141 + $0xb2] sm:$0xff]
        %v1003 = vld [vmem:[%s141 + $0xc2] sm:$0xff]
        %v1004 = vld [vmem:[%s141 + $0xca] sm:$0xff]
        %v1005 = vld [vmem:[%s141 + $0xda] sm:$0xff]
        %v1006 = vld [vmem:[%s141 + $0xe2] sm:$0xff]
        %v1007 = vld [vmem:[%s141 + $0xf2] sm:$0xff]
        %v1008 = vld [vmem:[%s141 + $0xfa] sm:$0xff]
        %v1009 = vld [vmem:[%s141 + $0x10a] sm:$0xff]
        %v1010 = vld [vmem:[%s141 + $0x112] sm:$0xff]
        %v1011 = vld [vmem:[%s141 + $0x122] sm:$0xff]
        %v1012 = vld [vmem:[%s141 + $0x12a] sm:$0xff]
        %v1013 = vld [vmem:[%s141 + $0x13a] sm:$0xff]
        %v1014 = vld [vmem:[%s141 + $0x142] sm:$0xff]
        %v1015 = vld [vmem:[%s141 + $0x152] sm:$0xff]
        %v1016 = vld [vmem:[%s141 + $0x15a] sm:$0xff]
        %v1017 = vld [vmem:[%s141 + $0x16a] sm:$0xff]
        %v1018 = vld [vmem:[%s141 + $0x172] sm:$0xff]
        %s1019 = scalar_lea.vmem %s1, 8
        %v1020 = vld [vmem:[%s1019] sm:$0xf]
        %v1022 = vsel %vm175, %v987, 0
        %v1025 = vsel %vm175, %v988, 0
        %v1028 = vsel %vm175, %v989, 0
        %v1031 = vsel %vm175, %v990, 0
        %v1034 = vsel %vm175, %v991, 0
        %v1037 = vsel %vm175, %v992, 0
        %v1040 = vsel %vm175, %v993, 0
        %v1043 = vsel %vm175, %v994, 0
        %v1046 = vsel %vm175, %v995, 0
        %v1049 = vsel %vm175, %v996, 0
        %v1052 = vsel %vm175, %v997, 0
        %v1055 = vsel %vm175, %v998, 0
        %v1058 = vsel %vm175, %v999, 0
        %v1061 = vsel %vm175, %v1000, 0
        %v1064 = vsel %vm175, %v1001, 0
        %v1067 = vsel %vm175, %v1002, 0
        %v1070 = vsel %vm175, %v1003, 0
        %v1073 = vsel %vm175, %v1004, 0
        %v1076 = vsel %vm175, %v1005, 0
        %v1079 = vsel %vm175, %v1006, 0
        %v1082 = vsel %vm175, %v1007, 0
        %v1085 = vsel %vm175, %v1008, 0
        %v1088 = vsel %vm175, %v1009, 0
        %v1091 = vsel %vm175, %v1010, 0
        %v1094 = vsel %vm175, %v1011, 0
        %v1097 = vsel %vm175, %v1012, 0
        %v1100 = vsel %vm175, %v1013, 0
        %v1103 = vsel %vm175, %v1014, 0
        %v1106 = vsel %vm175, %v1015, 0
        %v1109 = vsel %vm175, %v1016, 0
        %v1112 = vsel %vm175, %v1017, 0
        %v1115 = vsel %vm175, %v1018, 0
        %v1118 = vsel %vm272, %v1020, 0
        %1120 = vmatprep.subr.mxu0 0.0
        %1121 = vmatpush1.msra.mxu0 %v1118
        %1122 = vmatprep.subr.mxu0 0.0
        %1123 = vmatpush1.msra.mxu0 0.0
        %1124 = vmatprep.subr.mxu0 0.0
        %1125 = vmatpush1.msra.mxu0 0.0
        %1126 = vmatprep.subr.mxu0 0.0
        %1127 = vmatpush1.msra.mxu0 0.0
        %1128 = vmatprep.subr.mxu0 0.0
        %1129 = vmatpush1.msra.mxu0 0.0
        %1130 = vmatprep.subr.mxu0 0.0
        %1131 = vmatpush1.msra.mxu0 0.0
        %1132 = vmatprep.subr.mxu0 0.0
        %1133 = vmatpush1.msra.mxu0 0.0
        %1134 = vmatprep.subr.mxu0 0.0
        %1135 = vmatpush1.msra.mxu0 0.0
        %1136 = vmatprep.subr.mxu0 0.0
        %1137 = vmatpush1.msra.mxu0 0.0
        %1138 = vmatprep.subr.mxu0 0.0
        %1139 = vmatpush1.msra.mxu0 0.0
        %1140 = vmatprep.subr.mxu0 0.0
        %1141 = vmatpush1.msra.mxu0 0.0
        %1142 = vmatprep.subr.mxu0 0.0
        %1143 = vmatpush1.msra.mxu0 0.0
        %1144 = vmatprep.subr.mxu0 0.0
        %1145 = vmatpush1.msra.mxu0 0.0
        %1146 = vmatprep.subr.mxu0 0.0
        %1147 = vmatpush1.msra.mxu0 0.0
        %1148 = vmatprep.subr.mxu0 0.0
        %1149 = vmatpush1.msra.mxu0 0.0
        %1150 = vmatprep.subr.mxu0 0.0
        %1151 = vmatpush1.msra.mxu0 0.0
        %1152 = vmatprep.subr.mxu0 0.0
        %1153 = vmatpush1.msra.mxu0 0.0
        %1154 = vmatprep.subr.mxu0 0.0
        %1155 = vmatpush1.msra.mxu0 0.0
        %1156 = vmatprep.subr.mxu0 0.0
        %1157 = vmatpush1.msra.mxu0 0.0
        %1158 = vmatprep.subr.mxu0 0.0
        %1159 = vmatpush1.msra.mxu0 0.0
        %1160 = vmatprep.subr.mxu0 0.0
        %1161 = vmatpush1.msra.mxu0 0.0
        %1162 = vmatprep.subr.mxu0 0.0
        %1163 = vmatpush1.msra.mxu0 0.0
        %1164 = vmatprep.subr.mxu0 0.0
        %1165 = vmatpush1.msra.mxu0 0.0
        %1166 = vmatprep.subr.mxu0 0.0
        %1167 = vmatpush1.msra.mxu0 0.0
        %1168 = vmatprep.subr.mxu0 0.0
        %1169 = vmatpush1.msra.mxu0 0.0
        %1170 = vmatprep.subr.mxu0 0.0
        %1171 = vmatpush1.msra.mxu0 0.0
        %1172 = vmatprep.subr.mxu0 0.0
        %1173 = vmatpush1.msra.mxu0 0.0
        %1174 = vmatprep.subr.mxu0 0.0
        %1175 = vmatpush1.msra.mxu0 0.0
        %1176 = vmatprep.subr.mxu0 0.0
        %1177 = vmatpush1.msra.mxu0 0.0
        %1178 = vmatprep.subr.mxu0 0.0
        %1179 = vmatpush1.msra.mxu0 0.0
        %1180 = vmatprep.subr.mxu0 0.0
        %1181 = vmatpush1.msra.mxu0 0.0
        %1182 = vmatprep.subr.mxu0 0.0
        %1183 = vmatpush1.msra.mxu0 0.0
        %1184 = vmatprep.mubr.f32.mxu0 0.0
        %1185 = vmatmul.mubr.f32.gmra.mrb[0].mxu0 %v1022
        %v1186 = vpop.f32.mrb[0].mxu0
        %v1187 = vadd.f32 0.0, %v1186
        %v1188 = vpop.f32.mrb[0].mxu0
        %1189 = vmatprep.mubr.f32.mxu0 0.0
        %1190 = vmatmul.mubr.f32.gmra.mrb[0].mxu0 %v1025
        %v1191 = vpop.f32.mrb[0].mxu0
        %v1192 = vadd.f32 0.0, %v1191
        %v1193 = vpop.f32.mrb[0].mxu0
        %1194 = vmatprep.mubr.f32.mxu0 0.0
        %1195 = vmatmul.mubr.f32.gmra.mrb[0].mxu0 %v1028
        %v1196 = vpop.f32.mrb[0].mxu0
        %v1197 = vadd.f32 0.0, %v1196
        %v1198 = vpop.f32.mrb[0].mxu0
        %1199 = vmatprep.mubr.f32.mxu0 0.0
        %1200 = vmatmul.mubr.f32.gmra.mrb[0].mxu0 %v1031
        %v1201 = vpop.f32.mrb[0].mxu0
        %v1202 = vadd.f32 0.0, %v1201
        %v1203 = vpop.f32.mrb[0].mxu0
        %1204 = vmatprep.mubr.f32.mxu0 0.0
        %1205 = vmatmul.mubr.f32.gmra.mrb[0].mxu0 %v1034
        %v1206 = vpop.f32.mrb[0].mxu0
        %v1207 = vadd.f32 0.0, %v1206
        %v1208 = vpop.f32.mrb[0].mxu0
        %1209 = vmatprep.mubr.f32.mxu0 0.0
        %1210 = vmatmul.mubr.f32.gmra.mrb[0].mxu0 %v1037
        %v1211 = vpop.f32.mrb[0].mxu0
        %v1212 = vadd.f32 0.0, %v1211
        %v1213 = vpop.f32.mrb[0].mxu0
        %1214 = vmatprep.mubr.f32.mxu0 0.0
        %1215 = vmatmul.mubr.f32.gmra.mrb[0].mxu0 %v1040
        %v1216 = vpop.f32.mrb[0].mxu0
        %v1217 = vadd.f32 0.0, %v1216
        %v1218 = vpop.f32.mrb[0].mxu0
        %1219 = vmatprep.mubr.f32.mxu0 0.0
        %1220 = vmatmul.mubr.f32.gmra.mrb[0].mxu0 %v1043
        %v1221 = vpop.f32.mrb[0].mxu0
        %v1222 = vadd.f32 0.0, %v1221
        %v1223 = vpop.f32.mrb[0].mxu0
        %1224 = vmatprep.mubr.f32.mxu0 0.0
        %1225 = vmatmul.mubr.f32.gmra.mrb[0].mxu0 %v1046
        %v1226 = vpop.f32.mrb[0].mxu0
        %v1227 = vadd.f32 0.0, %v1226
        %v1228 = vpop.f32.mrb[0].mxu0
        %1229 = vmatprep.mubr.f32.mxu0 0.0
        %1230 = vmatmul.mubr.f32.gmra.mrb[0].mxu0 %v1049
        %v1231 = vpop.f32.mrb[0].mxu0
        %v1232 = vadd.f32 0.0, %v1231
        %v1233 = vpop.f32.mrb[0].mxu0
        %1234 = vmatprep.mubr.f32.mxu0 0.0
        %1235 = vmatmul.mubr.f32.gmra.mrb[0].mxu0 %v1052
        %v1236 = vpop.f32.mrb[0].mxu0
        %v1237 = vadd.f32 0.0, %v1236
        %v1238 = vpop.f32.mrb[0].mxu0
        %1239 = vmatprep.mubr.f32.mxu0 0.0
        %1240 = vmatmul.mubr.f32.gmra.mrb[0].mxu0 %v1055
        %v1241 = vpop.f32.mrb[0].mxu0
        %v1242 = vadd.f32 0.0, %v1241
        %v1243 = vpop.f32.mrb[0].mxu0
        %1244 = vmatprep.mubr.f32.mxu0 0.0
        %1245 = vmatmul.mubr.f32.gmra.mrb[0].mxu0 %v1058
        %v1246 = vpop.f32.mrb[0].mxu0
        %v1247 = vadd.f32 0.0, %v1246
        %v1248 = vpop.f32.mrb[0].mxu0
        %1249 = vmatprep.mubr.f32.mxu0 0.0
        %1250 = vmatmul.mubr.f32.gmra.mrb[0].mxu0 %v1061
        %v1251 = vpop.f32.mrb[0].mxu0
        %v1252 = vadd.f32 0.0, %v1251
        %v1253 = vpop.f32.mrb[0].mxu0
        %1254 = vmatprep.mubr.f32.mxu0 0.0
        %1255 = vmatmul.mubr.f32.gmra.mrb[0].mxu0 %v1064
        %v1256 = vpop.f32.mrb[0].mxu0
        %v1257 = vadd.f32 0.0, %v1256
        %v1258 = vpop.f32.mrb[0].mxu0
        %1259 = vmatprep.mubr.f32.mxu0 0.0
        %1260 = vmatmul.mubr.f32.gmra.mrb[0].mxu0 %v1067
        %v1261 = vpop.f32.mrb[0].mxu0
        %v1262 = vadd.f32 0.0, %v1261
        %v1263 = vpop.f32.mrb[0].mxu0
        %1264 = vmatprep.mubr.f32.mxu0 0.0
        %1265 = vmatmul.mubr.f32.gmra.mrb[0].mxu0 %v1070
        %v1266 = vpop.f32.mrb[0].mxu0
        %v1267 = vadd.f32 0.0, %v1266
        %v1268 = vpop.f32.mrb[0].mxu0
        %1269 = vmatprep.mubr.f32.mxu0 0.0
        %1270 = vmatmul.mubr.f32.gmra.mrb[0].mxu0 %v1073
        %v1271 = vpop.f32.mrb[0].mxu0
        %v1272 = vadd.f32 0.0, %v1271
        %v1273 = vpop.f32.mrb[0].mxu0
        %1274 = vmatprep.mubr.f32.mxu0 0.0
        %1275 = vmatmul.mubr.f32.gmra.mrb[0].mxu0 %v1076
        %v1276 = vpop.f32.mrb[0].mxu0
        %v1277 = vadd.f32 0.0, %v1276
        %v1278 = vpop.f32.mrb[0].mxu0
        %1279 = vmatprep.mubr.f32.mxu0 0.0
        %1280 = vmatmul.mubr.f32.gmra.mrb[0].mxu0 %v1079
        %v1281 = vpop.f32.mrb[0].mxu0
        %v1282 = vadd.f32 0.0, %v1281
        %v1283 = vpop.f32.mrb[0].mxu0
        %1284 = vmatprep.mubr.f32.mxu0 0.0
        %1285 = vmatmul.mubr.f32.gmra.mrb[0].mxu0 %v1082
        %v1286 = vpop.f32.mrb[0].mxu0
        %v1287 = vadd.f32 0.0, %v1286
        %v1288 = vpop.f32.mrb[0].mxu0
        %1289 = vmatprep.mubr.f32.mxu0 0.0
        %1290 = vmatmul.mubr.f32.gmra.mrb[0].mxu0 %v1085
        %v1291 = vpop.f32.mrb[0].mxu0
        %v1292 = vadd.f32 0.0, %v1291
        %v1293 = vpop.f32.mrb[0].mxu0
        %1294 = vmatprep.mubr.f32.mxu0 0.0
        %1295 = vmatmul.mubr.f32.gmra.mrb[0].mxu0 %v1088
        %v1296 = vpop.f32.mrb[0].mxu0
        %v1297 = vadd.f32 0.0, %v1296
        %v1298 = vpop.f32.mrb[0].mxu0
        %1299 = vmatprep.mubr.f32.mxu0 0.0
        %1300 = vmatmul.mubr.f32.gmra.mrb[0].mxu0 %v1091
        %v1301 = vpop.f32.mrb[0].mxu0
        %v1302 = vadd.f32 0.0, %v1301
        %v1303 = vpop.f32.mrb[0].mxu0
        %1304 = vmatprep.mubr.f32.mxu0 0.0
        %1305 = vmatmul.mubr.f32.gmra.mrb[0].mxu0 %v1094
        %v1306 = vpop.f32.mrb[0].mxu0
        %v1307 = vadd.f32 0.0, %v1306
        %v1308 = vpop.f32.mrb[0].mxu0
        %1309 = vmatprep.mubr.f32.mxu0 0.0
        %1310 = vmatmul.mubr.f32.gmra.mrb[0].mxu0 %v1097
        %v1311 = vpop.f32.mrb[0].mxu0
        %v1312 = vadd.f32 0.0, %v1311
        %v1313 = vpop.f32.mrb[0].mxu0
        %1314 = vmatprep.mubr.f32.mxu0 0.0
        %1315 = vmatmul.mubr.f32.gmra.mrb[0].mxu0 %v1100
        %v1316 = vpop.f32.mrb[0].mxu0
        %v1317 = vadd.f32 0.0, %v1316
        %v1318 = vpop.f32.mrb[0].mxu0
        %1319 = vmatprep.mubr.f32.mxu0 0.0
        %1320 = vmatmul.mubr.f32.gmra.mrb[0].mxu0 %v1103
        %v1321 = vpop.f32.mrb[0].mxu0
        %v1322 = vadd.f32 0.0, %v1321
        %v1323 = vpop.f32.mrb[0].mxu0
        %1324 = vmatprep.mubr.f32.mxu0 0.0
        %1325 = vmatmul.mubr.f32.gmra.mrb[0].mxu0 %v1106
        %v1326 = vpop.f32.mrb[0].mxu0
        %v1327 = vadd.f32 0.0, %v1326
        %v1328 = vpop.f32.mrb[0].mxu0
        %1329 = vmatprep.mubr.f32.mxu0 0.0
        %1330 = vmatmul.mubr.f32.gmra.mrb[0].mxu0 %v1109
        %v1331 = vpop.f32.mrb[0].mxu0
        %v1332 = vadd.f32 0.0, %v1331
        %v1333 = vpop.f32.mrb[0].mxu0
        %1334 = vmatprep.mubr.f32.mxu0 0.0
        %1335 = vmatmul.mubr.f32.gmra.mrb[0].mxu0 %v1112
        %v1336 = vpop.f32.mrb[0].mxu0
        %v1337 = vadd.f32 0.0, %v1336
        %v1338 = vpop.f32.mrb[0].mxu0
        %1339 = vmatprep.mubr.f32.mxu0 0.0
        %1340 = vmatmul.mubr.f32.gmra.mrb[0].mxu0 %v1115
        %v1341 = vpop.f32.mrb[0].mxu0
        %v1342 = vadd.f32 0.0, %v1341
        %v1343 = vpop.f32.mrb[0].mxu0
        %1344 = vdwg.mxu0
        %v1345 = vld [vmem:[#allocation2] sm:$0xff]
        %v1346 = vld [vmem:[#allocation2 + $0x8] sm:$0xff]
        %v1347 = vld [vmem:[#allocation2 + $0x10] sm:$0xff]
        %v1348 = vld [vmem:[#allocation2 + $0x18] sm:$0xff]
        %v1349 = vld [vmem:[#allocation2 + $0x20] sm:$0xff]
        %v1350 = vld [vmem:[#allocation2 + $0x28] sm:$0xff]
        %v1351 = vld [vmem:[#allocation2 + $0x30] sm:$0xff]
        %v1352 = vld [vmem:[#allocation2 + $0x38] sm:$0xff]
        %v1353 = vld [vmem:[#allocation2 + $0x40] sm:$0xff]
        %v1354 = vld [vmem:[#allocation2 + $0x48] sm:$0xff]
        %v1355 = vld [vmem:[#allocation2 + $0x50] sm:$0xff]
        %v1356 = vld [vmem:[#allocation2 + $0x58] sm:$0xff]
        %v1357 = vld [vmem:[#allocation2 + $0x60] sm:$0xff]
        %v1358 = vld [vmem:[#allocation2 + $0x68] sm:$0xff]
        %v1359 = vld [vmem:[#allocation2 + $0x70] sm:$0xff]
        %v1360 = vld [vmem:[#allocation2 + $0x78] sm:$0xff]
        %v1361 = vld [vmem:[#allocation2 + $0x80] sm:$0xff]
        %v1362 = vld [vmem:[#allocation2 + $0x88] sm:$0xff]
        %v1363 = vld [vmem:[#allocation2 + $0x90] sm:$0xff]
        %v1364 = vld [vmem:[#allocation2 + $0x98] sm:$0xff]
        %v1365 = vld [vmem:[#allocation2 + $0xa0] sm:$0xff]
        %v1366 = vld [vmem:[#allocation2 + $0xa8] sm:$0xff]
        %v1367 = vld [vmem:[#allocation2 + $0xb0] sm:$0xff]
        %v1368 = vld [vmem:[#allocation2 + $0xb8] sm:$0xff]
        %v1369 = vld [vmem:[#allocation2 + $0xc0] sm:$0xff]
        %v1370 = vld [vmem:[#allocation2 + $0xc8] sm:$0xff]
        %v1371 = vld [vmem:[#allocation2 + $0xd0] sm:$0xff]
        %v1372 = vld [vmem:[#allocation2 + $0xd8] sm:$0xff]
        %v1373 = vld [vmem:[#allocation2 + $0xe0] sm:$0xff]
        %v1374 = vld [vmem:[#allocation2 + $0xe8] sm:$0xff]
        %v1375 = vld [vmem:[#allocation2 + $0xf0] sm:$0xff]
        %v1376 = vld [vmem:[#allocation2 + $0xf8] sm:$0xff]
        %v1377 = vadd.f32 %v1345, %v1187
        %v1378 = vadd.f32 %v1346, %v1192
        %v1379 = vadd.f32 %v1347, %v1197
        %v1380 = vadd.f32 %v1348, %v1202
        %v1381 = vadd.f32 %v1349, %v1207
        %v1382 = vadd.f32 %v1350, %v1212
        %v1383 = vadd.f32 %v1351, %v1217
        %v1384 = vadd.f32 %v1352, %v1222
        %v1385 = vadd.f32 %v1353, %v1227
        %v1386 = vadd.f32 %v1354, %v1232
        %v1387 = vadd.f32 %v1355, %v1237
        %v1388 = vadd.f32 %v1356, %v1242
        %v1389 = vadd.f32 %v1357, %v1247
        %v1390 = vadd.f32 %v1358, %v1252
        %v1391 = vadd.f32 %v1359, %v1257
        %v1392 = vadd.f32 %v1360, %v1262
        %v1393 = vadd.f32 %v1361, %v1267
        %v1394 = vadd.f32 %v1362, %v1272
        %v1395 = vadd.f32 %v1363, %v1277
        %v1396 = vadd.f32 %v1364, %v1282
        %v1397 = vadd.f32 %v1365, %v1287
        %v1398 = vadd.f32 %v1366, %v1292
        %v1399 = vadd.f32 %v1367, %v1297
        %v1400 = vadd.f32 %v1368, %v1302
        %v1401 = vadd.f32 %v1369, %v1307
        %v1402 = vadd.f32 %v1370, %v1312
        %v1403 = vadd.f32 %v1371, %v1317
        %v1404 = vadd.f32 %v1372, %v1322
        %v1405 = vadd.f32 %v1373, %v1327
        %v1406 = vadd.f32 %v1374, %v1332
        %v1407 = vadd.f32 %v1375, %v1337
        %v1408 = vadd.f32 %v1376, %v1342
        %1409 = vst [vmem:[#allocation2] sm:$0xff] %v1377
        %1410 = vst [vmem:[#allocation2 + $0x8] sm:$0xff] %v1378
        %1411 = vst [vmem:[#allocation2 + $0x10] sm:$0xff] %v1379
        %1412 = vst [vmem:[#allocation2 + $0x18] sm:$0xff] %v1380
        %1413 = vst [vmem:[#allocation2 + $0x20] sm:$0xff] %v1381
        %1414 = vst [vmem:[#allocation2 + $0x28] sm:$0xff] %v1382
        %1415 = vst [vmem:[#allocation2 + $0x30] sm:$0xff] %v1383
        %1416 = vst [vmem:[#allocation2 + $0x38] sm:$0xff] %v1384
        %1417 = vst [vmem:[#allocation2 + $0x40] sm:$0xff] %v1385
        %1418 = vst [vmem:[#allocation2 + $0x48] sm:$0xff] %v1386
        %1419 = vst [vmem:[#allocation2 + $0x50] sm:$0xff] %v1387
        %1420 = vst [vmem:[#allocation2 + $0x58] sm:$0xff] %v1388
        %1421 = vst [vmem:[#allocation2 + $0x60] sm:$0xff] %v1389
        %1422 = vst [vmem:[#allocation2 + $0x68] sm:$0xff] %v1390
        %1423 = vst [vmem:[#allocation2 + $0x70] sm:$0xff] %v1391
        %1424 = vst [vmem:[#allocation2 + $0x78] sm:$0xff] %v1392
        %1425 = vst [vmem:[#allocation2 + $0x80] sm:$0xff] %v1393
        %1426 = vst [vmem:[#allocation2 + $0x88] sm:$0xff] %v1394
        %1427 = vst [vmem:[#allocation2 + $0x90] sm:$0xff] %v1395
        %1428 = vst [vmem:[#allocation2 + $0x98] sm:$0xff] %v1396
        %1429 = vst [vmem:[#allocation2 + $0xa0] sm:$0xff] %v1397
        %1430 = vst [vmem:[#allocation2 + $0xa8] sm:$0xff] %v1398
        %1431 = vst [vmem:[#allocation2 + $0xb0] sm:$0xff] %v1399
        %1432 = vst [vmem:[#allocation2 + $0xb8] sm:$0xff] %v1400
        %1433 = vst [vmem:[#allocation2 + $0xc0] sm:$0xff] %v1401
        %1434 = vst [vmem:[#allocation2 + $0xc8] sm:$0xff] %v1402
        %1435 = vst [vmem:[#allocation2 + $0xd0] sm:$0xff] %v1403
        %1436 = vst [vmem:[#allocation2 + $0xd8] sm:$0xff] %v1404
        %1437 = vst [vmem:[#allocation2 + $0xe0] sm:$0xff] %v1405
        %1438 = vst [vmem:[#allocation2 + $0xe8] sm:$0xff] %v1406
        %1439 = vst [vmem:[#allocation2 + $0xf0] sm:$0xff] %v1407
        %1440 = vst [vmem:[#allocation2 + $0xf8] sm:$0xff] %v1408
        %s1441 = scalar_lea.vmem %s141, 24
        %v1442 = vld [vmem:[%s1441] sm:$0xff]
        %v1443 = vld [vmem:[%s1441 + $0x8] sm:$0xff]
        %v1444 = vld [vmem:[%s1441 + $0x18] sm:$0xff]
        %v1445 = vld [vmem:[%s1441 + $0x20] sm:$0xff]
        %v1446 = vld [vmem:[%s1441 + $0x30] sm:$0xff]
        %v1447 = vld [vmem:[%s1441 + $0x38] sm:$0xff]
        %v1448 = vld [vmem:[%s1441 + $0x48] sm:$0xff]
        %v1449 = vld [vmem:[%s1441 + $0x50] sm:$0xff]
        %v1450 = vld [vmem:[%s1441 + $0x60] sm:$0xff]
        %v1451 = vld [vmem:[%s1441 + $0x68] sm:$0xff]
        %v1452 = vld [vmem:[%s1441 + $0x78] sm:$0xff]
        %v1453 = vld [vmem:[%s1441 + $0x80] sm:$0xff]
        %v1454 = vld [vmem:[%s1441 + $0x90] sm:$0xff]
        %v1455 = vld [vmem:[%s1441 + $0x98] sm:$0xff]
        %v1456 = vld [vmem:[%s1441 + $0xa8] sm:$0xff]
        %v1457 = vld [vmem:[%s1441 + $0xb0] sm:$0xff]
        %v1458 = vld [vmem:[%s1441 + $0xc0] sm:$0xff]
        %v1459 = vld [vmem:[%s1441 + $0xc8] sm:$0xff]
        %v1460 = vld [vmem:[%s1441 + $0xd8] sm:$0xff]
        %v1461 = vld [vmem:[%s1441 + $0xe0] sm:$0xff]
        %v1462 = vld [vmem:[%s1441 + $0xf0] sm:$0xff]
        %v1463 = vld [vmem:[%s1441 + $0xf8] sm:$0xff]
        %v1464 = vld [vmem:[%s1441 + $0x108] sm:$0xff]
        %v1465 = vld [vmem:[%s1441 + $0x110] sm:$0xff]
        %v1466 = vld [vmem:[%s1441 + $0x120] sm:$0xff]
        %v1467 = vld [vmem:[%s1441 + $0x128] sm:$0xff]
        %v1468 = vld [vmem:[%s1441 + $0x138] sm:$0xff]
        %v1469 = vld [vmem:[%s1441 + $0x140] sm:$0xff]
        %v1470 = vld [vmem:[%s1441 + $0x150] sm:$0xff]
        %v1471 = vld [vmem:[%s1441 + $0x158] sm:$0xff]
        %v1472 = vld [vmem:[%s1441 + $0x168] sm:$0xff]
        %v1473 = vld [vmem:[%s1441 + $0x170] sm:$0xff]
        %s1474 = scalar_lea.vmem %s1, 12
        %v1475 = vld [vmem:[%s1474] sm:$0xf]
        %v1477 = vsel %vm175, %v1442, 0
        %v1480 = vsel %vm175, %v1443, 0
        %v1483 = vsel %vm175, %v1444, 0
        %v1486 = vsel %vm175, %v1445, 0
        %v1489 = vsel %vm175, %v1446, 0
        %v1492 = vsel %vm175, %v1447, 0
        %v1495 = vsel %vm175, %v1448, 0
        %v1498 = vsel %vm175, %v1449, 0
        %v1501 = vsel %vm175, %v1450, 0
        %v1504 = vsel %vm175, %v1451, 0
        %v1507 = vsel %vm175, %v1452, 0
        %v1510 = vsel %vm175, %v1453, 0
        %v1513 = vsel %vm175, %v1454, 0
        %v1516 = vsel %vm175, %v1455, 0
        %v1519 = vsel %vm175, %v1456, 0
        %v1522 = vsel %vm175, %v1457, 0
        %v1525 = vsel %vm175, %v1458, 0
        %v1528 = vsel %vm175, %v1459, 0
        %v1531 = vsel %vm175, %v1460, 0
        %v1534 = vsel %vm175, %v1461, 0
        %v1537 = vsel %vm175, %v1462, 0
        %v1540 = vsel %vm175, %v1463, 0
        %v1543 = vsel %vm175, %v1464, 0
        %v1546 = vsel %vm175, %v1465, 0
        %v1549 = vsel %vm175, %v1466, 0
        %v1552 = vsel %vm175, %v1467, 0
        %v1555 = vsel %vm175, %v1468, 0
        %v1558 = vsel %vm175, %v1469, 0
        %v1561 = vsel %vm175, %v1470, 0
        %v1564 = vsel %vm175, %v1471, 0
        %v1567 = vsel %vm175, %v1472, 0
        %v1570 = vsel %vm175, %v1473, 0
        %v1573 = vsel %vm272, %v1475, 0
        %1575 = vmatprep.subr.mxu0 0.0
        %1576 = vmatpush1.msra.mxu0 %v1573
        %1577 = vmatprep.subr.mxu0 0.0
        %1578 = vmatpush1.msra.mxu0 0.0
        %1579 = vmatprep.subr.mxu0 0.0
        %1580 = vmatpush1.msra.mxu0 0.0
        %1581 = vmatprep.subr.mxu0 0.0
        %1582 = vmatpush1.msra.mxu0 0.0
        %1583 = vmatprep.subr.mxu0 0.0
        %1584 = vmatpush1.msra.mxu0 0.0
        %1585 = vmatprep.subr.mxu0 0.0
        %1586 = vmatpush1.msra.mxu0 0.0
        %1587 = vmatprep.subr.mxu0 0.0
        %1588 = vmatpush1.msra.mxu0 0.0
        %1589 = vmatprep.subr.mxu0 0.0
        %1590 = vmatpush1.msra.mxu0 0.0
        %1591 = vmatprep.subr.mxu0 0.0
        %1592 = vmatpush1.msra.mxu0 0.0
        %1593 = vmatprep.subr.mxu0 0.0
        %1594 = vmatpush1.msra.mxu0 0.0
        %1595 = vmatprep.subr.mxu0 0.0
        %1596 = vmatpush1.msra.mxu0 0.0
        %1597 = vmatprep.subr.mxu0 0.0
        %1598 = vmatpush1.msra.mxu0 0.0
        %1599 = vmatprep.subr.mxu0 0.0
        %1600 = vmatpush1.msra.mxu0 0.0
        %1601 = vmatprep.subr.mxu0 0.0
        %1602 = vmatpush1.msra.mxu0 0.0
        %1603 = vmatprep.subr.mxu0 0.0
        %1604 = vmatpush1.msra.mxu0 0.0
        %1605 = vmatprep.subr.mxu0 0.0
        %1606 = vmatpush1.msra.mxu0 0.0
        %1607 = vmatprep.subr.mxu0 0.0
        %1608 = vmatpush1.msra.mxu0 0.0
        %1609 = vmatprep.subr.mxu0 0.0
        %1610 = vmatpush1.msra.mxu0 0.0
        %1611 = vmatprep.subr.mxu0 0.0
        %1612 = vmatpush1.msra.mxu0 0.0
        %1613 = vmatprep.subr.mxu0 0.0
        %1614 = vmatpush1.msra.mxu0 0.0
        %1615 = vmatprep.subr.mxu0 0.0
        %1616 = vmatpush1.msra.mxu0 0.0
        %1617 = vmatprep.subr.mxu0 0.0
        %1618 = vmatpush1.msra.mxu0 0.0
        %1619 = vmatprep.subr.mxu0 0.0
        %1620 = vmatpush1.msra.mxu0 0.0
        %1621 = vmatprep.subr.mxu0 0.0
        %1622 = vmatpush1.msra.mxu0 0.0
        %1623 = vmatprep.subr.mxu0 0.0
        %1624 = vmatpush1.msra.mxu0 0.0
        %1625 = vmatprep.subr.mxu0 0.0
        %1626 = vmatpush1.msra.mxu0 0.0
        %1627 = vmatprep.subr.mxu0 0.0
        %1628 = vmatpush1.msra.mxu0 0.0
        %1629 = vmatprep.subr.mxu0 0.0
        %1630 = vmatpush1.msra.mxu0 0.0
        %1631 = vmatprep.subr.mxu0 0.0
        %1632 = vmatpush1.msra.mxu0 0.0
        %1633 = vmatprep.subr.mxu0 0.0
        %1634 = vmatpush1.msra.mxu0 0.0
        %1635 = vmatprep.subr.mxu0 0.0
        %1636 = vmatpush1.msra.mxu0 0.0
        %1637 = vmatprep.subr.mxu0 0.0
        %1638 = vmatpush1.msra.mxu0 0.0
        %1639 = vmatprep.mubr.f32.mxu0 0.0
        %1640 = vmatmul.mubr.f32.gmra.mrb[0].mxu0 %v1477
        %v1641 = vpop.f32.mrb[0].mxu0
        %v1642 = vadd.f32 0.0, %v1641
        %v1643 = vpop.f32.mrb[0].mxu0
        %1644 = vmatprep.mubr.f32.mxu0 0.0
        %1645 = vmatmul.mubr.f32.gmra.mrb[0].mxu0 %v1480
        %v1646 = vpop.f32.mrb[0].mxu0
        %v1647 = vadd.f32 0.0, %v1646
        %v1648 = vpop.f32.mrb[0].mxu0
        %1649 = vmatprep.mubr.f32.mxu0 0.0
        %1650 = vmatmul.mubr.f32.gmra.mrb[0].mxu0 %v1483
        %v1651 = vpop.f32.mrb[0].mxu0
        %v1652 = vadd.f32 0.0, %v1651
        %v1653 = vpop.f32.mrb[0].mxu0
        %1654 = vmatprep.mubr.f32.mxu0 0.0
        %1655 = vmatmul.mubr.f32.gmra.mrb[0].mxu0 %v1486
        %v1656 = vpop.f32.mrb[0].mxu0
        %v1657 = vadd.f32 0.0, %v1656
        %v1658 = vpop.f32.mrb[0].mxu0
        %1659 = vmatprep.mubr.f32.mxu0 0.0
        %1660 = vmatmul.mubr.f32.gmra.mrb[0].mxu0 %v1489
        %v1661 = vpop.f32.mrb[0].mxu0
        %v1662 = vadd.f32 0.0, %v1661
        %v1663 = vpop.f32.mrb[0].mxu0
        %1664 = vmatprep.mubr.f32.mxu0 0.0
        %1665 = vmatmul.mubr.f32.gmra.mrb[0].mxu0 %v1492
        %v1666 = vpop.f32.mrb[0].mxu0
        %v1667 = vadd.f32 0.0, %v1666
        %v1668 = vpop.f32.mrb[0].mxu0
        %1669 = vmatprep.mubr.f32.mxu0 0.0
        %1670 = vmatmul.mubr.f32.gmra.mrb[0].mxu0 %v1495
        %v1671 = vpop.f32.mrb[0].mxu0
        %v1672 = vadd.f32 0.0, %v1671
        %v1673 = vpop.f32.mrb[0].mxu0
        %1674 = vmatprep.mubr.f32.mxu0 0.0
        %1675 = vmatmul.mubr.f32.gmra.mrb[0].mxu0 %v1498
        %v1676 = vpop.f32.mrb[0].mxu0
        %v1677 = vadd.f32 0.0, %v1676
        %v1678 = vpop.f32.mrb[0].mxu0
        %1679 = vmatprep.mubr.f32.mxu0 0.0
        %1680 = vmatmul.mubr.f32.gmra.mrb[0].mxu0 %v1501
        %v1681 = vpop.f32.mrb[0].mxu0
        %v1682 = vadd.f32 0.0, %v1681
        %v1683 = vpop.f32.mrb[0].mxu0
        %1684 = vmatprep.mubr.f32.mxu0 0.0
        %1685 = vmatmul.mubr.f32.gmra.mrb[0].mxu0 %v1504
        %v1686 = vpop.f32.mrb[0].mxu0
        %v1687 = vadd.f32 0.0, %v1686
        %v1688 = vpop.f32.mrb[0].mxu0
        %1689 = vmatprep.mubr.f32.mxu0 0.0
        %1690 = vmatmul.mubr.f32.gmra.mrb[0].mxu0 %v1507
        %v1691 = vpop.f32.mrb[0].mxu0
        %v1692 = vadd.f32 0.0, %v1691
        %v1693 = vpop.f32.mrb[0].mxu0
        %1694 = vmatprep.mubr.f32.mxu0 0.0
        %1695 = vmatmul.mubr.f32.gmra.mrb[0].mxu0 %v1510
        %v1696 = vpop.f32.mrb[0].mxu0
        %v1697 = vadd.f32 0.0, %v1696
        %v1698 = vpop.f32.mrb[0].mxu0
        %1699 = vmatprep.mubr.f32.mxu0 0.0
        %1700 = vmatmul.mubr.f32.gmra.mrb[0].mxu0 %v1513
        %v1701 = vpop.f32.mrb[0].mxu0
        %v1702 = vadd.f32 0.0, %v1701
        %v1703 = vpop.f32.mrb[0].mxu0
        %1704 = vmatprep.mubr.f32.mxu0 0.0
        %1705 = vmatmul.mubr.f32.gmra.mrb[0].mxu0 %v1516
        %v1706 = vpop.f32.mrb[0].mxu0
        %v1707 = vadd.f32 0.0, %v1706
        %v1708 = vpop.f32.mrb[0].mxu0
        %1709 = vmatprep.mubr.f32.mxu0 0.0
        %1710 = vmatmul.mubr.f32.gmra.mrb[0].mxu0 %v1519
        %v1711 = vpop.f32.mrb[0].mxu0
        %v1712 = vadd.f32 0.0, %v1711
        %v1713 = vpop.f32.mrb[0].mxu0
        %1714 = vmatprep.mubr.f32.mxu0 0.0
        %1715 = vmatmul.mubr.f32.gmra.mrb[0].mxu0 %v1522
        %v1716 = vpop.f32.mrb[0].mxu0
        %v1717 = vadd.f32 0.0, %v1716
        %v1718 = vpop.f32.mrb[0].mxu0
        %1719 = vmatprep.mubr.f32.mxu0 0.0
        %1720 = vmatmul.mubr.f32.gmra.mrb[0].mxu0 %v1525
        %v1721 = vpop.f32.mrb[0].mxu0
        %v1722 = vadd.f32 0.0, %v1721
        %v1723 = vpop.f32.mrb[0].mxu0
        %1724 = vmatprep.mubr.f32.mxu0 0.0
        %1725 = vmatmul.mubr.f32.gmra.mrb[0].mxu0 %v1528
        %v1726 = vpop.f32.mrb[0].mxu0
        %v1727 = vadd.f32 0.0, %v1726
        %v1728 = vpop.f32.mrb[0].mxu0
        %1729 = vmatprep.mubr.f32.mxu0 0.0
        %1730 = vmatmul.mubr.f32.gmra.mrb[0].mxu0 %v1531
        %v1731 = vpop.f32.mrb[0].mxu0
        %v1732 = vadd.f32 0.0, %v1731
        %v1733 = vpop.f32.mrb[0].mxu0
        %1734 = vmatprep.mubr.f32.mxu0 0.0
        %1735 = vmatmul.mubr.f32.gmra.mrb[0].mxu0 %v1534
        %v1736 = vpop.f32.mrb[0].mxu0
        %v1737 = vadd.f32 0.0, %v1736
        %v1738 = vpop.f32.mrb[0].mxu0
        %1739 = vmatprep.mubr.f32.mxu0 0.0
        %1740 = vmatmul.mubr.f32.gmra.mrb[0].mxu0 %v1537
        %v1741 = vpop.f32.mrb[0].mxu0
        %v1742 = vadd.f32 0.0, %v1741
        %v1743 = vpop.f32.mrb[0].mxu0
        %1744 = vmatprep.mubr.f32.mxu0 0.0
        %1745 = vmatmul.mubr.f32.gmra.mrb[0].mxu0 %v1540
        %v1746 = vpop.f32.mrb[0].mxu0
        %v1747 = vadd.f32 0.0, %v1746
        %v1748 = vpop.f32.mrb[0].mxu0
        %1749 = vmatprep.mubr.f32.mxu0 0.0
        %1750 = vmatmul.mubr.f32.gmra.mrb[0].mxu0 %v1543
        %v1751 = vpop.f32.mrb[0].mxu0
        %v1752 = vadd.f32 0.0, %v1751
        %v1753 = vpop.f32.mrb[0].mxu0
        %1754 = vmatprep.mubr.f32.mxu0 0.0
        %1755 = vmatmul.mubr.f32.gmra.mrb[0].mxu0 %v1546
        %v1756 = vpop.f32.mrb[0].mxu0
        %v1757 = vadd.f32 0.0, %v1756
        %v1758 = vpop.f32.mrb[0].mxu0
        %1759 = vmatprep.mubr.f32.mxu0 0.0
        %1760 = vmatmul.mubr.f32.gmra.mrb[0].mxu0 %v1549
        %v1761 = vpop.f32.mrb[0].mxu0
        %v1762 = vadd.f32 0.0, %v1761
        %v1763 = vpop.f32.mrb[0].mxu0
        %1764 = vmatprep.mubr.f32.mxu0 0.0
        %1765 = vmatmul.mubr.f32.gmra.mrb[0].mxu0 %v1552
        %v1766 = vpop.f32.mrb[0].mxu0
        %v1767 = vadd.f32 0.0, %v1766
        %v1768 = vpop.f32.mrb[0].mxu0
        %1769 = vmatprep.mubr.f32.mxu0 0.0
        %1770 = vmatmul.mubr.f32.gmra.mrb[0].mxu0 %v1555
        %v1771 = vpop.f32.mrb[0].mxu0
        %v1772 = vadd.f32 0.0, %v1771
        %v1773 = vpop.f32.mrb[0].mxu0
        %1774 = vmatprep.mubr.f32.mxu0 0.0
        %1775 = vmatmul.mubr.f32.gmra.mrb[0].mxu0 %v1558
        %v1776 = vpop.f32.mrb[0].mxu0
        %v1777 = vadd.f32 0.0, %v1776
        %v1778 = vpop.f32.mrb[0].mxu0
        %1779 = vmatprep.mubr.f32.mxu0 0.0
        %1780 = vmatmul.mubr.f32.gmra.mrb[0].mxu0 %v1561
        %v1781 = vpop.f32.mrb[0].mxu0
        %v1782 = vadd.f32 0.0, %v1781
        %v1783 = vpop.f32.mrb[0].mxu0
        %1784 = vmatprep.mubr.f32.mxu0 0.0
        %1785 = vmatmul.mubr.f32.gmra.mrb[0].mxu0 %v1564
        %v1786 = vpop.f32.mrb[0].mxu0
        %v1787 = vadd.f32 0.0, %v1786
        %v1788 = vpop.f32.mrb[0].mxu0
        %1789 = vmatprep.mubr.f32.mxu0 0.0
        %1790 = vmatmul.mubr.f32.gmra.mrb[0].mxu0 %v1567
        %v1791 = vpop.f32.mrb[0].mxu0
        %v1792 = vadd.f32 0.0, %v1791
        %v1793 = vpop.f32.mrb[0].mxu0
        %1794 = vmatprep.mubr.f32.mxu0 0.0
        %1795 = vmatmul.mubr.f32.gmra.mrb[0].mxu0 %v1570
        %v1796 = vpop.f32.mrb[0].mxu0
        %v1797 = vadd.f32 0.0, %v1796
        %v1798 = vpop.f32.mrb[0].mxu0
        %1799 = vdwg.mxu0
        %v1800 = vld [vmem:[#allocation2] sm:$0xff]
        %v1801 = vld [vmem:[#allocation2 + $0x8] sm:$0xff]
        %v1802 = vld [vmem:[#allocation2 + $0x10] sm:$0xff]
        %v1803 = vld [vmem:[#allocation2 + $0x18] sm:$0xff]
        %v1804 = vld [vmem:[#allocation2 + $0x20] sm:$0xff]
        %v1805 = vld [vmem:[#allocation2 + $0x28] sm:$0xff]
        %v1806 = vld [vmem:[#allocation2 + $0x30] sm:$0xff]
        %v1807 = vld [vmem:[#allocation2 + $0x38] sm:$0xff]
        %v1808 = vld [vmem:[#allocation2 + $0x40] sm:$0xff]
        %v1809 = vld [vmem:[#allocation2 + $0x48] sm:$0xff]
        %v1810 = vld [vmem:[#allocation2 + $0x50] sm:$0xff]
        %v1811 = vld [vmem:[#allocation2 + $0x58] sm:$0xff]
        %v1812 = vld [vmem:[#allocation2 + $0x60] sm:$0xff]
        %v1813 = vld [vmem:[#allocation2 + $0x68] sm:$0xff]
        %v1814 = vld [vmem:[#allocation2 + $0x70] sm:$0xff]
        %v1815 = vld [vmem:[#allocation2 + $0x78] sm:$0xff]
        %v1816 = vld [vmem:[#allocation2 + $0x80] sm:$0xff]
        %v1817 = vld [vmem:[#allocation2 + $0x88] sm:$0xff]
        %v1818 = vld [vmem:[#allocation2 + $0x90] sm:$0xff]
        %v1819 = vld [vmem:[#allocation2 + $0x98] sm:$0xff]
        %v1820 = vld [vmem:[#allocation2 + $0xa0] sm:$0xff]
        %v1821 = vld [vmem:[#allocation2 + $0xa8] sm:$0xff]
        %v1822 = vld [vmem:[#allocation2 + $0xb0] sm:$0xff]
        %v1823 = vld [vmem:[#allocation2 + $0xb8] sm:$0xff]
        %v1824 = vld [vmem:[#allocation2 + $0xc0] sm:$0xff]
        %v1825 = vld [vmem:[#allocation2 + $0xc8] sm:$0xff]
        %v1826 = vld [vmem:[#allocation2 + $0xd0] sm:$0xff]
        %v1827 = vld [vmem:[#allocation2 + $0xd8] sm:$0xff]
        %v1828 = vld [vmem:[#allocation2 + $0xe0] sm:$0xff]
        %v1829 = vld [vmem:[#allocation2 + $0xe8] sm:$0xff]
        %v1830 = vld [vmem:[#allocation2 + $0xf0] sm:$0xff]
        %v1831 = vld [vmem:[#allocation2 + $0xf8] sm:$0xff]
        %v1832 = vadd.f32 %v1800, %v1642
        %v1833 = vadd.f32 %v1801, %v1647
        %v1834 = vadd.f32 %v1802, %v1652
        %v1835 = vadd.f32 %v1803, %v1657
        %v1836 = vadd.f32 %v1804, %v1662
        %v1837 = vadd.f32 %v1805, %v1667
        %v1838 = vadd.f32 %v1806, %v1672
        %v1839 = vadd.f32 %v1807, %v1677
        %v1840 = vadd.f32 %v1808, %v1682
        %v1841 = vadd.f32 %v1809, %v1687
        %v1842 = vadd.f32 %v1810, %v1692
        %v1843 = vadd.f32 %v1811, %v1697
        %v1844 = vadd.f32 %v1812, %v1702
        %v1845 = vadd.f32 %v1813, %v1707
        %v1846 = vadd.f32 %v1814, %v1712
        %v1847 = vadd.f32 %v1815, %v1717
        %v1848 = vadd.f32 %v1816, %v1722
        %v1849 = vadd.f32 %v1817, %v1727
        %v1850 = vadd.f32 %v1818, %v1732
        %v1851 = vadd.f32 %v1819, %v1737
        %v1852 = vadd.f32 %v1820, %v1742
        %v1853 = vadd.f32 %v1821, %v1747
        %v1854 = vadd.f32 %v1822, %v1752
        %v1855 = vadd.f32 %v1823, %v1757
        %v1856 = vadd.f32 %v1824, %v1762
        %v1857 = vadd.f32 %v1825, %v1767
        %v1858 = vadd.f32 %v1826, %v1772
        %v1859 = vadd.f32 %v1827, %v1777
        %v1860 = vadd.f32 %v1828, %v1782
        %v1861 = vadd.f32 %v1829, %v1787
        %v1862 = vadd.f32 %v1830, %v1792
        %v1863 = vadd.f32 %v1831, %v1797
        %1864 = vst [vmem:[#allocation2] sm:$0xff] %v1832
        %1865 = vst [vmem:[#allocation2 + $0x8] sm:$0xff] %v1833
        %1866 = vst [vmem:[#allocation2 + $0x10] sm:$0xff] %v1834
        %1867 = vst [vmem:[#allocation2 + $0x18] sm:$0xff] %v1835
        %1868 = vst [vmem:[#allocation2 + $0x20] sm:$0xff] %v1836
        %1869 = vst [vmem:[#allocation2 + $0x28] sm:$0xff] %v1837
        %1870 = vst [vmem:[#allocation2 + $0x30] sm:$0xff] %v1838
        %1871 = vst [vmem:[#allocation2 + $0x38] sm:$0xff] %v1839
        %1872 = vst [vmem:[#allocation2 + $0x40] sm:$0xff] %v1840
        %1873 = vst [vmem:[#allocation2 + $0x48] sm:$0xff] %v1841
        %1874 = vst [vmem:[#allocation2 + $0x50] sm:$0xff] %v1842
        %1875 = vst [vmem:[#allocation2 + $0x58] sm:$0xff] %v1843
        %1876 = vst [vmem:[#allocation2 + $0x60] sm:$0xff] %v1844
        %1877 = vst [vmem:[#allocation2 + $0x68] sm:$0xff] %v1845
        %1878 = vst [vmem:[#allocation2 + $0x70] sm:$0xff] %v1846
        %1879 = vst [vmem:[#allocation2 + $0x78] sm:$0xff] %v1847
        %1880 = vst [vmem:[#allocation2 + $0x80] sm:$0xff] %v1848
        %1881 = vst [vmem:[#allocation2 + $0x88] sm:$0xff] %v1849
        %1882 = vst [vmem:[#allocation2 + $0x90] sm:$0xff] %v1850
        %1883 = vst [vmem:[#allocation2 + $0x98] sm:$0xff] %v1851
        %1884 = vst [vmem:[#allocation2 + $0xa0] sm:$0xff] %v1852
        %1885 = vst [vmem:[#allocation2 + $0xa8] sm:$0xff] %v1853
        %1886 = vst [vmem:[#allocation2 + $0xb0] sm:$0xff] %v1854
        %1887 = vst [vmem:[#allocation2 + $0xb8] sm:$0xff] %v1855
        %1888 = vst [vmem:[#allocation2 + $0xc0] sm:$0xff] %v1856
        %1889 = vst [vmem:[#allocation2 + $0xc8] sm:$0xff] %v1857
        %1890 = vst [vmem:[#allocation2 + $0xd0] sm:$0xff] %v1858
        %1891 = vst [vmem:[#allocation2 + $0xd8] sm:$0xff] %v1859
        %1892 = vst [vmem:[#allocation2 + $0xe0] sm:$0xff] %v1860
        %1893 = vst [vmem:[#allocation2 + $0xe8] sm:$0xff] %v1861
        %1894 = vst [vmem:[#allocation2 + $0xf0] sm:$0xff] %v1862
        %1895 = vst [vmem:[#allocation2 + $0xf8] sm:$0xff] %v1863
        %v1896 = vld [vmem:[%s1441 + $0x1] sm:$0xff]
        %v1897 = vld [vmem:[%s1441 + $0x9] sm:$0xff]
        %v1898 = vld [vmem:[%s1441 + $0x19] sm:$0xff]
        %v1899 = vld [vmem:[%s1441 + $0x21] sm:$0xff]
        %v1900 = vld [vmem:[%s1441 + $0x31] sm:$0xff]
        %v1901 = vld [vmem:[%s1441 + $0x39] sm:$0xff]
        %v1902 = vld [vmem:[%s1441 + $0x49] sm:$0xff]
        %v1903 = vld [vmem:[%s1441 + $0x51] sm:$0xff]
        %v1904 = vld [vmem:[%s1441 + $0x61] sm:$0xff]
        %v1905 = vld [vmem:[%s1441 + $0x69] sm:$0xff]
        %v1906 = vld [vmem:[%s1441 + $0x79] sm:$0xff]
        %v1907 = vld [vmem:[%s1441 + $0x81] sm:$0xff]
        %v1908 = vld [vmem:[%s1441 + $0x91] sm:$0xff]
        %v1909 = vld [vmem:[%s1441 + $0x99] sm:$0xff]
        %v1910 = vld [vmem:[%s1441 + $0xa9] sm:$0xff]
        %v1911 = vld [vmem:[%s1441 + $0xb1] sm:$0xff]
        %v1912 = vld [vmem:[%s1441 + $0xc1] sm:$0xff]
        %v1913 = vld [vmem:[%s1441 + $0xc9] sm:$0xff]
        %v1914 = vld [vmem:[%s1441 + $0xd9] sm:$0xff]
        %v1915 = vld [vmem:[%s1441 + $0xe1] sm:$0xff]
        %v1916 = vld [vmem:[%s1441 + $0xf1] sm:$0xff]
        %v1917 = vld [vmem:[%s1441 + $0xf9] sm:$0xff]
        %v1918 = vld [vmem:[%s1441 + $0x109] sm:$0xff]
        %v1919 = vld [vmem:[%s1441 + $0x111] sm:$0xff]
        %v1920 = vld [vmem:[%s1441 + $0x121] sm:$0xff]
        %v1921 = vld [vmem:[%s1441 + $0x129] sm:$0xff]
        %v1922 = vld [vmem:[%s1441 + $0x139] sm:$0xff]
        %v1923 = vld [vmem:[%s1441 + $0x141] sm:$0xff]
        %v1924 = vld [vmem:[%s1441 + $0x151] sm:$0xff]
        %v1925 = vld [vmem:[%s1441 + $0x159] sm:$0xff]
        %v1926 = vld [vmem:[%s1441 + $0x169] sm:$0xff]
        %v1927 = vld [vmem:[%s1441 + $0x171] sm:$0xff]
        %s1928 = scalar_lea.vmem %s1, 16
        %v1929 = vld [vmem:[%s1928] sm:$0xf]
        %v1931 = vsel %vm175, %v1896, 0
        %v1934 = vsel %vm175, %v1897, 0
        %v1937 = vsel %vm175, %v1898, 0
        %v1940 = vsel %vm175, %v1899, 0
        %v1943 = vsel %vm175, %v1900, 0
        %v1946 = vsel %vm175, %v1901, 0
        %v1949 = vsel %vm175, %v1902, 0
        %v1952 = vsel %vm175, %v1903, 0
        %v1955 = vsel %vm175, %v1904, 0
        %v1958 = vsel %vm175, %v1905, 0
        %v1961 = vsel %vm175, %v1906, 0
        %v1964 = vsel %vm175, %v1907, 0
        %v1967 = vsel %vm175, %v1908, 0
        %v1970 = vsel %vm175, %v1909, 0
        %v1973 = vsel %vm175, %v1910, 0
        %v1976 = vsel %vm175, %v1911, 0
        %v1979 = vsel %vm175, %v1912, 0
        %v1982 = vsel %vm175, %v1913, 0
        %v1985 = vsel %vm175, %v1914, 0
        %v1988 = vsel %vm175, %v1915, 0
        %v1991 = vsel %vm175, %v1916, 0
        %v1994 = vsel %vm175, %v1917, 0
        %v1997 = vsel %vm175, %v1918, 0
        %v2000 = vsel %vm175, %v1919, 0
        %v2003 = vsel %vm175, %v1920, 0
        %v2006 = vsel %vm175, %v1921, 0
        %v2009 = vsel %vm175, %v1922, 0
        %v2012 = vsel %vm175, %v1923, 0
        %v2015 = vsel %vm175, %v1924, 0
        %v2018 = vsel %vm175, %v1925, 0
        %v2021 = vsel %vm175, %v1926, 0
        %v2024 = vsel %vm175, %v1927, 0
        %v2027 = vsel %vm272, %v1929, 0
        %2029 = vmatprep.subr.mxu0 0.0
        %2030 = vmatpush1.msra.mxu0 %v2027
        %2031 = vmatprep.subr.mxu0 0.0
        %2032 = vmatpush1.msra.mxu0 0.0
        %2033 = vmatprep.subr.mxu0 0.0
        %2034 = vmatpush1.msra.mxu0 0.0
        %2035 = vmatprep.subr.mxu0 0.0
        %2036 = vmatpush1.msra.mxu0 0.0
        %2037 = vmatprep.subr.mxu0 0.0
        %2038 = vmatpush1.msra.mxu0 0.0
        %2039 = vmatprep.subr.mxu0 0.0
        %2040 = vmatpush1.msra.mxu0 0.0
        %2041 = vmatprep.subr.mxu0 0.0
        %2042 = vmatpush1.msra.mxu0 0.0
        %2043 = vmatprep.subr.mxu0 0.0
        %2044 = vmatpush1.msra.mxu0 0.0
        %2045 = vmatprep.subr.mxu0 0.0
        %2046 = vmatpush1.msra.mxu0 0.0
        %2047 = vmatprep.subr.mxu0 0.0
        %2048 = vmatpush1.msra.mxu0 0.0
        %2049 = vmatprep.subr.mxu0 0.0
        %2050 = vmatpush1.msra.mxu0 0.0
        %2051 = vmatprep.subr.mxu0 0.0
        %2052 = vmatpush1.msra.mxu0 0.0
        %2053 = vmatprep.subr.mxu0 0.0
        %2054 = vmatpush1.msra.mxu0 0.0
        %2055 = vmatprep.subr.mxu0 0.0
        %2056 = vmatpush1.msra.mxu0 0.0
        %2057 = vmatprep.subr.mxu0 0.0
        %2058 = vmatpush1.msra.mxu0 0.0
        %2059 = vmatprep.subr.mxu0 0.0
        %2060 = vmatpush1.msra.mxu0 0.0
        %2061 = vmatprep.subr.mxu0 0.0
        %2062 = vmatpush1.msra.mxu0 0.0
        %2063 = vmatprep.subr.mxu0 0.0
        %2064 = vmatpush1.msra.mxu0 0.0
        %2065 = vmatprep.subr.mxu0 0.0
        %2066 = vmatpush1.msra.mxu0 0.0
        %2067 = vmatprep.subr.mxu0 0.0
        %2068 = vmatpush1.msra.mxu0 0.0
        %2069 = vmatprep.subr.mxu0 0.0
        %2070 = vmatpush1.msra.mxu0 0.0
        %2071 = vmatprep.subr.mxu0 0.0
        %2072 = vmatpush1.msra.mxu0 0.0
        %2073 = vmatprep.subr.mxu0 0.0
        %2074 = vmatpush1.msra.mxu0 0.0
        %2075 = vmatprep.subr.mxu0 0.0
        %2076 = vmatpush1.msra.mxu0 0.0
        %2077 = vmatprep.subr.mxu0 0.0
        %2078 = vmatpush1.msra.mxu0 0.0
        %2079 = vmatprep.subr.mxu0 0.0
        %2080 = vmatpush1.msra.mxu0 0.0
        %2081 = vmatprep.subr.mxu0 0.0
        %2082 = vmatpush1.msra.mxu0 0.0
        %2083 = vmatprep.subr.mxu0 0.0
        %2084 = vmatpush1.msra.mxu0 0.0
        %2085 = vmatprep.subr.mxu0 0.0
        %2086 = vmatpush1.msra.mxu0 0.0
        %2087 = vmatprep.subr.mxu0 0.0
        %2088 = vmatpush1.msra.mxu0 0.0
        %2089 = vmatprep.subr.mxu0 0.0
        %2090 = vmatpush1.msra.mxu0 0.0
        %2091 = vmatprep.subr.mxu0 0.0
        %2092 = vmatpush1.msra.mxu0 0.0
        %2093 = vmatprep.mubr.f32.mxu0 0.0
        %2094 = vmatmul.mubr.f32.gmra.mrb[0].mxu0 %v1931
        %v2095 = vpop.f32.mrb[0].mxu0
        %v2096 = vadd.f32 0.0, %v2095
        %v2097 = vpop.f32.mrb[0].mxu0
        %2098 = vmatprep.mubr.f32.mxu0 0.0
        %2099 = vmatmul.mubr.f32.gmra.mrb[0].mxu0 %v1934
        %v2100 = vpop.f32.mrb[0].mxu0
        %v2101 = vadd.f32 0.0, %v2100
        %v2102 = vpop.f32.mrb[0].mxu0
        %2103 = vmatprep.mubr.f32.mxu0 0.0
        %2104 = vmatmul.mubr.f32.gmra.mrb[0].mxu0 %v1937
        %v2105 = vpop.f32.mrb[0].mxu0
        %v2106 = vadd.f32 0.0, %v2105
        %v2107 = vpop.f32.mrb[0].mxu0
        %2108 = vmatprep.mubr.f32.mxu0 0.0
        %2109 = vmatmul.mubr.f32.gmra.mrb[0].mxu0 %v1940
        %v2110 = vpop.f32.mrb[0].mxu0
        %v2111 = vadd.f32 0.0, %v2110
        %v2112 = vpop.f32.mrb[0].mxu0
        %2113 = vmatprep.mubr.f32.mxu0 0.0
        %2114 = vmatmul.mubr.f32.gmra.mrb[0].mxu0 %v1943
        %v2115 = vpop.f32.mrb[0].mxu0
        %v2116 = vadd.f32 0.0, %v2115
        %v2117 = vpop.f32.mrb[0].mxu0
        %2118 = vmatprep.mubr.f32.mxu0 0.0
        %2119 = vmatmul.mubr.f32.gmra.mrb[0].mxu0 %v1946
        %v2120 = vpop.f32.mrb[0].mxu0
        %v2121 = vadd.f32 0.0, %v2120
        %v2122 = vpop.f32.mrb[0].mxu0
        %2123 = vmatprep.mubr.f32.mxu0 0.0
        %2124 = vmatmul.mubr.f32.gmra.mrb[0].mxu0 %v1949
        %v2125 = vpop.f32.mrb[0].mxu0
        %v2126 = vadd.f32 0.0, %v2125
        %v2127 = vpop.f32.mrb[0].mxu0
        %2128 = vmatprep.mubr.f32.mxu0 0.0
        %2129 = vmatmul.mubr.f32.gmra.mrb[0].mxu0 %v1952
        %v2130 = vpop.f32.mrb[0].mxu0
        %v2131 = vadd.f32 0.0, %v2130
        %v2132 = vpop.f32.mrb[0].mxu0
        %2133 = vmatprep.mubr.f32.mxu0 0.0
        %2134 = vmatmul.mubr.f32.gmra.mrb[0].mxu0 %v1955
        %v2135 = vpop.f32.mrb[0].mxu0
        %v2136 = vadd.f32 0.0, %v2135
        %v2137 = vpop.f32.mrb[0].mxu0
        %2138 = vmatprep.mubr.f32.mxu0 0.0
        %2139 = vmatmul.mubr.f32.gmra.mrb[0].mxu0 %v1958
        %v2140 = vpop.f32.mrb[0].mxu0
        %v2141 = vadd.f32 0.0, %v2140
        %v2142 = vpop.f32.mrb[0].mxu0
        %2143 = vmatprep.mubr.f32.mxu0 0.0
        %2144 = vmatmul.mubr.f32.gmra.mrb[0].mxu0 %v1961
        %v2145 = vpop.f32.mrb[0].mxu0
        %v2146 = vadd.f32 0.0, %v2145
        %v2147 = vpop.f32.mrb[0].mxu0
        %2148 = vmatprep.mubr.f32.mxu0 0.0
        %2149 = vmatmul.mubr.f32.gmra.mrb[0].mxu0 %v1964
        %v2150 = vpop.f32.mrb[0].mxu0
        %v2151 = vadd.f32 0.0, %v2150
        %v2152 = vpop.f32.mrb[0].mxu0
        %2153 = vmatprep.mubr.f32.mxu0 0.0
        %2154 = vmatmul.mubr.f32.gmra.mrb[0].mxu0 %v1967
        %v2155 = vpop.f32.mrb[0].mxu0
        %v2156 = vadd.f32 0.0, %v2155
        %v2157 = vpop.f32.mrb[0].mxu0
        %2158 = vmatprep.mubr.f32.mxu0 0.0
        %2159 = vmatmul.mubr.f32.gmra.mrb[0].mxu0 %v1970
        %v2160 = vpop.f32.mrb[0].mxu0
        %v2161 = vadd.f32 0.0, %v2160
        %v2162 = vpop.f32.mrb[0].mxu0
        %2163 = vmatprep.mubr.f32.mxu0 0.0
        %2164 = vmatmul.mubr.f32.gmra.mrb[0].mxu0 %v1973
        %v2165 = vpop.f32.mrb[0].mxu0
        %v2166 = vadd.f32 0.0, %v2165
        %v2167 = vpop.f32.mrb[0].mxu0
        %2168 = vmatprep.mubr.f32.mxu0 0.0
        %2169 = vmatmul.mubr.f32.gmra.mrb[0].mxu0 %v1976
        %v2170 = vpop.f32.mrb[0].mxu0
        %v2171 = vadd.f32 0.0, %v2170
        %v2172 = vpop.f32.mrb[0].mxu0
        %2173 = vmatprep.mubr.f32.mxu0 0.0
        %2174 = vmatmul.mubr.f32.gmra.mrb[0].mxu0 %v1979
        %v2175 = vpop.f32.mrb[0].mxu0
        %v2176 = vadd.f32 0.0, %v2175
        %v2177 = vpop.f32.mrb[0].mxu0
        %2178 = vmatprep.mubr.f32.mxu0 0.0
        %2179 = vmatmul.mubr.f32.gmra.mrb[0].mxu0 %v1982
        %v2180 = vpop.f32.mrb[0].mxu0
        %v2181 = vadd.f32 0.0, %v2180
        %v2182 = vpop.f32.mrb[0].mxu0
        %2183 = vmatprep.mubr.f32.mxu0 0.0
        %2184 = vmatmul.mubr.f32.gmra.mrb[0].mxu0 %v1985
        %v2185 = vpop.f32.mrb[0].mxu0
        %v2186 = vadd.f32 0.0, %v2185
        %v2187 = vpop.f32.mrb[0].mxu0
        %2188 = vmatprep.mubr.f32.mxu0 0.0
        %2189 = vmatmul.mubr.f32.gmra.mrb[0].mxu0 %v1988
        %v2190 = vpop.f32.mrb[0].mxu0
        %v2191 = vadd.f32 0.0, %v2190
        %v2192 = vpop.f32.mrb[0].mxu0
        %2193 = vmatprep.mubr.f32.mxu0 0.0
        %2194 = vmatmul.mubr.f32.gmra.mrb[0].mxu0 %v1991
        %v2195 = vpop.f32.mrb[0].mxu0
        %v2196 = vadd.f32 0.0, %v2195
        %v2197 = vpop.f32.mrb[0].mxu0
        %2198 = vmatprep.mubr.f32.mxu0 0.0
        %2199 = vmatmul.mubr.f32.gmra.mrb[0].mxu0 %v1994
        %v2200 = vpop.f32.mrb[0].mxu0
        %v2201 = vadd.f32 0.0, %v2200
        %v2202 = vpop.f32.mrb[0].mxu0
        %2203 = vmatprep.mubr.f32.mxu0 0.0
        %2204 = vmatmul.mubr.f32.gmra.mrb[0].mxu0 %v1997
        %v2205 = vpop.f32.mrb[0].mxu0
        %v2206 = vadd.f32 0.0, %v2205
        %v2207 = vpop.f32.mrb[0].mxu0
        %2208 = vmatprep.mubr.f32.mxu0 0.0
        %2209 = vmatmul.mubr.f32.gmra.mrb[0].mxu0 %v2000
        %v2210 = vpop.f32.mrb[0].mxu0
        %v2211 = vadd.f32 0.0, %v2210
        %v2212 = vpop.f32.mrb[0].mxu0
        %2213 = vmatprep.mubr.f32.mxu0 0.0
        %2214 = vmatmul.mubr.f32.gmra.mrb[0].mxu0 %v2003
        %v2215 = vpop.f32.mrb[0].mxu0
        %v2216 = vadd.f32 0.0, %v2215
        %v2217 = vpop.f32.mrb[0].mxu0
        %2218 = vmatprep.mubr.f32.mxu0 0.0
        %2219 = vmatmul.mubr.f32.gmra.mrb[0].mxu0 %v2006
        %v2220 = vpop.f32.mrb[0].mxu0
        %v2221 = vadd.f32 0.0, %v2220
        %v2222 = vpop.f32.mrb[0].mxu0
        %2223 = vmatprep.mubr.f32.mxu0 0.0
        %2224 = vmatmul.mubr.f32.gmra.mrb[0].mxu0 %v2009
        %v2225 = vpop.f32.mrb[0].mxu0
        %v2226 = vadd.f32 0.0, %v2225
        %v2227 = vpop.f32.mrb[0].mxu0
        %2228 = vmatprep.mubr.f32.mxu0 0.0
        %2229 = vmatmul.mubr.f32.gmra.mrb[0].mxu0 %v2012
        %v2230 = vpop.f32.mrb[0].mxu0
        %v2231 = vadd.f32 0.0, %v2230
        %v2232 = vpop.f32.mrb[0].mxu0
        %2233 = vmatprep.mubr.f32.mxu0 0.0
        %2234 = vmatmul.mubr.f32.gmra.mrb[0].mxu0 %v2015
        %v2235 = vpop.f32.mrb[0].mxu0
        %v2236 = vadd.f32 0.0, %v2235
        %v2237 = vpop.f32.mrb[0].mxu0
        %2238 = vmatprep.mubr.f32.mxu0 0.0
        %2239 = vmatmul.mubr.f32.gmra.mrb[0].mxu0 %v2018
        %v2240 = vpop.f32.mrb[0].mxu0
        %v2241 = vadd.f32 0.0, %v2240
        %v2242 = vpop.f32.mrb[0].mxu0
        %2243 = vmatprep.mubr.f32.mxu0 0.0
        %2244 = vmatmul.mubr.f32.gmra.mrb[0].mxu0 %v2021
        %v2245 = vpop.f32.mrb[0].mxu0
        %v2246 = vadd.f32 0.0, %v2245
        %v2247 = vpop.f32.mrb[0].mxu0
        %2248 = vmatprep.mubr.f32.mxu0 0.0
        %2249 = vmatmul.mubr.f32.gmra.mrb[0].mxu0 %v2024
        %v2250 = vpop.f32.mrb[0].mxu0
        %v2251 = vadd.f32 0.0, %v2250
        %v2252 = vpop.f32.mrb[0].mxu0
        %2253 = vdwg.mxu0
        %v2254 = vld [vmem:[#allocation2] sm:$0xff]
        %v2255 = vld [vmem:[#allocation2 + $0x8] sm:$0xff]
        %v2256 = vld [vmem:[#allocation2 + $0x10] sm:$0xff]
        %v2257 = vld [vmem:[#allocation2 + $0x18] sm:$0xff]
        %v2258 = vld [vmem:[#allocation2 + $0x20] sm:$0xff]
        %v2259 = vld [vmem:[#allocation2 + $0x28] sm:$0xff]
        %v2260 = vld [vmem:[#allocation2 + $0x30] sm:$0xff]
        %v2261 = vld [vmem:[#allocation2 + $0x38] sm:$0xff]
        %v2262 = vld [vmem:[#allocation2 + $0x40] sm:$0xff]
        %v2263 = vld [vmem:[#allocation2 + $0x48] sm:$0xff]
        %v2264 = vld [vmem:[#allocation2 + $0x50] sm:$0xff]
        %v2265 = vld [vmem:[#allocation2 + $0x58] sm:$0xff]
        %v2266 = vld [vmem:[#allocation2 + $0x60] sm:$0xff]
        %v2267 = vld [vmem:[#allocation2 + $0x68] sm:$0xff]
        %v2268 = vld [vmem:[#allocation2 + $0x70] sm:$0xff]
        %v2269 = vld [vmem:[#allocation2 + $0x78] sm:$0xff]
        %v2270 = vld [vmem:[#allocation2 + $0x80] sm:$0xff]
        %v2271 = vld [vmem:[#allocation2 + $0x88] sm:$0xff]
        %v2272 = vld [vmem:[#allocation2 + $0x90] sm:$0xff]
        %v2273 = vld [vmem:[#allocation2 + $0x98] sm:$0xff]
        %v2274 = vld [vmem:[#allocation2 + $0xa0] sm:$0xff]
        %v2275 = vld [vmem:[#allocation2 + $0xa8] sm:$0xff]
        %v2276 = vld [vmem:[#allocation2 + $0xb0] sm:$0xff]
        %v2277 = vld [vmem:[#allocation2 + $0xb8] sm:$0xff]
        %v2278 = vld [vmem:[#allocation2 + $0xc0] sm:$0xff]
        %v2279 = vld [vmem:[#allocation2 + $0xc8] sm:$0xff]
        %v2280 = vld [vmem:[#allocation2 + $0xd0] sm:$0xff]
        %v2281 = vld [vmem:[#allocation2 + $0xd8] sm:$0xff]
        %v2282 = vld [vmem:[#allocation2 + $0xe0] sm:$0xff]
        %v2283 = vld [vmem:[#allocation2 + $0xe8] sm:$0xff]
        %v2284 = vld [vmem:[#allocation2 + $0xf0] sm:$0xff]
        %v2285 = vld [vmem:[#allocation2 + $0xf8] sm:$0xff]
        %v2286 = vadd.f32 %v2254, %v2096
        %v2287 = vadd.f32 %v2255, %v2101
        %v2288 = vadd.f32 %v2256, %v2106
        %v2289 = vadd.f32 %v2257, %v2111
        %v2290 = vadd.f32 %v2258, %v2116
        %v2291 = vadd.f32 %v2259, %v2121
        %v2292 = vadd.f32 %v2260, %v2126
        %v2293 = vadd.f32 %v2261, %v2131
        %v2294 = vadd.f32 %v2262, %v2136
        %v2295 = vadd.f32 %v2263, %v2141
        %v2296 = vadd.f32 %v2264, %v2146
        %v2297 = vadd.f32 %v2265, %v2151
        %v2298 = vadd.f32 %v2266, %v2156
        %v2299 = vadd.f32 %v2267, %v2161
        %v2300 = vadd.f32 %v2268, %v2166
        %v2301 = vadd.f32 %v2269, %v2171
        %v2302 = vadd.f32 %v2270, %v2176
        %v2303 = vadd.f32 %v2271, %v2181
        %v2304 = vadd.f32 %v2272, %v2186
        %v2305 = vadd.f32 %v2273, %v2191
        %v2306 = vadd.f32 %v2274, %v2196
        %v2307 = vadd.f32 %v2275, %v2201
        %v2308 = vadd.f32 %v2276, %v2206
        %v2309 = vadd.f32 %v2277, %v2211
        %v2310 = vadd.f32 %v2278, %v2216
        %v2311 = vadd.f32 %v2279, %v2221
        %v2312 = vadd.f32 %v2280, %v2226
        %v2313 = vadd.f32 %v2281, %v2231
        %v2314 = vadd.f32 %v2282, %v2236
        %v2315 = vadd.f32 %v2283, %v2241
        %v2316 = vadd.f32 %v2284, %v2246
        %v2317 = vadd.f32 %v2285, %v2251
        %2318 = vst [vmem:[#allocation2] sm:$0xff] %v2286
        %2319 = vst [vmem:[#allocation2 + $0x8] sm:$0xff] %v2287
        %2320 = vst [vmem:[#allocation2 + $0x10] sm:$0xff] %v2288
        %2321 = vst [vmem:[#allocation2 + $0x18] sm:$0xff] %v2289
        %2322 = vst [vmem:[#allocation2 + $0x20] sm:$0xff] %v2290
        %2323 = vst [vmem:[#allocation2 + $0x28] sm:$0xff] %v2291
        %2324 = vst [vmem:[#allocation2 + $0x30] sm:$0xff] %v2292
        %2325 = vst [vmem:[#allocation2 + $0x38] sm:$0xff] %v2293
        %2326 = vst [vmem:[#allocation2 + $0x40] sm:$0xff] %v2294
        %2327 = vst [vmem:[#allocation2 + $0x48] sm:$0xff] %v2295
        %2328 = vst [vmem:[#allocation2 + $0x50] sm:$0xff] %v2296
        %2329 = vst [vmem:[#allocation2 + $0x58] sm:$0xff] %v2297
        %2330 = vst [vmem:[#allocation2 + $0x60] sm:$0xff] %v2298
        %2331 = vst [vmem:[#allocation2 + $0x68] sm:$0xff] %v2299
        %2332 = vst [vmem:[#allocation2 + $0x70] sm:$0xff] %v2300
        %2333 = vst [vmem:[#allocation2 + $0x78] sm:$0xff] %v2301
        %2334 = vst [vmem:[#allocation2 + $0x80] sm:$0xff] %v2302
        %2335 = vst [vmem:[#allocation2 + $0x88] sm:$0xff] %v2303
        %2336 = vst [vmem:[#allocation2 + $0x90] sm:$0xff] %v2304
        %2337 = vst [vmem:[#allocation2 + $0x98] sm:$0xff] %v2305
        %2338 = vst [vmem:[#allocation2 + $0xa0] sm:$0xff] %v2306
        %2339 = vst [vmem:[#allocation2 + $0xa8] sm:$0xff] %v2307
        %2340 = vst [vmem:[#allocation2 + $0xb0] sm:$0xff] %v2308
        %2341 = vst [vmem:[#allocation2 + $0xb8] sm:$0xff] %v2309
        %2342 = vst [vmem:[#allocation2 + $0xc0] sm:$0xff] %v2310
        %2343 = vst [vmem:[#allocation2 + $0xc8] sm:$0xff] %v2311
        %2344 = vst [vmem:[#allocation2 + $0xd0] sm:$0xff] %v2312
        %2345 = vst [vmem:[#allocation2 + $0xd8] sm:$0xff] %v2313
        %2346 = vst [vmem:[#allocation2 + $0xe0] sm:$0xff] %v2314
        %2347 = vst [vmem:[#allocation2 + $0xe8] sm:$0xff] %v2315
        %2348 = vst [vmem:[#allocation2 + $0xf0] sm:$0xff] %v2316
        %2349 = vst [vmem:[#allocation2 + $0xf8] sm:$0xff] %v2317
        %v2350 = vld [vmem:[%s1441 + $0x2] sm:$0xff]
        %v2351 = vld [vmem:[%s1441 + $0xa] sm:$0xff]
        %v2352 = vld [vmem:[%s1441 + $0x1a] sm:$0xff]
        %v2353 = vld [vmem:[%s1441 + $0x22] sm:$0xff]
        %v2354 = vld [vmem:[%s1441 + $0x32] sm:$0xff]
        %v2355 = vld [vmem:[%s1441 + $0x3a] sm:$0xff]
        %v2356 = vld [vmem:[%s1441 + $0x4a] sm:$0xff]
        %v2357 = vld [vmem:[%s1441 + $0x52] sm:$0xff]
        %v2358 = vld [vmem:[%s1441 + $0x62] sm:$0xff]
        %v2359 = vld [vmem:[%s1441 + $0x6a] sm:$0xff]
        %v2360 = vld [vmem:[%s1441 + $0x7a] sm:$0xff]
        %v2361 = vld [vmem:[%s1441 + $0x82] sm:$0xff]
        %v2362 = vld [vmem:[%s1441 + $0x92] sm:$0xff]
        %v2363 = vld [vmem:[%s1441 + $0x9a] sm:$0xff]
        %v2364 = vld [vmem:[%s1441 + $0xaa] sm:$0xff]
        %v2365 = vld [vmem:[%s1441 + $0xb2] sm:$0xff]
        %v2366 = vld [vmem:[%s1441 + $0xc2] sm:$0xff]
        %v2367 = vld [vmem:[%s1441 + $0xca] sm:$0xff]
        %v2368 = vld [vmem:[%s1441 + $0xda] sm:$0xff]
        %v2369 = vld [vmem:[%s1441 + $0xe2] sm:$0xff]
        %v2370 = vld [vmem:[%s1441 + $0xf2] sm:$0xff]
        %v2371 = vld [vmem:[%s1441 + $0xfa] sm:$0xff]
        %v2372 = vld [vmem:[%s1441 + $0x10a] sm:$0xff]
        %v2373 = vld [vmem:[%s1441 + $0x112] sm:$0xff]
        %v2374 = vld [vmem:[%s1441 + $0x122] sm:$0xff]
        %v2375 = vld [vmem:[%s1441 + $0x12a] sm:$0xff]
        %v2376 = vld [vmem:[%s1441 + $0x13a] sm:$0xff]
        %v2377 = vld [vmem:[%s1441 + $0x142] sm:$0xff]
        %v2378 = vld [vmem:[%s1441 + $0x152] sm:$0xff]
        %v2379 = vld [vmem:[%s1441 + $0x15a] sm:$0xff]
        %v2380 = vld [vmem:[%s1441 + $0x16a] sm:$0xff]
        %v2381 = vld [vmem:[%s1441 + $0x172] sm:$0xff]
        %s2382 = scalar_lea.vmem %s1, 20
        %v2383 = vld [vmem:[%s2382] sm:$0xf]
        %v2385 = vsel %vm175, %v2350, 0
        %v2388 = vsel %vm175, %v2351, 0
        %v2391 = vsel %vm175, %v2352, 0
        %v2394 = vsel %vm175, %v2353, 0
        %v2397 = vsel %vm175, %v2354, 0
        %v2400 = vsel %vm175, %v2355, 0
        %v2403 = vsel %vm175, %v2356, 0
        %v2406 = vsel %vm175, %v2357, 0
        %v2409 = vsel %vm175, %v2358, 0
        %v2412 = vsel %vm175, %v2359, 0
        %v2415 = vsel %vm175, %v2360, 0
        %v2418 = vsel %vm175, %v2361, 0
        %v2421 = vsel %vm175, %v2362, 0
        %v2424 = vsel %vm175, %v2363, 0
        %v2427 = vsel %vm175, %v2364, 0
        %v2430 = vsel %vm175, %v2365, 0
        %v2433 = vsel %vm175, %v2366, 0
        %v2436 = vsel %vm175, %v2367, 0
        %v2439 = vsel %vm175, %v2368, 0
        %v2442 = vsel %vm175, %v2369, 0
        %v2445 = vsel %vm175, %v2370, 0
        %v2448 = vsel %vm175, %v2371, 0
        %v2451 = vsel %vm175, %v2372, 0
        %v2454 = vsel %vm175, %v2373, 0
        %v2457 = vsel %vm175, %v2374, 0
        %v2460 = vsel %vm175, %v2375, 0
        %v2463 = vsel %vm175, %v2376, 0
        %v2466 = vsel %vm175, %v2377, 0
        %v2469 = vsel %vm175, %v2378, 0
        %v2472 = vsel %vm175, %v2379, 0
        %v2475 = vsel %vm175, %v2380, 0
        %v2478 = vsel %vm175, %v2381, 0
        %v2481 = vsel %vm272, %v2383, 0
        %2483 = vmatprep.subr.mxu0 0.0
        %2484 = vmatpush1.msra.mxu0 %v2481
        %2485 = vmatprep.subr.mxu0 0.0
        %2486 = vmatpush1.msra.mxu0 0.0
        %2487 = vmatprep.subr.mxu0 0.0
        %2488 = vmatpush1.msra.mxu0 0.0
        %2489 = vmatprep.subr.mxu0 0.0
        %2490 = vmatpush1.msra.mxu0 0.0
        %2491 = vmatprep.subr.mxu0 0.0
        %2492 = vmatpush1.msra.mxu0 0.0
        %2493 = vmatprep.subr.mxu0 0.0
        %2494 = vmatpush1.msra.mxu0 0.0
        %2495 = vmatprep.subr.mxu0 0.0
        %2496 = vmatpush1.msra.mxu0 0.0
        %2497 = vmatprep.subr.mxu0 0.0
        %2498 = vmatpush1.msra.mxu0 0.0
        %2499 = vmatprep.subr.mxu0 0.0
        %2500 = vmatpush1.msra.mxu0 0.0
        %2501 = vmatprep.subr.mxu0 0.0
        %2502 = vmatpush1.msra.mxu0 0.0
        %2503 = vmatprep.subr.mxu0 0.0
        %2504 = vmatpush1.msra.mxu0 0.0
        %2505 = vmatprep.subr.mxu0 0.0
        %2506 = vmatpush1.msra.mxu0 0.0
        %2507 = vmatprep.subr.mxu0 0.0
        %2508 = vmatpush1.msra.mxu0 0.0
        %2509 = vmatprep.subr.mxu0 0.0
        %2510 = vmatpush1.msra.mxu0 0.0
        %2511 = vmatprep.subr.mxu0 0.0
        %2512 = vmatpush1.msra.mxu0 0.0
        %2513 = vmatprep.subr.mxu0 0.0
        %2514 = vmatpush1.msra.mxu0 0.0
        %2515 = vmatprep.subr.mxu0 0.0
        %2516 = vmatpush1.msra.mxu0 0.0
        %2517 = vmatprep.subr.mxu0 0.0
        %2518 = vmatpush1.msra.mxu0 0.0
        %2519 = vmatprep.subr.mxu0 0.0
        %2520 = vmatpush1.msra.mxu0 0.0
        %2521 = vmatprep.subr.mxu0 0.0
        %2522 = vmatpush1.msra.mxu0 0.0
        %2523 = vmatprep.subr.mxu0 0.0
        %2524 = vmatpush1.msra.mxu0 0.0
        %2525 = vmatprep.subr.mxu0 0.0
        %2526 = vmatpush1.msra.mxu0 0.0
        %2527 = vmatprep.subr.mxu0 0.0
        %2528 = vmatpush1.msra.mxu0 0.0
        %2529 = vmatprep.subr.mxu0 0.0
        %2530 = vmatpush1.msra.mxu0 0.0
        %2531 = vmatprep.subr.mxu0 0.0
        %2532 = vmatpush1.msra.mxu0 0.0
        %2533 = vmatprep.subr.mxu0 0.0
        %2534 = vmatpush1.msra.mxu0 0.0
        %2535 = vmatprep.subr.mxu0 0.0
        %2536 = vmatpush1.msra.mxu0 0.0
        %2537 = vmatprep.subr.mxu0 0.0
        %2538 = vmatpush1.msra.mxu0 0.0
        %2539 = vmatprep.subr.mxu0 0.0
        %2540 = vmatpush1.msra.mxu0 0.0
        %2541 = vmatprep.subr.mxu0 0.0
        %2542 = vmatpush1.msra.mxu0 0.0
        %2543 = vmatprep.subr.mxu0 0.0
        %2544 = vmatpush1.msra.mxu0 0.0
        %2545 = vmatprep.subr.mxu0 0.0
        %2546 = vmatpush1.msra.mxu0 0.0
        %2547 = vmatprep.mubr.f32.mxu0 0.0
        %2548 = vmatmul.mubr.f32.gmra.mrb[0].mxu0 %v2385
        %v2549 = vpop.f32.mrb[0].mxu0
        %v2550 = vadd.f32 0.0, %v2549
        %v2551 = vpop.f32.mrb[0].mxu0
        %2552 = vmatprep.mubr.f32.mxu0 0.0
        %2553 = vmatmul.mubr.f32.gmra.mrb[0].mxu0 %v2388
        %v2554 = vpop.f32.mrb[0].mxu0
        %v2555 = vadd.f32 0.0, %v2554
        %v2556 = vpop.f32.mrb[0].mxu0
        %2557 = vmatprep.mubr.f32.mxu0 0.0
        %2558 = vmatmul.mubr.f32.gmra.mrb[0].mxu0 %v2391
        %v2559 = vpop.f32.mrb[0].mxu0
        %v2560 = vadd.f32 0.0, %v2559
        %v2561 = vpop.f32.mrb[0].mxu0
        %2562 = vmatprep.mubr.f32.mxu0 0.0
        %2563 = vmatmul.mubr.f32.gmra.mrb[0].mxu0 %v2394
        %v2564 = vpop.f32.mrb[0].mxu0
        %v2565 = vadd.f32 0.0, %v2564
        %v2566 = vpop.f32.mrb[0].mxu0
        %2567 = vmatprep.mubr.f32.mxu0 0.0
        %2568 = vmatmul.mubr.f32.gmra.mrb[0].mxu0 %v2397
        %v2569 = vpop.f32.mrb[0].mxu0
        %v2570 = vadd.f32 0.0, %v2569
        %v2571 = vpop.f32.mrb[0].mxu0
        %2572 = vmatprep.mubr.f32.mxu0 0.0
        %2573 = vmatmul.mubr.f32.gmra.mrb[0].mxu0 %v2400
        %v2574 = vpop.f32.mrb[0].mxu0
        %v2575 = vadd.f32 0.0, %v2574
        %v2576 = vpop.f32.mrb[0].mxu0
        %2577 = vmatprep.mubr.f32.mxu0 0.0
        %2578 = vmatmul.mubr.f32.gmra.mrb[0].mxu0 %v2403
        %v2579 = vpop.f32.mrb[0].mxu0
        %v2580 = vadd.f32 0.0, %v2579
        %v2581 = vpop.f32.mrb[0].mxu0
        %2582 = vmatprep.mubr.f32.mxu0 0.0
        %2583 = vmatmul.mubr.f32.gmra.mrb[0].mxu0 %v2406
        %v2584 = vpop.f32.mrb[0].mxu0
        %v2585 = vadd.f32 0.0, %v2584
        %v2586 = vpop.f32.mrb[0].mxu0
        %2587 = vmatprep.mubr.f32.mxu0 0.0
        %2588 = vmatmul.mubr.f32.gmra.mrb[0].mxu0 %v2409
        %v2589 = vpop.f32.mrb[0].mxu0
        %v2590 = vadd.f32 0.0, %v2589
        %v2591 = vpop.f32.mrb[0].mxu0
        %2592 = vmatprep.mubr.f32.mxu0 0.0
        %2593 = vmatmul.mubr.f32.gmra.mrb[0].mxu0 %v2412
        %v2594 = vpop.f32.mrb[0].mxu0
        %v2595 = vadd.f32 0.0, %v2594
        %v2596 = vpop.f32.mrb[0].mxu0
        %2597 = vmatprep.mubr.f32.mxu0 0.0
        %2598 = vmatmul.mubr.f32.gmra.mrb[0].mxu0 %v2415
        %v2599 = vpop.f32.mrb[0].mxu0
        %v2600 = vadd.f32 0.0, %v2599
        %v2601 = vpop.f32.mrb[0].mxu0
        %2602 = vmatprep.mubr.f32.mxu0 0.0
        %2603 = vmatmul.mubr.f32.gmra.mrb[0].mxu0 %v2418
        %v2604 = vpop.f32.mrb[0].mxu0
        %v2605 = vadd.f32 0.0, %v2604
        %v2606 = vpop.f32.mrb[0].mxu0
        %2607 = vmatprep.mubr.f32.mxu0 0.0
        %2608 = vmatmul.mubr.f32.gmra.mrb[0].mxu0 %v2421
        %v2609 = vpop.f32.mrb[0].mxu0
        %v2610 = vadd.f32 0.0, %v2609
        %v2611 = vpop.f32.mrb[0].mxu0
        %2612 = vmatprep.mubr.f32.mxu0 0.0
        %2613 = vmatmul.mubr.f32.gmra.mrb[0].mxu0 %v2424
        %v2614 = vpop.f32.mrb[0].mxu0
        %v2615 = vadd.f32 0.0, %v2614
        %v2616 = vpop.f32.mrb[0].mxu0
        %2617 = vmatprep.mubr.f32.mxu0 0.0
        %2618 = vmatmul.mubr.f32.gmra.mrb[0].mxu0 %v2427
        %v2619 = vpop.f32.mrb[0].mxu0
        %v2620 = vadd.f32 0.0, %v2619
        %v2621 = vpop.f32.mrb[0].mxu0
        %2622 = vmatprep.mubr.f32.mxu0 0.0
        %2623 = vmatmul.mubr.f32.gmra.mrb[0].mxu0 %v2430
        %v2624 = vpop.f32.mrb[0].mxu0
        %v2625 = vadd.f32 0.0, %v2624
        %v2626 = vpop.f32.mrb[0].mxu0
        %2627 = vmatprep.mubr.f32.mxu0 0.0
        %2628 = vmatmul.mubr.f32.gmra.mrb[0].mxu0 %v2433
        %v2629 = vpop.f32.mrb[0].mxu0
        %v2630 = vadd.f32 0.0, %v2629
        %v2631 = vpop.f32.mrb[0].mxu0
        %2632 = vmatprep.mubr.f32.mxu0 0.0
        %2633 = vmatmul.mubr.f32.gmra.mrb[0].mxu0 %v2436
        %v2634 = vpop.f32.mrb[0].mxu0
        %v2635 = vadd.f32 0.0, %v2634
        %v2636 = vpop.f32.mrb[0].mxu0
        %2637 = vmatprep.mubr.f32.mxu0 0.0
        %2638 = vmatmul.mubr.f32.gmra.mrb[0].mxu0 %v2439
        %v2639 = vpop.f32.mrb[0].mxu0
        %v2640 = vadd.f32 0.0, %v2639
        %v2641 = vpop.f32.mrb[0].mxu0
        %2642 = vmatprep.mubr.f32.mxu0 0.0
        %2643 = vmatmul.mubr.f32.gmra.mrb[0].mxu0 %v2442
        %v2644 = vpop.f32.mrb[0].mxu0
        %v2645 = vadd.f32 0.0, %v2644
        %v2646 = vpop.f32.mrb[0].mxu0
        %2647 = vmatprep.mubr.f32.mxu0 0.0
        %2648 = vmatmul.mubr.f32.gmra.mrb[0].mxu0 %v2445
        %v2649 = vpop.f32.mrb[0].mxu0
        %v2650 = vadd.f32 0.0, %v2649
        %v2651 = vpop.f32.mrb[0].mxu0
        %2652 = vmatprep.mubr.f32.mxu0 0.0
        %2653 = vmatmul.mubr.f32.gmra.mrb[0].mxu0 %v2448
        %v2654 = vpop.f32.mrb[0].mxu0
        %v2655 = vadd.f32 0.0, %v2654
        %v2656 = vpop.f32.mrb[0].mxu0
        %2657 = vmatprep.mubr.f32.mxu0 0.0
        %2658 = vmatmul.mubr.f32.gmra.mrb[0].mxu0 %v2451
        %v2659 = vpop.f32.mrb[0].mxu0
        %v2660 = vadd.f32 0.0, %v2659
        %v2661 = vpop.f32.mrb[0].mxu0
        %2662 = vmatprep.mubr.f32.mxu0 0.0
        %2663 = vmatmul.mubr.f32.gmra.mrb[0].mxu0 %v2454
        %v2664 = vpop.f32.mrb[0].mxu0
        %v2665 = vadd.f32 0.0, %v2664
        %v2666 = vpop.f32.mrb[0].mxu0
        %2667 = vmatprep.mubr.f32.mxu0 0.0
        %2668 = vmatmul.mubr.f32.gmra.mrb[0].mxu0 %v2457
        %v2669 = vpop.f32.mrb[0].mxu0
        %v2670 = vadd.f32 0.0, %v2669
        %v2671 = vpop.f32.mrb[0].mxu0
        %2672 = vmatprep.mubr.f32.mxu0 0.0
        %2673 = vmatmul.mubr.f32.gmra.mrb[0].mxu0 %v2460
        %v2674 = vpop.f32.mrb[0].mxu0
        %v2675 = vadd.f32 0.0, %v2674
        %v2676 = vpop.f32.mrb[0].mxu0
        %2677 = vmatprep.mubr.f32.mxu0 0.0
        %2678 = vmatmul.mubr.f32.gmra.mrb[0].mxu0 %v2463
        %v2679 = vpop.f32.mrb[0].mxu0
        %v2680 = vadd.f32 0.0, %v2679
        %v2681 = vpop.f32.mrb[0].mxu0
        %2682 = vmatprep.mubr.f32.mxu0 0.0
        %2683 = vmatmul.mubr.f32.gmra.mrb[0].mxu0 %v2466
        %v2684 = vpop.f32.mrb[0].mxu0
        %v2685 = vadd.f32 0.0, %v2684
        %v2686 = vpop.f32.mrb[0].mxu0
        %2687 = vmatprep.mubr.f32.mxu0 0.0
        %2688 = vmatmul.mubr.f32.gmra.mrb[0].mxu0 %v2469
        %v2689 = vpop.f32.mrb[0].mxu0
        %v2690 = vadd.f32 0.0, %v2689
        %v2691 = vpop.f32.mrb[0].mxu0
        %2692 = vmatprep.mubr.f32.mxu0 0.0
        %2693 = vmatmul.mubr.f32.gmra.mrb[0].mxu0 %v2472
        %v2694 = vpop.f32.mrb[0].mxu0
        %v2695 = vadd.f32 0.0, %v2694
        %v2696 = vpop.f32.mrb[0].mxu0
        %2697 = vmatprep.mubr.f32.mxu0 0.0
        %2698 = vmatmul.mubr.f32.gmra.mrb[0].mxu0 %v2475
        %v2699 = vpop.f32.mrb[0].mxu0
        %v2700 = vadd.f32 0.0, %v2699
        %v2701 = vpop.f32.mrb[0].mxu0
        %2702 = vmatprep.mubr.f32.mxu0 0.0
        %2703 = vmatmul.mubr.f32.gmra.mrb[0].mxu0 %v2478
        %v2704 = vpop.f32.mrb[0].mxu0
        %v2705 = vadd.f32 0.0, %v2704
        %v2706 = vpop.f32.mrb[0].mxu0
        %2707 = vdwg.mxu0
        %v2708 = vld [vmem:[#allocation2] sm:$0xff]
        %v2709 = vld [vmem:[#allocation2 + $0x8] sm:$0xff]
        %v2710 = vld [vmem:[#allocation2 + $0x10] sm:$0xff]
        %v2711 = vld [vmem:[#allocation2 + $0x18] sm:$0xff]
        %v2712 = vld [vmem:[#allocation2 + $0x20] sm:$0xff]
        %v2713 = vld [vmem:[#allocation2 + $0x28] sm:$0xff]
        %v2714 = vld [vmem:[#allocation2 + $0x30] sm:$0xff]
        %v2715 = vld [vmem:[#allocation2 + $0x38] sm:$0xff]
        %v2716 = vld [vmem:[#allocation2 + $0x40] sm:$0xff]
        %v2717 = vld [vmem:[#allocation2 + $0x48] sm:$0xff]
        %v2718 = vld [vmem:[#allocation2 + $0x50] sm:$0xff]
        %v2719 = vld [vmem:[#allocation2 + $0x58] sm:$0xff]
        %v2720 = vld [vmem:[#allocation2 + $0x60] sm:$0xff]
        %v2721 = vld [vmem:[#allocation2 + $0x68] sm:$0xff]
        %v2722 = vld [vmem:[#allocation2 + $0x70] sm:$0xff]
        %v2723 = vld [vmem:[#allocation2 + $0x78] sm:$0xff]
        %v2724 = vld [vmem:[#allocation2 + $0x80] sm:$0xff]
        %v2725 = vld [vmem:[#allocation2 + $0x88] sm:$0xff]
        %v2726 = vld [vmem:[#allocation2 + $0x90] sm:$0xff]
        %v2727 = vld [vmem:[#allocation2 + $0x98] sm:$0xff]
        %v2728 = vld [vmem:[#allocation2 + $0xa0] sm:$0xff]
        %v2729 = vld [vmem:[#allocation2 + $0xa8] sm:$0xff]
        %v2730 = vld [vmem:[#allocation2 + $0xb0] sm:$0xff]
        %v2731 = vld [vmem:[#allocation2 + $0xb8] sm:$0xff]
        %v2732 = vld [vmem:[#allocation2 + $0xc0] sm:$0xff]
        %v2733 = vld [vmem:[#allocation2 + $0xc8] sm:$0xff]
        %v2734 = vld [vmem:[#allocation2 + $0xd0] sm:$0xff]
        %v2735 = vld [vmem:[#allocation2 + $0xd8] sm:$0xff]
        %v2736 = vld [vmem:[#allocation2 + $0xe0] sm:$0xff]
        %v2737 = vld [vmem:[#allocation2 + $0xe8] sm:$0xff]
        %v2738 = vld [vmem:[#allocation2 + $0xf0] sm:$0xff]
        %v2739 = vld [vmem:[#allocation2 + $0xf8] sm:$0xff]
        %v2740 = vadd.f32 %v2708, %v2550
        %v2741 = vadd.f32 %v2709, %v2555
        %v2742 = vadd.f32 %v2710, %v2560
        %v2743 = vadd.f32 %v2711, %v2565
        %v2744 = vadd.f32 %v2712, %v2570
        %v2745 = vadd.f32 %v2713, %v2575
        %v2746 = vadd.f32 %v2714, %v2580
        %v2747 = vadd.f32 %v2715, %v2585
        %v2748 = vadd.f32 %v2716, %v2590
        %v2749 = vadd.f32 %v2717, %v2595
        %v2750 = vadd.f32 %v2718, %v2600
        %v2751 = vadd.f32 %v2719, %v2605
        %v2752 = vadd.f32 %v2720, %v2610
        %v2753 = vadd.f32 %v2721, %v2615
        %v2754 = vadd.f32 %v2722, %v2620
        %v2755 = vadd.f32 %v2723, %v2625
        %v2756 = vadd.f32 %v2724, %v2630
        %v2757 = vadd.f32 %v2725, %v2635
        %v2758 = vadd.f32 %v2726, %v2640
        %v2759 = vadd.f32 %v2727, %v2645
        %v2760 = vadd.f32 %v2728, %v2650
        %v2761 = vadd.f32 %v2729, %v2655
        %v2762 = vadd.f32 %v2730, %v2660
        %v2763 = vadd.f32 %v2731, %v2665
        %v2764 = vadd.f32 %v2732, %v2670
        %v2765 = vadd.f32 %v2733, %v2675
        %v2766 = vadd.f32 %v2734, %v2680
        %v2767 = vadd.f32 %v2735, %v2685
        %v2768 = vadd.f32 %v2736, %v2690
        %v2769 = vadd.f32 %v2737, %v2695
        %v2770 = vadd.f32 %v2738, %v2700
        %v2771 = vadd.f32 %v2739, %v2705
        %2772 = vst [vmem:[#allocation2] sm:$0xff] %v2740
        %2773 = vst [vmem:[#allocation2 + $0x8] sm:$0xff] %v2741
        %2774 = vst [vmem:[#allocation2 + $0x10] sm:$0xff] %v2742
        %2775 = vst [vmem:[#allocation2 + $0x18] sm:$0xff] %v2743
        %2776 = vst [vmem:[#allocation2 + $0x20] sm:$0xff] %v2744
        %2777 = vst [vmem:[#allocation2 + $0x28] sm:$0xff] %v2745
        %2778 = vst [vmem:[#allocation2 + $0x30] sm:$0xff] %v2746
        %2779 = vst [vmem:[#allocation2 + $0x38] sm:$0xff] %v2747
        %2780 = vst [vmem:[#allocation2 + $0x40] sm:$0xff] %v2748
        %2781 = vst [vmem:[#allocation2 + $0x48] sm:$0xff] %v2749
        %2782 = vst [vmem:[#allocation2 + $0x50] sm:$0xff] %v2750
        %2783 = vst [vmem:[#allocation2 + $0x58] sm:$0xff] %v2751
        %2784 = vst [vmem:[#allocation2 + $0x60] sm:$0xff] %v2752
        %2785 = vst [vmem:[#allocation2 + $0x68] sm:$0xff] %v2753
        %2786 = vst [vmem:[#allocation2 + $0x70] sm:$0xff] %v2754
        %2787 = vst [vmem:[#allocation2 + $0x78] sm:$0xff] %v2755
        %2788 = vst [vmem:[#allocation2 + $0x80] sm:$0xff] %v2756
        %2789 = vst [vmem:[#allocation2 + $0x88] sm:$0xff] %v2757
        %2790 = vst [vmem:[#allocation2 + $0x90] sm:$0xff] %v2758
        %2791 = vst [vmem:[#allocation2 + $0x98] sm:$0xff] %v2759
        %2792 = vst [vmem:[#allocation2 + $0xa0] sm:$0xff] %v2760
        %2793 = vst [vmem:[#allocation2 + $0xa8] sm:$0xff] %v2761
        %2794 = vst [vmem:[#allocation2 + $0xb0] sm:$0xff] %v2762
        %2795 = vst [vmem:[#allocation2 + $0xb8] sm:$0xff] %v2763
        %2796 = vst [vmem:[#allocation2 + $0xc0] sm:$0xff] %v2764
        %2797 = vst [vmem:[#allocation2 + $0xc8] sm:$0xff] %v2765
        %2798 = vst [vmem:[#allocation2 + $0xd0] sm:$0xff] %v2766
        %2799 = vst [vmem:[#allocation2 + $0xd8] sm:$0xff] %v2767
        %2800 = vst [vmem:[#allocation2 + $0xe0] sm:$0xff] %v2768
        %2801 = vst [vmem:[#allocation2 + $0xe8] sm:$0xff] %v2769
        %2802 = vst [vmem:[#allocation2 + $0xf0] sm:$0xff] %v2770
        %2803 = vst [vmem:[#allocation2 + $0xf8] sm:$0xff] %v2771
        %s2804 = scalar_lea.vmem %s141, 48
        %v2805 = vld [vmem:[%s2804] sm:$0xff]
        %v2806 = vld [vmem:[%s2804 + $0x8] sm:$0xff]
        %v2807 = vld [vmem:[%s2804 + $0x18] sm:$0xff]
        %v2808 = vld [vmem:[%s2804 + $0x20] sm:$0xff]
        %v2809 = vld [vmem:[%s2804 + $0x30] sm:$0xff]
        %v2810 = vld [vmem:[%s2804 + $0x38] sm:$0xff]
        %v2811 = vld [vmem:[%s2804 + $0x48] sm:$0xff]
        %v2812 = vld [vmem:[%s2804 + $0x50] sm:$0xff]
        %v2813 = vld [vmem:[%s2804 + $0x60] sm:$0xff]
        %v2814 = vld [vmem:[%s2804 + $0x68] sm:$0xff]
        %v2815 = vld [vmem:[%s2804 + $0x78] sm:$0xff]
        %v2816 = vld [vmem:[%s2804 + $0x80] sm:$0xff]
        %v2817 = vld [vmem:[%s2804 + $0x90] sm:$0xff]
        %v2818 = vld [vmem:[%s2804 + $0x98] sm:$0xff]
        %v2819 = vld [vmem:[%s2804 + $0xa8] sm:$0xff]
        %v2820 = vld [vmem:[%s2804 + $0xb0] sm:$0xff]
        %v2821 = vld [vmem:[%s2804 + $0xc0] sm:$0xff]
        %v2822 = vld [vmem:[%s2804 + $0xc8] sm:$0xff]
        %v2823 = vld [vmem:[%s2804 + $0xd8] sm:$0xff]
        %v2824 = vld [vmem:[%s2804 + $0xe0] sm:$0xff]
        %v2825 = vld [vmem:[%s2804 + $0xf0] sm:$0xff]
        %v2826 = vld [vmem:[%s2804 + $0xf8] sm:$0xff]
        %v2827 = vld [vmem:[%s2804 + $0x108] sm:$0xff]
        %v2828 = vld [vmem:[%s2804 + $0x110] sm:$0xff]
        %v2829 = vld [vmem:[%s2804 + $0x120] sm:$0xff]
        %v2830 = vld [vmem:[%s2804 + $0x128] sm:$0xff]
        %v2831 = vld [vmem:[%s2804 + $0x138] sm:$0xff]
        %v2832 = vld [vmem:[%s2804 + $0x140] sm:$0xff]
        %v2833 = vld [vmem:[%s2804 + $0x150] sm:$0xff]
        %v2834 = vld [vmem:[%s2804 + $0x158] sm:$0xff]
        %v2835 = vld [vmem:[%s2804 + $0x168] sm:$0xff]
        %v2836 = vld [vmem:[%s2804 + $0x170] sm:$0xff]
        %s2837 = scalar_lea.vmem %s1, 24
        %v2838 = vld [vmem:[%s2837] sm:$0xf]
        %v2840 = vsel %vm175, %v2805, 0
        %v2843 = vsel %vm175, %v2806, 0
        %v2846 = vsel %vm175, %v2807, 0
        %v2849 = vsel %vm175, %v2808, 0
        %v2852 = vsel %vm175, %v2809, 0
        %v2855 = vsel %vm175, %v2810, 0
        %v2858 = vsel %vm175, %v2811, 0
        %v2861 = vsel %vm175, %v2812, 0
        %v2864 = vsel %vm175, %v2813, 0
        %v2867 = vsel %vm175, %v2814, 0
        %v2870 = vsel %vm175, %v2815, 0
        %v2873 = vsel %vm175, %v2816, 0
        %v2876 = vsel %vm175, %v2817, 0
        %v2879 = vsel %vm175, %v2818, 0
        %v2882 = vsel %vm175, %v2819, 0
        %v2885 = vsel %vm175, %v2820, 0
        %v2888 = vsel %vm175, %v2821, 0
        %v2891 = vsel %vm175, %v2822, 0
        %v2894 = vsel %vm175, %v2823, 0
        %v2897 = vsel %vm175, %v2824, 0
        %v2900 = vsel %vm175, %v2825, 0
        %v2903 = vsel %vm175, %v2826, 0
        %v2906 = vsel %vm175, %v2827, 0
        %v2909 = vsel %vm175, %v2828, 0
        %v2912 = vsel %vm175, %v2829, 0
        %v2915 = vsel %vm175, %v2830, 0
        %v2918 = vsel %vm175, %v2831, 0
        %v2921 = vsel %vm175, %v2832, 0
        %v2924 = vsel %vm175, %v2833, 0
        %v2927 = vsel %vm175, %v2834, 0
        %v2930 = vsel %vm175, %v2835, 0
        %v2933 = vsel %vm175, %v2836, 0
        %v2936 = vsel %vm272, %v2838, 0
        %2938 = vmatprep.subr.mxu0 0.0
        %2939 = vmatpush1.msra.mxu0 %v2936
        %2940 = vmatprep.subr.mxu0 0.0
        %2941 = vmatpush1.msra.mxu0 0.0
        %2942 = vmatprep.subr.mxu0 0.0
        %2943 = vmatpush1.msra.mxu0 0.0
        %2944 = vmatprep.subr.mxu0 0.0
        %2945 = vmatpush1.msra.mxu0 0.0
        %2946 = vmatprep.subr.mxu0 0.0
        %2947 = vmatpush1.msra.mxu0 0.0
        %2948 = vmatprep.subr.mxu0 0.0
        %2949 = vmatpush1.msra.mxu0 0.0
        %2950 = vmatprep.subr.mxu0 0.0
        %2951 = vmatpush1.msra.mxu0 0.0
        %2952 = vmatprep.subr.mxu0 0.0
        %2953 = vmatpush1.msra.mxu0 0.0
        %2954 = vmatprep.subr.mxu0 0.0
        %2955 = vmatpush1.msra.mxu0 0.0
        %2956 = vmatprep.subr.mxu0 0.0
        %2957 = vmatpush1.msra.mxu0 0.0
        %2958 = vmatprep.subr.mxu0 0.0
        %2959 = vmatpush1.msra.mxu0 0.0
        %2960 = vmatprep.subr.mxu0 0.0
        %2961 = vmatpush1.msra.mxu0 0.0
        %2962 = vmatprep.subr.mxu0 0.0
        %2963 = vmatpush1.msra.mxu0 0.0
        %2964 = vmatprep.subr.mxu0 0.0
        %2965 = vmatpush1.msra.mxu0 0.0
        %2966 = vmatprep.subr.mxu0 0.0
        %2967 = vmatpush1.msra.mxu0 0.0
        %2968 = vmatprep.subr.mxu0 0.0
        %2969 = vmatpush1.msra.mxu0 0.0
        %2970 = vmatprep.subr.mxu0 0.0
        %2971 = vmatpush1.msra.mxu0 0.0
        %2972 = vmatprep.subr.mxu0 0.0
        %2973 = vmatpush1.msra.mxu0 0.0
        %2974 = vmatprep.subr.mxu0 0.0
        %2975 = vmatpush1.msra.mxu0 0.0
        %2976 = vmatprep.subr.mxu0 0.0
        %2977 = vmatpush1.msra.mxu0 0.0
        %2978 = vmatprep.subr.mxu0 0.0
        %2979 = vmatpush1.msra.mxu0 0.0
        %2980 = vmatprep.subr.mxu0 0.0
        %2981 = vmatpush1.msra.mxu0 0.0
        %2982 = vmatprep.subr.mxu0 0.0
        %2983 = vmatpush1.msra.mxu0 0.0
        %2984 = vmatprep.subr.mxu0 0.0
        %2985 = vmatpush1.msra.mxu0 0.0
        %2986 = vmatprep.subr.mxu0 0.0
        %2987 = vmatpush1.msra.mxu0 0.0
        %2988 = vmatprep.subr.mxu0 0.0
        %2989 = vmatpush1.msra.mxu0 0.0
        %2990 = vmatprep.subr.mxu0 0.0
        %2991 = vmatpush1.msra.mxu0 0.0
        %2992 = vmatprep.subr.mxu0 0.0
        %2993 = vmatpush1.msra.mxu0 0.0
        %2994 = vmatprep.subr.mxu0 0.0
        %2995 = vmatpush1.msra.mxu0 0.0
        %2996 = vmatprep.subr.mxu0 0.0
        %2997 = vmatpush1.msra.mxu0 0.0
        %2998 = vmatprep.subr.mxu0 0.0
        %2999 = vmatpush1.msra.mxu0 0.0
        %3000 = vmatprep.subr.mxu0 0.0
        %3001 = vmatpush1.msra.mxu0 0.0
        %3002 = vmatprep.mubr.f32.mxu0 0.0
        %3003 = vmatmul.mubr.f32.gmra.mrb[0].mxu0 %v2840
        %v3004 = vpop.f32.mrb[0].mxu0
        %v3005 = vadd.f32 0.0, %v3004
        %v3006 = vpop.f32.mrb[0].mxu0
        %3007 = vmatprep.mubr.f32.mxu0 0.0
        %3008 = vmatmul.mubr.f32.gmra.mrb[0].mxu0 %v2843
        %v3009 = vpop.f32.mrb[0].mxu0
        %v3010 = vadd.f32 0.0, %v3009
        %v3011 = vpop.f32.mrb[0].mxu0
        %3012 = vmatprep.mubr.f32.mxu0 0.0
        %3013 = vmatmul.mubr.f32.gmra.mrb[0].mxu0 %v2846
        %v3014 = vpop.f32.mrb[0].mxu0
        %v3015 = vadd.f32 0.0, %v3014
        %v3016 = vpop.f32.mrb[0].mxu0
        %3017 = vmatprep.mubr.f32.mxu0 0.0
        %3018 = vmatmul.mubr.f32.gmra.mrb[0].mxu0 %v2849
        %v3019 = vpop.f32.mrb[0].mxu0
        %v3020 = vadd.f32 0.0, %v3019
        %v3021 = vpop.f32.mrb[0].mxu0
        %3022 = vmatprep.mubr.f32.mxu0 0.0
        %3023 = vmatmul.mubr.f32.gmra.mrb[0].mxu0 %v2852
        %v3024 = vpop.f32.mrb[0].mxu0
        %v3025 = vadd.f32 0.0, %v3024
        %v3026 = vpop.f32.mrb[0].mxu0
        %3027 = vmatprep.mubr.f32.mxu0 0.0
        %3028 = vmatmul.mubr.f32.gmra.mrb[0].mxu0 %v2855
        %v3029 = vpop.f32.mrb[0].mxu0
        %v3030 = vadd.f32 0.0, %v3029
        %v3031 = vpop.f32.mrb[0].mxu0
        %3032 = vmatprep.mubr.f32.mxu0 0.0
        %3033 = vmatmul.mubr.f32.gmra.mrb[0].mxu0 %v2858
        %v3034 = vpop.f32.mrb[0].mxu0
        %v3035 = vadd.f32 0.0, %v3034
        %v3036 = vpop.f32.mrb[0].mxu0
        %3037 = vmatprep.mubr.f32.mxu0 0.0
        %3038 = vmatmul.mubr.f32.gmra.mrb[0].mxu0 %v2861
        %v3039 = vpop.f32.mrb[0].mxu0
        %v3040 = vadd.f32 0.0, %v3039
        %v3041 = vpop.f32.mrb[0].mxu0
        %3042 = vmatprep.mubr.f32.mxu0 0.0
        %3043 = vmatmul.mubr.f32.gmra.mrb[0].mxu0 %v2864
        %v3044 = vpop.f32.mrb[0].mxu0
        %v3045 = vadd.f32 0.0, %v3044
        %v3046 = vpop.f32.mrb[0].mxu0
        %3047 = vmatprep.mubr.f32.mxu0 0.0
        %3048 = vmatmul.mubr.f32.gmra.mrb[0].mxu0 %v2867
        %v3049 = vpop.f32.mrb[0].mxu0
        %v3050 = vadd.f32 0.0, %v3049
        %v3051 = vpop.f32.mrb[0].mxu0
        %3052 = vmatprep.mubr.f32.mxu0 0.0
        %3053 = vmatmul.mubr.f32.gmra.mrb[0].mxu0 %v2870
        %v3054 = vpop.f32.mrb[0].mxu0
        %v3055 = vadd.f32 0.0, %v3054
        %v3056 = vpop.f32.mrb[0].mxu0
        %3057 = vmatprep.mubr.f32.mxu0 0.0
        %3058 = vmatmul.mubr.f32.gmra.mrb[0].mxu0 %v2873
        %v3059 = vpop.f32.mrb[0].mxu0
        %v3060 = vadd.f32 0.0, %v3059
        %v3061 = vpop.f32.mrb[0].mxu0
        %3062 = vmatprep.mubr.f32.mxu0 0.0
        %3063 = vmatmul.mubr.f32.gmra.mrb[0].mxu0 %v2876
        %v3064 = vpop.f32.mrb[0].mxu0
        %v3065 = vadd.f32 0.0, %v3064
        %v3066 = vpop.f32.mrb[0].mxu0
        %3067 = vmatprep.mubr.f32.mxu0 0.0
        %3068 = vmatmul.mubr.f32.gmra.mrb[0].mxu0 %v2879
        %v3069 = vpop.f32.mrb[0].mxu0
        %v3070 = vadd.f32 0.0, %v3069
        %v3071 = vpop.f32.mrb[0].mxu0
        %3072 = vmatprep.mubr.f32.mxu0 0.0
        %3073 = vmatmul.mubr.f32.gmra.mrb[0].mxu0 %v2882
        %v3074 = vpop.f32.mrb[0].mxu0
        %v3075 = vadd.f32 0.0, %v3074
        %v3076 = vpop.f32.mrb[0].mxu0
        %3077 = vmatprep.mubr.f32.mxu0 0.0
        %3078 = vmatmul.mubr.f32.gmra.mrb[0].mxu0 %v2885
        %v3079 = vpop.f32.mrb[0].mxu0
        %v3080 = vadd.f32 0.0, %v3079
        %v3081 = vpop.f32.mrb[0].mxu0
        %3082 = vmatprep.mubr.f32.mxu0 0.0
        %3083 = vmatmul.mubr.f32.gmra.mrb[0].mxu0 %v2888
        %v3084 = vpop.f32.mrb[0].mxu0
        %v3085 = vadd.f32 0.0, %v3084
        %v3086 = vpop.f32.mrb[0].mxu0
        %3087 = vmatprep.mubr.f32.mxu0 0.0
        %3088 = vmatmul.mubr.f32.gmra.mrb[0].mxu0 %v2891
        %v3089 = vpop.f32.mrb[0].mxu0
        %v3090 = vadd.f32 0.0, %v3089
        %v3091 = vpop.f32.mrb[0].mxu0
        %3092 = vmatprep.mubr.f32.mxu0 0.0
        %3093 = vmatmul.mubr.f32.gmra.mrb[0].mxu0 %v2894
        %v3094 = vpop.f32.mrb[0].mxu0
        %v3095 = vadd.f32 0.0, %v3094
        %v3096 = vpop.f32.mrb[0].mxu0
        %3097 = vmatprep.mubr.f32.mxu0 0.0
        %3098 = vmatmul.mubr.f32.gmra.mrb[0].mxu0 %v2897
        %v3099 = vpop.f32.mrb[0].mxu0
        %v3100 = vadd.f32 0.0, %v3099
        %v3101 = vpop.f32.mrb[0].mxu0
        %3102 = vmatprep.mubr.f32.mxu0 0.0
        %3103 = vmatmul.mubr.f32.gmra.mrb[0].mxu0 %v2900
        %v3104 = vpop.f32.mrb[0].mxu0
        %v3105 = vadd.f32 0.0, %v3104
        %v3106 = vpop.f32.mrb[0].mxu0
        %3107 = vmatprep.mubr.f32.mxu0 0.0
        %3108 = vmatmul.mubr.f32.gmra.mrb[0].mxu0 %v2903
        %v3109 = vpop.f32.mrb[0].mxu0
        %v3110 = vadd.f32 0.0, %v3109
        %v3111 = vpop.f32.mrb[0].mxu0
        %3112 = vmatprep.mubr.f32.mxu0 0.0
        %3113 = vmatmul.mubr.f32.gmra.mrb[0].mxu0 %v2906
        %v3114 = vpop.f32.mrb[0].mxu0
        %v3115 = vadd.f32 0.0, %v3114
        %v3116 = vpop.f32.mrb[0].mxu0
        %3117 = vmatprep.mubr.f32.mxu0 0.0
        %3118 = vmatmul.mubr.f32.gmra.mrb[0].mxu0 %v2909
        %v3119 = vpop.f32.mrb[0].mxu0
        %v3120 = vadd.f32 0.0, %v3119
        %v3121 = vpop.f32.mrb[0].mxu0
        %3122 = vmatprep.mubr.f32.mxu0 0.0
        %3123 = vmatmul.mubr.f32.gmra.mrb[0].mxu0 %v2912
        %v3124 = vpop.f32.mrb[0].mxu0
        %v3125 = vadd.f32 0.0, %v3124
        %v3126 = vpop.f32.mrb[0].mxu0
        %3127 = vmatprep.mubr.f32.mxu0 0.0
        %3128 = vmatmul.mubr.f32.gmra.mrb[0].mxu0 %v2915
        %v3129 = vpop.f32.mrb[0].mxu0
        %v3130 = vadd.f32 0.0, %v3129
        %v3131 = vpop.f32.mrb[0].mxu0
        %3132 = vmatprep.mubr.f32.mxu0 0.0
        %3133 = vmatmul.mubr.f32.gmra.mrb[0].mxu0 %v2918
        %v3134 = vpop.f32.mrb[0].mxu0
        %v3135 = vadd.f32 0.0, %v3134
        %v3136 = vpop.f32.mrb[0].mxu0
        %3137 = vmatprep.mubr.f32.mxu0 0.0
        %3138 = vmatmul.mubr.f32.gmra.mrb[0].mxu0 %v2921
        %v3139 = vpop.f32.mrb[0].mxu0
        %v3140 = vadd.f32 0.0, %v3139
        %v3141 = vpop.f32.mrb[0].mxu0
        %3142 = vmatprep.mubr.f32.mxu0 0.0
        %3143 = vmatmul.mubr.f32.gmra.mrb[0].mxu0 %v2924
        %v3144 = vpop.f32.mrb[0].mxu0
        %v3145 = vadd.f32 0.0, %v3144
        %v3146 = vpop.f32.mrb[0].mxu0
        %3147 = vmatprep.mubr.f32.mxu0 0.0
        %3148 = vmatmul.mubr.f32.gmra.mrb[0].mxu0 %v2927
        %v3149 = vpop.f32.mrb[0].mxu0
        %v3150 = vadd.f32 0.0, %v3149
        %v3151 = vpop.f32.mrb[0].mxu0
        %3152 = vmatprep.mubr.f32.mxu0 0.0
        %3153 = vmatmul.mubr.f32.gmra.mrb[0].mxu0 %v2930
        %v3154 = vpop.f32.mrb[0].mxu0
        %v3155 = vadd.f32 0.0, %v3154
        %v3156 = vpop.f32.mrb[0].mxu0
        %3157 = vmatprep.mubr.f32.mxu0 0.0
        %3158 = vmatmul.mubr.f32.gmra.mrb[0].mxu0 %v2933
        %v3159 = vpop.f32.mrb[0].mxu0
        %v3160 = vadd.f32 0.0, %v3159
        %v3161 = vpop.f32.mrb[0].mxu0
        %3162 = vdwg.mxu0
        %v3163 = vld [vmem:[#allocation2] sm:$0xff]
        %v3164 = vld [vmem:[#allocation2 + $0x8] sm:$0xff]
        %v3165 = vld [vmem:[#allocation2 + $0x10] sm:$0xff]
        %v3166 = vld [vmem:[#allocation2 + $0x18] sm:$0xff]
        %v3167 = vld [vmem:[#allocation2 + $0x20] sm:$0xff]
        %v3168 = vld [vmem:[#allocation2 + $0x28] sm:$0xff]
        %v3169 = vld [vmem:[#allocation2 + $0x30] sm:$0xff]
        %v3170 = vld [vmem:[#allocation2 + $0x38] sm:$0xff]
        %v3171 = vld [vmem:[#allocation2 + $0x40] sm:$0xff]
        %v3172 = vld [vmem:[#allocation2 + $0x48] sm:$0xff]
        %v3173 = vld [vmem:[#allocation2 + $0x50] sm:$0xff]
        %v3174 = vld [vmem:[#allocation2 + $0x58] sm:$0xff]
        %v3175 = vld [vmem:[#allocation2 + $0x60] sm:$0xff]
        %v3176 = vld [vmem:[#allocation2 + $0x68] sm:$0xff]
        %v3177 = vld [vmem:[#allocation2 + $0x70] sm:$0xff]
        %v3178 = vld [vmem:[#allocation2 + $0x78] sm:$0xff]
        %v3179 = vld [vmem:[#allocation2 + $0x80] sm:$0xff]
        %v3180 = vld [vmem:[#allocation2 + $0x88] sm:$0xff]
        %v3181 = vld [vmem:[#allocation2 + $0x90] sm:$0xff]
        %v3182 = vld [vmem:[#allocation2 + $0x98] sm:$0xff]
        %v3183 = vld [vmem:[#allocation2 + $0xa0] sm:$0xff]
        %v3184 = vld [vmem:[#allocation2 + $0xa8] sm:$0xff]
        %v3185 = vld [vmem:[#allocation2 + $0xb0] sm:$0xff]
        %v3186 = vld [vmem:[#allocation2 + $0xb8] sm:$0xff]
        %v3187 = vld [vmem:[#allocation2 + $0xc0] sm:$0xff]
        %v3188 = vld [vmem:[#allocation2 + $0xc8] sm:$0xff]
        %v3189 = vld [vmem:[#allocation2 + $0xd0] sm:$0xff]
        %v3190 = vld [vmem:[#allocation2 + $0xd8] sm:$0xff]
        %v3191 = vld [vmem:[#allocation2 + $0xe0] sm:$0xff]
        %v3192 = vld [vmem:[#allocation2 + $0xe8] sm:$0xff]
        %v3193 = vld [vmem:[#allocation2 + $0xf0] sm:$0xff]
        %v3194 = vld [vmem:[#allocation2 + $0xf8] sm:$0xff]
        %v3195 = vadd.f32 %v3163, %v3005
        %v3196 = vadd.f32 %v3164, %v3010
        %v3197 = vadd.f32 %v3165, %v3015
        %v3198 = vadd.f32 %v3166, %v3020
        %v3199 = vadd.f32 %v3167, %v3025
        %v3200 = vadd.f32 %v3168, %v3030
        %v3201 = vadd.f32 %v3169, %v3035
        %v3202 = vadd.f32 %v3170, %v3040
        %v3203 = vadd.f32 %v3171, %v3045
        %v3204 = vadd.f32 %v3172, %v3050
        %v3205 = vadd.f32 %v3173, %v3055
        %v3206 = vadd.f32 %v3174, %v3060
        %v3207 = vadd.f32 %v3175, %v3065
        %v3208 = vadd.f32 %v3176, %v3070
        %v3209 = vadd.f32 %v3177, %v3075
        %v3210 = vadd.f32 %v3178, %v3080
        %v3211 = vadd.f32 %v3179, %v3085
        %v3212 = vadd.f32 %v3180, %v3090
        %v3213 = vadd.f32 %v3181, %v3095
        %v3214 = vadd.f32 %v3182, %v3100
        %v3215 = vadd.f32 %v3183, %v3105
        %v3216 = vadd.f32 %v3184, %v3110
        %v3217 = vadd.f32 %v3185, %v3115
        %v3218 = vadd.f32 %v3186, %v3120
        %v3219 = vadd.f32 %v3187, %v3125
        %v3220 = vadd.f32 %v3188, %v3130
        %v3221 = vadd.f32 %v3189, %v3135
        %v3222 = vadd.f32 %v3190, %v3140
        %v3223 = vadd.f32 %v3191, %v3145
        %v3224 = vadd.f32 %v3192, %v3150
        %v3225 = vadd.f32 %v3193, %v3155
        %v3226 = vadd.f32 %v3194, %v3160
        %3227 = vst [vmem:[#allocation2] sm:$0xff] %v3195
        %3228 = vst [vmem:[#allocation2 + $0x8] sm:$0xff] %v3196
        %3229 = vst [vmem:[#allocation2 + $0x10] sm:$0xff] %v3197
        %3230 = vst [vmem:[#allocation2 + $0x18] sm:$0xff] %v3198
        %3231 = vst [vmem:[#allocation2 + $0x20] sm:$0xff] %v3199
        %3232 = vst [vmem:[#allocation2 + $0x28] sm:$0xff] %v3200
        %3233 = vst [vmem:[#allocation2 + $0x30] sm:$0xff] %v3201
        %3234 = vst [vmem:[#allocation2 + $0x38] sm:$0xff] %v3202
        %3235 = vst [vmem:[#allocation2 + $0x40] sm:$0xff] %v3203
        %3236 = vst [vmem:[#allocation2 + $0x48] sm:$0xff] %v3204
        %3237 = vst [vmem:[#allocation2 + $0x50] sm:$0xff] %v3205
        %3238 = vst [vmem:[#allocation2 + $0x58] sm:$0xff] %v3206
        %3239 = vst [vmem:[#allocation2 + $0x60] sm:$0xff] %v3207
        %3240 = vst [vmem:[#allocation2 + $0x68] sm:$0xff] %v3208
        %3241 = vst [vmem:[#allocation2 + $0x70] sm:$0xff] %v3209
        %3242 = vst [vmem:[#allocation2 + $0x78] sm:$0xff] %v3210
        %3243 = vst [vmem:[#allocation2 + $0x80] sm:$0xff] %v3211
        %3244 = vst [vmem:[#allocation2 + $0x88] sm:$0xff] %v3212
        %3245 = vst [vmem:[#allocation2 + $0x90] sm:$0xff] %v3213
        %3246 = vst [vmem:[#allocation2 + $0x98] sm:$0xff] %v3214
        %3247 = vst [vmem:[#allocation2 + $0xa0] sm:$0xff] %v3215
        %3248 = vst [vmem:[#allocation2 + $0xa8] sm:$0xff] %v3216
        %3249 = vst [vmem:[#allocation2 + $0xb0] sm:$0xff] %v3217
        %3250 = vst [vmem:[#allocation2 + $0xb8] sm:$0xff] %v3218
        %3251 = vst [vmem:[#allocation2 + $0xc0] sm:$0xff] %v3219
        %3252 = vst [vmem:[#allocation2 + $0xc8] sm:$0xff] %v3220
        %3253 = vst [vmem:[#allocation2 + $0xd0] sm:$0xff] %v3221
        %3254 = vst [vmem:[#allocation2 + $0xd8] sm:$0xff] %v3222
        %3255 = vst [vmem:[#allocation2 + $0xe0] sm:$0xff] %v3223
        %3256 = vst [vmem:[#allocation2 + $0xe8] sm:$0xff] %v3224
        %3257 = vst [vmem:[#allocation2 + $0xf0] sm:$0xff] %v3225
        %3258 = vst [vmem:[#allocation2 + $0xf8] sm:$0xff] %v3226
        %v3259 = vld [vmem:[%s2804 + $0x1] sm:$0xff]
        %v3260 = vld [vmem:[%s2804 + $0x9] sm:$0xff]
        %v3261 = vld [vmem:[%s2804 + $0x19] sm:$0xff]
        %v3262 = vld [vmem:[%s2804 + $0x21] sm:$0xff]
        %v3263 = vld [vmem:[%s2804 + $0x31] sm:$0xff]
        %v3264 = vld [vmem:[%s2804 + $0x39] sm:$0xff]
        %v3265 = vld [vmem:[%s2804 + $0x49] sm:$0xff]
        %v3266 = vld [vmem:[%s2804 + $0x51] sm:$0xff]
        %v3267 = vld [vmem:[%s2804 + $0x61] sm:$0xff]
        %v3268 = vld [vmem:[%s2804 + $0x69] sm:$0xff]
        %v3269 = vld [vmem:[%s2804 + $0x79] sm:$0xff]
        %v3270 = vld [vmem:[%s2804 + $0x81] sm:$0xff]
        %v3271 = vld [vmem:[%s2804 + $0x91] sm:$0xff]
        %v3272 = vld [vmem:[%s2804 + $0x99] sm:$0xff]
        %v3273 = vld [vmem:[%s2804 + $0xa9] sm:$0xff]
        %v3274 = vld [vmem:[%s2804 + $0xb1] sm:$0xff]
        %v3275 = vld [vmem:[%s2804 + $0xc1] sm:$0xff]
        %v3276 = vld [vmem:[%s2804 + $0xc9] sm:$0xff]
        %v3277 = vld [vmem:[%s2804 + $0xd9] sm:$0xff]
        %v3278 = vld [vmem:[%s2804 + $0xe1] sm:$0xff]
        %v3279 = vld [vmem:[%s2804 + $0xf1] sm:$0xff]
        %v3280 = vld [vmem:[%s2804 + $0xf9] sm:$0xff]
        %v3281 = vld [vmem:[%s2804 + $0x109] sm:$0xff]
        %v3282 = vld [vmem:[%s2804 + $0x111] sm:$0xff]
        %v3283 = vld [vmem:[%s2804 + $0x121] sm:$0xff]
        %v3284 = vld [vmem:[%s2804 + $0x129] sm:$0xff]
        %v3285 = vld [vmem:[%s2804 + $0x139] sm:$0xff]
        %v3286 = vld [vmem:[%s2804 + $0x141] sm:$0xff]
        %v3287 = vld [vmem:[%s2804 + $0x151] sm:$0xff]
        %v3288 = vld [vmem:[%s2804 + $0x159] sm:$0xff]
        %v3289 = vld [vmem:[%s2804 + $0x169] sm:$0xff]
        %v3290 = vld [vmem:[%s2804 + $0x171] sm:$0xff]
        %s3291 = scalar_lea.vmem %s1, 28
        %v3292 = vld [vmem:[%s3291] sm:$0xf]
        %v3294 = vsel %vm175, %v3259, 0
        %v3297 = vsel %vm175, %v3260, 0
        %v3300 = vsel %vm175, %v3261, 0
        %v3303 = vsel %vm175, %v3262, 0
        %v3306 = vsel %vm175, %v3263, 0
        %v3309 = vsel %vm175, %v3264, 0
        %v3312 = vsel %vm175, %v3265, 0
        %v3315 = vsel %vm175, %v3266, 0
        %v3318 = vsel %vm175, %v3267, 0
        %v3321 = vsel %vm175, %v3268, 0
        %v3324 = vsel %vm175, %v3269, 0
        %v3327 = vsel %vm175, %v3270, 0
        %v3330 = vsel %vm175, %v3271, 0
        %v3333 = vsel %vm175, %v3272, 0
        %v3336 = vsel %vm175, %v3273, 0
        %v3339 = vsel %vm175, %v3274, 0
        %v3342 = vsel %vm175, %v3275, 0
        %v3345 = vsel %vm175, %v3276, 0
        %v3348 = vsel %vm175, %v3277, 0
        %v3351 = vsel %vm175, %v3278, 0
        %v3354 = vsel %vm175, %v3279, 0
        %v3357 = vsel %vm175, %v3280, 0
        %v3360 = vsel %vm175, %v3281, 0
        %v3363 = vsel %vm175, %v3282, 0
        %v3366 = vsel %vm175, %v3283, 0
        %v3369 = vsel %vm175, %v3284, 0
        %v3372 = vsel %vm175, %v3285, 0
        %v3375 = vsel %vm175, %v3286, 0
        %v3378 = vsel %vm175, %v3287, 0
        %v3381 = vsel %vm175, %v3288, 0
        %v3384 = vsel %vm175, %v3289, 0
        %v3387 = vsel %vm175, %v3290, 0
        %v3390 = vsel %vm272, %v3292, 0
        %3392 = vmatprep.subr.mxu0 0.0
        %3393 = vmatpush1.msra.mxu0 %v3390
        %3394 = vmatprep.subr.mxu0 0.0
        %3395 = vmatpush1.msra.mxu0 0.0
        %3396 = vmatprep.subr.mxu0 0.0
        %3397 = vmatpush1.msra.mxu0 0.0
        %3398 = vmatprep.subr.mxu0 0.0
        %3399 = vmatpush1.msra.mxu0 0.0
        %3400 = vmatprep.subr.mxu0 0.0
        %3401 = vmatpush1.msra.mxu0 0.0
        %3402 = vmatprep.subr.mxu0 0.0
        %3403 = vmatpush1.msra.mxu0 0.0
        %3404 = vmatprep.subr.mxu0 0.0
        %3405 = vmatpush1.msra.mxu0 0.0
        %3406 = vmatprep.subr.mxu0 0.0
        %3407 = vmatpush1.msra.mxu0 0.0
        %3408 = vmatprep.subr.mxu0 0.0
        %3409 = vmatpush1.msra.mxu0 0.0
        %3410 = vmatprep.subr.mxu0 0.0
        %3411 = vmatpush1.msra.mxu0 0.0
        %3412 = vmatprep.subr.mxu0 0.0
        %3413 = vmatpush1.msra.mxu0 0.0
        %3414 = vmatprep.subr.mxu0 0.0
        %3415 = vmatpush1.msra.mxu0 0.0
        %3416 = vmatprep.subr.mxu0 0.0
        %3417 = vmatpush1.msra.mxu0 0.0
        %3418 = vmatprep.subr.mxu0 0.0
        %3419 = vmatpush1.msra.mxu0 0.0
        %3420 = vmatprep.subr.mxu0 0.0
        %3421 = vmatpush1.msra.mxu0 0.0
        %3422 = vmatprep.subr.mxu0 0.0
        %3423 = vmatpush1.msra.mxu0 0.0
        %3424 = vmatprep.subr.mxu0 0.0
        %3425 = vmatpush1.msra.mxu0 0.0
        %3426 = vmatprep.subr.mxu0 0.0
        %3427 = vmatpush1.msra.mxu0 0.0
        %3428 = vmatprep.subr.mxu0 0.0
        %3429 = vmatpush1.msra.mxu0 0.0
        %3430 = vmatprep.subr.mxu0 0.0
        %3431 = vmatpush1.msra.mxu0 0.0
        %3432 = vmatprep.subr.mxu0 0.0
        %3433 = vmatpush1.msra.mxu0 0.0
        %3434 = vmatprep.subr.mxu0 0.0
        %3435 = vmatpush1.msra.mxu0 0.0
        %3436 = vmatprep.subr.mxu0 0.0
        %3437 = vmatpush1.msra.mxu0 0.0
        %3438 = vmatprep.subr.mxu0 0.0
        %3439 = vmatpush1.msra.mxu0 0.0
        %3440 = vmatprep.subr.mxu0 0.0
        %3441 = vmatpush1.msra.mxu0 0.0
        %3442 = vmatprep.subr.mxu0 0.0
        %3443 = vmatpush1.msra.mxu0 0.0
        %3444 = vmatprep.subr.mxu0 0.0
        %3445 = vmatpush1.msra.mxu0 0.0
        %3446 = vmatprep.subr.mxu0 0.0
        %3447 = vmatpush1.msra.mxu0 0.0
        %3448 = vmatprep.subr.mxu0 0.0
        %3449 = vmatpush1.msra.mxu0 0.0
        %3450 = vmatprep.subr.mxu0 0.0
        %3451 = vmatpush1.msra.mxu0 0.0
        %3452 = vmatprep.subr.mxu0 0.0
        %3453 = vmatpush1.msra.mxu0 0.0
        %3454 = vmatprep.subr.mxu0 0.0
        %3455 = vmatpush1.msra.mxu0 0.0
        %3456 = vmatprep.mubr.f32.mxu0 0.0
        %3457 = vmatmul.mubr.f32.gmra.mrb[0].mxu0 %v3294
        %v3458 = vpop.f32.mrb[0].mxu0
        %v3459 = vadd.f32 0.0, %v3458
        %v3460 = vpop.f32.mrb[0].mxu0
        %3461 = vmatprep.mubr.f32.mxu0 0.0
        %3462 = vmatmul.mubr.f32.gmra.mrb[0].mxu0 %v3297
        %v3463 = vpop.f32.mrb[0].mxu0
        %v3464 = vadd.f32 0.0, %v3463
        %v3465 = vpop.f32.mrb[0].mxu0
        %3466 = vmatprep.mubr.f32.mxu0 0.0
        %3467 = vmatmul.mubr.f32.gmra.mrb[0].mxu0 %v3300
        %v3468 = vpop.f32.mrb[0].mxu0
        %v3469 = vadd.f32 0.0, %v3468
        %v3470 = vpop.f32.mrb[0].mxu0
        %3471 = vmatprep.mubr.f32.mxu0 0.0
        %3472 = vmatmul.mubr.f32.gmra.mrb[0].mxu0 %v3303
        %v3473 = vpop.f32.mrb[0].mxu0
        %v3474 = vadd.f32 0.0, %v3473
        %v3475 = vpop.f32.mrb[0].mxu0
        %3476 = vmatprep.mubr.f32.mxu0 0.0
        %3477 = vmatmul.mubr.f32.gmra.mrb[0].mxu0 %v3306
        %v3478 = vpop.f32.mrb[0].mxu0
        %v3479 = vadd.f32 0.0, %v3478
        %v3480 = vpop.f32.mrb[0].mxu0
        %3481 = vmatprep.mubr.f32.mxu0 0.0
        %3482 = vmatmul.mubr.f32.gmra.mrb[0].mxu0 %v3309
        %v3483 = vpop.f32.mrb[0].mxu0
        %v3484 = vadd.f32 0.0, %v3483
        %v3485 = vpop.f32.mrb[0].mxu0
        %3486 = vmatprep.mubr.f32.mxu0 0.0
        %3487 = vmatmul.mubr.f32.gmra.mrb[0].mxu0 %v3312
        %v3488 = vpop.f32.mrb[0].mxu0
        %v3489 = vadd.f32 0.0, %v3488
        %v3490 = vpop.f32.mrb[0].mxu0
        %3491 = vmatprep.mubr.f32.mxu0 0.0
        %3492 = vmatmul.mubr.f32.gmra.mrb[0].mxu0 %v3315
        %v3493 = vpop.f32.mrb[0].mxu0
        %v3494 = vadd.f32 0.0, %v3493
        %v3495 = vpop.f32.mrb[0].mxu0
        %3496 = vmatprep.mubr.f32.mxu0 0.0
        %3497 = vmatmul.mubr.f32.gmra.mrb[0].mxu0 %v3318
        %v3498 = vpop.f32.mrb[0].mxu0
        %v3499 = vadd.f32 0.0, %v3498
        %v3500 = vpop.f32.mrb[0].mxu0
        %3501 = vmatprep.mubr.f32.mxu0 0.0
        %3502 = vmatmul.mubr.f32.gmra.mrb[0].mxu0 %v3321
        %v3503 = vpop.f32.mrb[0].mxu0
        %v3504 = vadd.f32 0.0, %v3503
        %v3505 = vpop.f32.mrb[0].mxu0
        %3506 = vmatprep.mubr.f32.mxu0 0.0
        %3507 = vmatmul.mubr.f32.gmra.mrb[0].mxu0 %v3324
        %v3508 = vpop.f32.mrb[0].mxu0
        %v3509 = vadd.f32 0.0, %v3508
        %v3510 = vpop.f32.mrb[0].mxu0
        %3511 = vmatprep.mubr.f32.mxu0 0.0
        %3512 = vmatmul.mubr.f32.gmra.mrb[0].mxu0 %v3327
        %v3513 = vpop.f32.mrb[0].mxu0
        %v3514 = vadd.f32 0.0, %v3513
        %v3515 = vpop.f32.mrb[0].mxu0
        %3516 = vmatprep.mubr.f32.mxu0 0.0
        %3517 = vmatmul.mubr.f32.gmra.mrb[0].mxu0 %v3330
        %v3518 = vpop.f32.mrb[0].mxu0
        %v3519 = vadd.f32 0.0, %v3518
        %v3520 = vpop.f32.mrb[0].mxu0
        %3521 = vmatprep.mubr.f32.mxu0 0.0
        %3522 = vmatmul.mubr.f32.gmra.mrb[0].mxu0 %v3333
        %v3523 = vpop.f32.mrb[0].mxu0
        %v3524 = vadd.f32 0.0, %v3523
        %v3525 = vpop.f32.mrb[0].mxu0
        %3526 = vmatprep.mubr.f32.mxu0 0.0
        %3527 = vmatmul.mubr.f32.gmra.mrb[0].mxu0 %v3336
        %v3528 = vpop.f32.mrb[0].mxu0
        %v3529 = vadd.f32 0.0, %v3528
        %v3530 = vpop.f32.mrb[0].mxu0
        %3531 = vmatprep.mubr.f32.mxu0 0.0
        %3532 = vmatmul.mubr.f32.gmra.mrb[0].mxu0 %v3339
        %v3533 = vpop.f32.mrb[0].mxu0
        %v3534 = vadd.f32 0.0, %v3533
        %v3535 = vpop.f32.mrb[0].mxu0
        %3536 = vmatprep.mubr.f32.mxu0 0.0
        %3537 = vmatmul.mubr.f32.gmra.mrb[0].mxu0 %v3342
        %v3538 = vpop.f32.mrb[0].mxu0
        %v3539 = vadd.f32 0.0, %v3538
        %v3540 = vpop.f32.mrb[0].mxu0
        %3541 = vmatprep.mubr.f32.mxu0 0.0
        %3542 = vmatmul.mubr.f32.gmra.mrb[0].mxu0 %v3345
        %v3543 = vpop.f32.mrb[0].mxu0
        %v3544 = vadd.f32 0.0, %v3543
        %v3545 = vpop.f32.mrb[0].mxu0
        %3546 = vmatprep.mubr.f32.mxu0 0.0
        %3547 = vmatmul.mubr.f32.gmra.mrb[0].mxu0 %v3348
        %v3548 = vpop.f32.mrb[0].mxu0
        %v3549 = vadd.f32 0.0, %v3548
        %v3550 = vpop.f32.mrb[0].mxu0
        %3551 = vmatprep.mubr.f32.mxu0 0.0
        %3552 = vmatmul.mubr.f32.gmra.mrb[0].mxu0 %v3351
        %v3553 = vpop.f32.mrb[0].mxu0
        %v3554 = vadd.f32 0.0, %v3553
        %v3555 = vpop.f32.mrb[0].mxu0
        %3556 = vmatprep.mubr.f32.mxu0 0.0
        %3557 = vmatmul.mubr.f32.gmra.mrb[0].mxu0 %v3354
        %v3558 = vpop.f32.mrb[0].mxu0
        %v3559 = vadd.f32 0.0, %v3558
        %v3560 = vpop.f32.mrb[0].mxu0
        %3561 = vmatprep.mubr.f32.mxu0 0.0
        %3562 = vmatmul.mubr.f32.gmra.mrb[0].mxu0 %v3357
        %v3563 = vpop.f32.mrb[0].mxu0
        %v3564 = vadd.f32 0.0, %v3563
        %v3565 = vpop.f32.mrb[0].mxu0
        %3566 = vmatprep.mubr.f32.mxu0 0.0
        %3567 = vmatmul.mubr.f32.gmra.mrb[0].mxu0 %v3360
        %v3568 = vpop.f32.mrb[0].mxu0
        %v3569 = vadd.f32 0.0, %v3568
        %v3570 = vpop.f32.mrb[0].mxu0
        %3571 = vmatprep.mubr.f32.mxu0 0.0
        %3572 = vmatmul.mubr.f32.gmra.mrb[0].mxu0 %v3363
        %v3573 = vpop.f32.mrb[0].mxu0
        %v3574 = vadd.f32 0.0, %v3573
        %v3575 = vpop.f32.mrb[0].mxu0
        %3576 = vmatprep.mubr.f32.mxu0 0.0
        %3577 = vmatmul.mubr.f32.gmra.mrb[0].mxu0 %v3366
        %v3578 = vpop.f32.mrb[0].mxu0
        %v3579 = vadd.f32 0.0, %v3578
        %v3580 = vpop.f32.mrb[0].mxu0
        %3581 = vmatprep.mubr.f32.mxu0 0.0
        %3582 = vmatmul.mubr.f32.gmra.mrb[0].mxu0 %v3369
        %v3583 = vpop.f32.mrb[0].mxu0
        %v3584 = vadd.f32 0.0, %v3583
        %v3585 = vpop.f32.mrb[0].mxu0
        %3586 = vmatprep.mubr.f32.mxu0 0.0
        %3587 = vmatmul.mubr.f32.gmra.mrb[0].mxu0 %v3372
        %v3588 = vpop.f32.mrb[0].mxu0
        %v3589 = vadd.f32 0.0, %v3588
        %v3590 = vpop.f32.mrb[0].mxu0
        %3591 = vmatprep.mubr.f32.mxu0 0.0
        %3592 = vmatmul.mubr.f32.gmra.mrb[0].mxu0 %v3375
        %v3593 = vpop.f32.mrb[0].mxu0
        %v3594 = vadd.f32 0.0, %v3593
        %v3595 = vpop.f32.mrb[0].mxu0
        %3596 = vmatprep.mubr.f32.mxu0 0.0
        %3597 = vmatmul.mubr.f32.gmra.mrb[0].mxu0 %v3378
        %v3598 = vpop.f32.mrb[0].mxu0
        %v3599 = vadd.f32 0.0, %v3598
        %v3600 = vpop.f32.mrb[0].mxu0
        %3601 = vmatprep.mubr.f32.mxu0 0.0
        %3602 = vmatmul.mubr.f32.gmra.mrb[0].mxu0 %v3381
        %v3603 = vpop.f32.mrb[0].mxu0
        %v3604 = vadd.f32 0.0, %v3603
        %v3605 = vpop.f32.mrb[0].mxu0
        %3606 = vmatprep.mubr.f32.mxu0 0.0
        %3607 = vmatmul.mubr.f32.gmra.mrb[0].mxu0 %v3384
        %v3608 = vpop.f32.mrb[0].mxu0
        %v3609 = vadd.f32 0.0, %v3608
        %v3610 = vpop.f32.mrb[0].mxu0
        %3611 = vmatprep.mubr.f32.mxu0 0.0
        %3612 = vmatmul.mubr.f32.gmra.mrb[0].mxu0 %v3387
        %v3613 = vpop.f32.mrb[0].mxu0
        %v3614 = vadd.f32 0.0, %v3613
        %v3615 = vpop.f32.mrb[0].mxu0
        %3616 = vdwg.mxu0
        %v3617 = vld [vmem:[#allocation2] sm:$0xff]
        %v3618 = vld [vmem:[#allocation2 + $0x8] sm:$0xff]
        %v3619 = vld [vmem:[#allocation2 + $0x10] sm:$0xff]
        %v3620 = vld [vmem:[#allocation2 + $0x18] sm:$0xff]
        %v3621 = vld [vmem:[#allocation2 + $0x20] sm:$0xff]
        %v3622 = vld [vmem:[#allocation2 + $0x28] sm:$0xff]
        %v3623 = vld [vmem:[#allocation2 + $0x30] sm:$0xff]
        %v3624 = vld [vmem:[#allocation2 + $0x38] sm:$0xff]
        %v3625 = vld [vmem:[#allocation2 + $0x40] sm:$0xff]
        %v3626 = vld [vmem:[#allocation2 + $0x48] sm:$0xff]
        %v3627 = vld [vmem:[#allocation2 + $0x50] sm:$0xff]
        %v3628 = vld [vmem:[#allocation2 + $0x58] sm:$0xff]
        %v3629 = vld [vmem:[#allocation2 + $0x60] sm:$0xff]
        %v3630 = vld [vmem:[#allocation2 + $0x68] sm:$0xff]
        %v3631 = vld [vmem:[#allocation2 + $0x70] sm:$0xff]
        %v3632 = vld [vmem:[#allocation2 + $0x78] sm:$0xff]
        %v3633 = vld [vmem:[#allocation2 + $0x80] sm:$0xff]
        %v3634 = vld [vmem:[#allocation2 + $0x88] sm:$0xff]
        %v3635 = vld [vmem:[#allocation2 + $0x90] sm:$0xff]
        %v3636 = vld [vmem:[#allocation2 + $0x98] sm:$0xff]
        %v3637 = vld [vmem:[#allocation2 + $0xa0] sm:$0xff]
        %v3638 = vld [vmem:[#allocation2 + $0xa8] sm:$0xff]
        %v3639 = vld [vmem:[#allocation2 + $0xb0] sm:$0xff]
        %v3640 = vld [vmem:[#allocation2 + $0xb8] sm:$0xff]
        %v3641 = vld [vmem:[#allocation2 + $0xc0] sm:$0xff]
        %v3642 = vld [vmem:[#allocation2 + $0xc8] sm:$0xff]
        %v3643 = vld [vmem:[#allocation2 + $0xd0] sm:$0xff]
        %v3644 = vld [vmem:[#allocation2 + $0xd8] sm:$0xff]
        %v3645 = vld [vmem:[#allocation2 + $0xe0] sm:$0xff]
        %v3646 = vld [vmem:[#allocation2 + $0xe8] sm:$0xff]
        %v3647 = vld [vmem:[#allocation2 + $0xf0] sm:$0xff]
        %v3648 = vld [vmem:[#allocation2 + $0xf8] sm:$0xff]
        %v3649 = vadd.f32 %v3617, %v3459
        %v3650 = vadd.f32 %v3618, %v3464
        %v3651 = vadd.f32 %v3619, %v3469
        %v3652 = vadd.f32 %v3620, %v3474
        %v3653 = vadd.f32 %v3621, %v3479
        %v3654 = vadd.f32 %v3622, %v3484
        %v3655 = vadd.f32 %v3623, %v3489
        %v3656 = vadd.f32 %v3624, %v3494
        %v3657 = vadd.f32 %v3625, %v3499
        %v3658 = vadd.f32 %v3626, %v3504
        %v3659 = vadd.f32 %v3627, %v3509
        %v3660 = vadd.f32 %v3628, %v3514
        %v3661 = vadd.f32 %v3629, %v3519
        %v3662 = vadd.f32 %v3630, %v3524
        %v3663 = vadd.f32 %v3631, %v3529
        %v3664 = vadd.f32 %v3632, %v3534
        %v3665 = vadd.f32 %v3633, %v3539
        %v3666 = vadd.f32 %v3634, %v3544
        %v3667 = vadd.f32 %v3635, %v3549
        %v3668 = vadd.f32 %v3636, %v3554
        %v3669 = vadd.f32 %v3637, %v3559
        %v3670 = vadd.f32 %v3638, %v3564
        %v3671 = vadd.f32 %v3639, %v3569
        %v3672 = vadd.f32 %v3640, %v3574
        %v3673 = vadd.f32 %v3641, %v3579
        %v3674 = vadd.f32 %v3642, %v3584
        %v3675 = vadd.f32 %v3643, %v3589
        %v3676 = vadd.f32 %v3644, %v3594
        %v3677 = vadd.f32 %v3645, %v3599
        %v3678 = vadd.f32 %v3646, %v3604
        %v3679 = vadd.f32 %v3647, %v3609
        %v3680 = vadd.f32 %v3648, %v3614
        %3681 = vst [vmem:[#allocation2] sm:$0xff] %v3649
        %3682 = vst [vmem:[#allocation2 + $0x8] sm:$0xff] %v3650
        %3683 = vst [vmem:[#allocation2 + $0x10] sm:$0xff] %v3651
        %3684 = vst [vmem:[#allocation2 + $0x18] sm:$0xff] %v3652
        %3685 = vst [vmem:[#allocation2 + $0x20] sm:$0xff] %v3653
        %3686 = vst [vmem:[#allocation2 + $0x28] sm:$0xff] %v3654
        %3687 = vst [vmem:[#allocation2 + $0x30] sm:$0xff] %v3655
        %3688 = vst [vmem:[#allocation2 + $0x38] sm:$0xff] %v3656
        %3689 = vst [vmem:[#allocation2 + $0x40] sm:$0xff] %v3657
        %3690 = vst [vmem:[#allocation2 + $0x48] sm:$0xff] %v3658
        %3691 = vst [vmem:[#allocation2 + $0x50] sm:$0xff] %v3659
        %3692 = vst [vmem:[#allocation2 + $0x58] sm:$0xff] %v3660
        %3693 = vst [vmem:[#allocation2 + $0x60] sm:$0xff] %v3661
        %3694 = vst [vmem:[#allocation2 + $0x68] sm:$0xff] %v3662
        %3695 = vst [vmem:[#allocation2 + $0x70] sm:$0xff] %v3663
        %3696 = vst [vmem:[#allocation2 + $0x78] sm:$0xff] %v3664
        %3697 = vst [vmem:[#allocation2 + $0x80] sm:$0xff] %v3665
        %3698 = vst [vmem:[#allocation2 + $0x88] sm:$0xff] %v3666
        %3699 = vst [vmem:[#allocation2 + $0x90] sm:$0xff] %v3667
        %3700 = vst [vmem:[#allocation2 + $0x98] sm:$0xff] %v3668
        %3701 = vst [vmem:[#allocation2 + $0xa0] sm:$0xff] %v3669
        %3702 = vst [vmem:[#allocation2 + $0xa8] sm:$0xff] %v3670
        %3703 = vst [vmem:[#allocation2 + $0xb0] sm:$0xff] %v3671
        %3704 = vst [vmem:[#allocation2 + $0xb8] sm:$0xff] %v3672
        %3705 = vst [vmem:[#allocation2 + $0xc0] sm:$0xff] %v3673
        %3706 = vst [vmem:[#allocation2 + $0xc8] sm:$0xff] %v3674
        %3707 = vst [vmem:[#allocation2 + $0xd0] sm:$0xff] %v3675
        %3708 = vst [vmem:[#allocation2 + $0xd8] sm:$0xff] %v3676
        %3709 = vst [vmem:[#allocation2 + $0xe0] sm:$0xff] %v3677
        %3710 = vst [vmem:[#allocation2 + $0xe8] sm:$0xff] %v3678
        %3711 = vst [vmem:[#allocation2 + $0xf0] sm:$0xff] %v3679
        %3712 = vst [vmem:[#allocation2 + $0xf8] sm:$0xff] %v3680
        %v3713 = vld [vmem:[%s2804 + $0x2] sm:$0xff]
        %v3714 = vld [vmem:[%s2804 + $0xa] sm:$0xff]
        %v3715 = vld [vmem:[%s2804 + $0x1a] sm:$0xff]
        %v3716 = vld [vmem:[%s2804 + $0x22] sm:$0xff]
        %v3717 = vld [vmem:[%s2804 + $0x32] sm:$0xff]
        %v3718 = vld [vmem:[%s2804 + $0x3a] sm:$0xff]
        %v3719 = vld [vmem:[%s2804 + $0x4a] sm:$0xff]
        %v3720 = vld [vmem:[%s2804 + $0x52] sm:$0xff]
        %v3721 = vld [vmem:[%s2804 + $0x62] sm:$0xff]
        %v3722 = vld [vmem:[%s2804 + $0x6a] sm:$0xff]
        %v3723 = vld [vmem:[%s2804 + $0x7a] sm:$0xff]
        %v3724 = vld [vmem:[%s2804 + $0x82] sm:$0xff]
        %v3725 = vld [vmem:[%s2804 + $0x92] sm:$0xff]
        %v3726 = vld [vmem:[%s2804 + $0x9a] sm:$0xff]
        %v3727 = vld [vmem:[%s2804 + $0xaa] sm:$0xff]
        %v3728 = vld [vmem:[%s2804 + $0xb2] sm:$0xff]
        %v3729 = vld [vmem:[%s2804 + $0xc2] sm:$0xff]
        %v3730 = vld [vmem:[%s2804 + $0xca] sm:$0xff]
        %v3731 = vld [vmem:[%s2804 + $0xda] sm:$0xff]
        %v3732 = vld [vmem:[%s2804 + $0xe2] sm:$0xff]
        %v3733 = vld [vmem:[%s2804 + $0xf2] sm:$0xff]
        %v3734 = vld [vmem:[%s2804 + $0xfa] sm:$0xff]
        %v3735 = vld [vmem:[%s2804 + $0x10a] sm:$0xff]
        %v3736 = vld [vmem:[%s2804 + $0x112] sm:$0xff]
        %v3737 = vld [vmem:[%s2804 + $0x122] sm:$0xff]
        %v3738 = vld [vmem:[%s2804 + $0x12a] sm:$0xff]
        %v3739 = vld [vmem:[%s2804 + $0x13a] sm:$0xff]
        %v3740 = vld [vmem:[%s2804 + $0x142] sm:$0xff]
        %v3741 = vld [vmem:[%s2804 + $0x152] sm:$0xff]
        %v3742 = vld [vmem:[%s2804 + $0x15a] sm:$0xff]
        %v3743 = vld [vmem:[%s2804 + $0x16a] sm:$0xff]
        %v3744 = vld [vmem:[%s2804 + $0x172] sm:$0xff]
        %s3745 = scalar_lea.vmem %s1, 32
        %v3746 = vld [vmem:[%s3745] sm:$0xf]
        %v3748 = vsel %vm175, %v3713, 0
        %v3751 = vsel %vm175, %v3714, 0
        %v3754 = vsel %vm175, %v3715, 0
        %v3757 = vsel %vm175, %v3716, 0
        %v3760 = vsel %vm175, %v3717, 0
        %v3763 = vsel %vm175, %v3718, 0
        %v3766 = vsel %vm175, %v3719, 0
        %v3769 = vsel %vm175, %v3720, 0
        %v3772 = vsel %vm175, %v3721, 0
        %v3775 = vsel %vm175, %v3722, 0
        %v3778 = vsel %vm175, %v3723, 0
        %v3781 = vsel %vm175, %v3724, 0
        %v3784 = vsel %vm175, %v3725, 0
        %v3787 = vsel %vm175, %v3726, 0
        %v3790 = vsel %vm175, %v3727, 0
        %v3793 = vsel %vm175, %v3728, 0
        %v3796 = vsel %vm175, %v3729, 0
        %v3799 = vsel %vm175, %v3730, 0
        %v3802 = vsel %vm175, %v3731, 0
        %v3805 = vsel %vm175, %v3732, 0
        %v3808 = vsel %vm175, %v3733, 0
        %v3811 = vsel %vm175, %v3734, 0
        %v3814 = vsel %vm175, %v3735, 0
        %v3817 = vsel %vm175, %v3736, 0
        %v3820 = vsel %vm175, %v3737, 0
        %v3823 = vsel %vm175, %v3738, 0
        %v3826 = vsel %vm175, %v3739, 0
        %v3829 = vsel %vm175, %v3740, 0
        %v3832 = vsel %vm175, %v3741, 0
        %v3835 = vsel %vm175, %v3742, 0
        %v3838 = vsel %vm175, %v3743, 0
        %v3841 = vsel %vm175, %v3744, 0
        %v3844 = vsel %vm272, %v3746, 0
        %3846 = vmatprep.subr.mxu0 0.0
        %3847 = vmatpush1.msra.mxu0 %v3844
        %3848 = vmatprep.subr.mxu0 0.0
        %3849 = vmatpush1.msra.mxu0 0.0
        %3850 = vmatprep.subr.mxu0 0.0
        %3851 = vmatpush1.msra.mxu0 0.0
        %3852 = vmatprep.subr.mxu0 0.0
        %3853 = vmatpush1.msra.mxu0 0.0
        %3854 = vmatprep.subr.mxu0 0.0
        %3855 = vmatpush1.msra.mxu0 0.0
        %3856 = vmatprep.subr.mxu0 0.0
        %3857 = vmatpush1.msra.mxu0 0.0
        %3858 = vmatprep.subr.mxu0 0.0
        %3859 = vmatpush1.msra.mxu0 0.0
        %3860 = vmatprep.subr.mxu0 0.0
        %3861 = vmatpush1.msra.mxu0 0.0
        %3862 = vmatprep.subr.mxu0 0.0
        %3863 = vmatpush1.msra.mxu0 0.0
        %3864 = vmatprep.subr.mxu0 0.0
        %3865 = vmatpush1.msra.mxu0 0.0
        %3866 = vmatprep.subr.mxu0 0.0
        %3867 = vmatpush1.msra.mxu0 0.0
        %3868 = vmatprep.subr.mxu0 0.0
        %3869 = vmatpush1.msra.mxu0 0.0
        %3870 = vmatprep.subr.mxu0 0.0
        %3871 = vmatpush1.msra.mxu0 0.0
        %3872 = vmatprep.subr.mxu0 0.0
        %3873 = vmatpush1.msra.mxu0 0.0
        %3874 = vmatprep.subr.mxu0 0.0
        %3875 = vmatpush1.msra.mxu0 0.0
        %3876 = vmatprep.subr.mxu0 0.0
        %3877 = vmatpush1.msra.mxu0 0.0
        %3878 = vmatprep.subr.mxu0 0.0
        %3879 = vmatpush1.msra.mxu0 0.0
        %3880 = vmatprep.subr.mxu0 0.0
        %3881 = vmatpush1.msra.mxu0 0.0
        %3882 = vmatprep.subr.mxu0 0.0
        %3883 = vmatpush1.msra.mxu0 0.0
        %3884 = vmatprep.subr.mxu0 0.0
        %3885 = vmatpush1.msra.mxu0 0.0
        %3886 = vmatprep.subr.mxu0 0.0
        %3887 = vmatpush1.msra.mxu0 0.0
        %3888 = vmatprep.subr.mxu0 0.0
        %3889 = vmatpush1.msra.mxu0 0.0
        %3890 = vmatprep.subr.mxu0 0.0
        %3891 = vmatpush1.msra.mxu0 0.0
        %3892 = vmatprep.subr.mxu0 0.0
        %3893 = vmatpush1.msra.mxu0 0.0
        %3894 = vmatprep.subr.mxu0 0.0
        %3895 = vmatpush1.msra.mxu0 0.0
        %3896 = vmatprep.subr.mxu0 0.0
        %3897 = vmatpush1.msra.mxu0 0.0
        %3898 = vmatprep.subr.mxu0 0.0
        %3899 = vmatpush1.msra.mxu0 0.0
        %3900 = vmatprep.subr.mxu0 0.0
        %3901 = vmatpush1.msra.mxu0 0.0
        %3902 = vmatprep.subr.mxu0 0.0
        %3903 = vmatpush1.msra.mxu0 0.0
        %3904 = vmatprep.subr.mxu0 0.0
        %3905 = vmatpush1.msra.mxu0 0.0
        %3906 = vmatprep.subr.mxu0 0.0
        %3907 = vmatpush1.msra.mxu0 0.0
        %3908 = vmatprep.subr.mxu0 0.0
        %3909 = vmatpush1.msra.mxu0 0.0
        %3910 = vmatprep.mubr.f32.mxu0 0.0
        %3911 = vmatmul.mubr.f32.gmra.mrb[0].mxu0 %v3748
        %v3912 = vpop.f32.mrb[0].mxu0
        %v3913 = vadd.f32 0.0, %v3912
        %v3914 = vpop.f32.mrb[0].mxu0
        %3915 = vmatprep.mubr.f32.mxu0 0.0
        %3916 = vmatmul.mubr.f32.gmra.mrb[0].mxu0 %v3751
        %v3917 = vpop.f32.mrb[0].mxu0
        %v3918 = vadd.f32 0.0, %v3917
        %v3919 = vpop.f32.mrb[0].mxu0
        %3920 = vmatprep.mubr.f32.mxu0 0.0
        %3921 = vmatmul.mubr.f32.gmra.mrb[0].mxu0 %v3754
        %v3922 = vpop.f32.mrb[0].mxu0
        %v3923 = vadd.f32 0.0, %v3922
        %v3924 = vpop.f32.mrb[0].mxu0
        %3925 = vmatprep.mubr.f32.mxu0 0.0
        %3926 = vmatmul.mubr.f32.gmra.mrb[0].mxu0 %v3757
        %v3927 = vpop.f32.mrb[0].mxu0
        %v3928 = vadd.f32 0.0, %v3927
        %v3929 = vpop.f32.mrb[0].mxu0
        %3930 = vmatprep.mubr.f32.mxu0 0.0
        %3931 = vmatmul.mubr.f32.gmra.mrb[0].mxu0 %v3760
        %v3932 = vpop.f32.mrb[0].mxu0
        %v3933 = vadd.f32 0.0, %v3932
        %v3934 = vpop.f32.mrb[0].mxu0
        %3935 = vmatprep.mubr.f32.mxu0 0.0
        %3936 = vmatmul.mubr.f32.gmra.mrb[0].mxu0 %v3763
        %v3937 = vpop.f32.mrb[0].mxu0
        %v3938 = vadd.f32 0.0, %v3937
        %v3939 = vpop.f32.mrb[0].mxu0
        %3940 = vmatprep.mubr.f32.mxu0 0.0
        %3941 = vmatmul.mubr.f32.gmra.mrb[0].mxu0 %v3766
        %v3942 = vpop.f32.mrb[0].mxu0
        %v3943 = vadd.f32 0.0, %v3942
        %v3944 = vpop.f32.mrb[0].mxu0
        %3945 = vmatprep.mubr.f32.mxu0 0.0
        %3946 = vmatmul.mubr.f32.gmra.mrb[0].mxu0 %v3769
        %v3947 = vpop.f32.mrb[0].mxu0
        %v3948 = vadd.f32 0.0, %v3947
        %v3949 = vpop.f32.mrb[0].mxu0
        %3950 = vmatprep.mubr.f32.mxu0 0.0
        %3951 = vmatmul.mubr.f32.gmra.mrb[0].mxu0 %v3772
        %v3952 = vpop.f32.mrb[0].mxu0
        %v3953 = vadd.f32 0.0, %v3952
        %v3954 = vpop.f32.mrb[0].mxu0
        %3955 = vmatprep.mubr.f32.mxu0 0.0
        %3956 = vmatmul.mubr.f32.gmra.mrb[0].mxu0 %v3775
        %v3957 = vpop.f32.mrb[0].mxu0
        %v3958 = vadd.f32 0.0, %v3957
        %v3959 = vpop.f32.mrb[0].mxu0
        %3960 = vmatprep.mubr.f32.mxu0 0.0
        %3961 = vmatmul.mubr.f32.gmra.mrb[0].mxu0 %v3778
        %v3962 = vpop.f32.mrb[0].mxu0
        %v3963 = vadd.f32 0.0, %v3962
        %v3964 = vpop.f32.mrb[0].mxu0
        %3965 = vmatprep.mubr.f32.mxu0 0.0
        %3966 = vmatmul.mubr.f32.gmra.mrb[0].mxu0 %v3781
        %v3967 = vpop.f32.mrb[0].mxu0
        %v3968 = vadd.f32 0.0, %v3967
        %v3969 = vpop.f32.mrb[0].mxu0
        %3970 = vmatprep.mubr.f32.mxu0 0.0
        %3971 = vmatmul.mubr.f32.gmra.mrb[0].mxu0 %v3784
        %v3972 = vpop.f32.mrb[0].mxu0
        %v3973 = vadd.f32 0.0, %v3972
        %v3974 = vpop.f32.mrb[0].mxu0
        %3975 = vmatprep.mubr.f32.mxu0 0.0
        %3976 = vmatmul.mubr.f32.gmra.mrb[0].mxu0 %v3787
        %v3977 = vpop.f32.mrb[0].mxu0
        %v3978 = vadd.f32 0.0, %v3977
        %v3979 = vpop.f32.mrb[0].mxu0
        %3980 = vmatprep.mubr.f32.mxu0 0.0
        %3981 = vmatmul.mubr.f32.gmra.mrb[0].mxu0 %v3790
        %v3982 = vpop.f32.mrb[0].mxu0
        %v3983 = vadd.f32 0.0, %v3982
        %v3984 = vpop.f32.mrb[0].mxu0
        %3985 = vmatprep.mubr.f32.mxu0 0.0
        %3986 = vmatmul.mubr.f32.gmra.mrb[0].mxu0 %v3793
        %v3987 = vpop.f32.mrb[0].mxu0
        %v3988 = vadd.f32 0.0, %v3987
        %v3989 = vpop.f32.mrb[0].mxu0
        %3990 = vmatprep.mubr.f32.mxu0 0.0
        %3991 = vmatmul.mubr.f32.gmra.mrb[0].mxu0 %v3796
        %v3992 = vpop.f32.mrb[0].mxu0
        %v3993 = vadd.f32 0.0, %v3992
        %v3994 = vpop.f32.mrb[0].mxu0
        %3995 = vmatprep.mubr.f32.mxu0 0.0
        %3996 = vmatmul.mubr.f32.gmra.mrb[0].mxu0 %v3799
        %v3997 = vpop.f32.mrb[0].mxu0
        %v3998 = vadd.f32 0.0, %v3997
        %v3999 = vpop.f32.mrb[0].mxu0
        %4000 = vmatprep.mubr.f32.mxu0 0.0
        %4001 = vmatmul.mubr.f32.gmra.mrb[0].mxu0 %v3802
        %v4002 = vpop.f32.mrb[0].mxu0
        %v4003 = vadd.f32 0.0, %v4002
        %v4004 = vpop.f32.mrb[0].mxu0
        %4005 = vmatprep.mubr.f32.mxu0 0.0
        %4006 = vmatmul.mubr.f32.gmra.mrb[0].mxu0 %v3805
        %v4007 = vpop.f32.mrb[0].mxu0
        %v4008 = vadd.f32 0.0, %v4007
        %v4009 = vpop.f32.mrb[0].mxu0
        %4010 = vmatprep.mubr.f32.mxu0 0.0
        %4011 = vmatmul.mubr.f32.gmra.mrb[0].mxu0 %v3808
        %v4012 = vpop.f32.mrb[0].mxu0
        %v4013 = vadd.f32 0.0, %v4012
        %v4014 = vpop.f32.mrb[0].mxu0
        %4015 = vmatprep.mubr.f32.mxu0 0.0
        %4016 = vmatmul.mubr.f32.gmra.mrb[0].mxu0 %v3811
        %v4017 = vpop.f32.mrb[0].mxu0
        %v4018 = vadd.f32 0.0, %v4017
        %v4019 = vpop.f32.mrb[0].mxu0
        %4020 = vmatprep.mubr.f32.mxu0 0.0
        %4021 = vmatmul.mubr.f32.gmra.mrb[0].mxu0 %v3814
        %v4022 = vpop.f32.mrb[0].mxu0
        %v4023 = vadd.f32 0.0, %v4022
        %v4024 = vpop.f32.mrb[0].mxu0
        %4025 = vmatprep.mubr.f32.mxu0 0.0
        %4026 = vmatmul.mubr.f32.gmra.mrb[0].mxu0 %v3817
        %v4027 = vpop.f32.mrb[0].mxu0
        %v4028 = vadd.f32 0.0, %v4027
        %v4029 = vpop.f32.mrb[0].mxu0
        %4030 = vmatprep.mubr.f32.mxu0 0.0
        %4031 = vmatmul.mubr.f32.gmra.mrb[0].mxu0 %v3820
        %v4032 = vpop.f32.mrb[0].mxu0
        %v4033 = vadd.f32 0.0, %v4032
        %v4034 = vpop.f32.mrb[0].mxu0
        %4035 = vmatprep.mubr.f32.mxu0 0.0
        %4036 = vmatmul.mubr.f32.gmra.mrb[0].mxu0 %v3823
        %v4037 = vpop.f32.mrb[0].mxu0
        %v4038 = vadd.f32 0.0, %v4037
        %v4039 = vpop.f32.mrb[0].mxu0
        %4040 = vmatprep.mubr.f32.mxu0 0.0
        %4041 = vmatmul.mubr.f32.gmra.mrb[0].mxu0 %v3826
        %v4042 = vpop.f32.mrb[0].mxu0
        %v4043 = vadd.f32 0.0, %v4042
        %v4044 = vpop.f32.mrb[0].mxu0
        %4045 = vmatprep.mubr.f32.mxu0 0.0
        %4046 = vmatmul.mubr.f32.gmra.mrb[0].mxu0 %v3829
        %v4047 = vpop.f32.mrb[0].mxu0
        %v4048 = vadd.f32 0.0, %v4047
        %v4049 = vpop.f32.mrb[0].mxu0
        %4050 = vmatprep.mubr.f32.mxu0 0.0
        %4051 = vmatmul.mubr.f32.gmra.mrb[0].mxu0 %v3832
        %v4052 = vpop.f32.mrb[0].mxu0
        %v4053 = vadd.f32 0.0, %v4052
        %v4054 = vpop.f32.mrb[0].mxu0
        %4055 = vmatprep.mubr.f32.mxu0 0.0
        %4056 = vmatmul.mubr.f32.gmra.mrb[0].mxu0 %v3835
        %v4057 = vpop.f32.mrb[0].mxu0
        %v4058 = vadd.f32 0.0, %v4057
        %v4059 = vpop.f32.mrb[0].mxu0
        %4060 = vmatprep.mubr.f32.mxu0 0.0
        %4061 = vmatmul.mubr.f32.gmra.mrb[0].mxu0 %v3838
        %v4062 = vpop.f32.mrb[0].mxu0
        %v4063 = vadd.f32 0.0, %v4062
        %v4064 = vpop.f32.mrb[0].mxu0
        %4065 = vmatprep.mubr.f32.mxu0 0.0
        %4066 = vmatmul.mubr.f32.gmra.mrb[0].mxu0 %v3841
        %v4067 = vpop.f32.mrb[0].mxu0
        %v4068 = vadd.f32 0.0, %v4067
        %v4069 = vpop.f32.mrb[0].mxu0
        %4070 = vdwg.mxu0
        %v4071 = vld [vmem:[#allocation2] sm:$0xff]
        %v4072 = vld [vmem:[#allocation2 + $0x8] sm:$0xff]
        %v4073 = vld [vmem:[#allocation2 + $0x10] sm:$0xff]
        %v4074 = vld [vmem:[#allocation2 + $0x18] sm:$0xff]
        %v4075 = vld [vmem:[#allocation2 + $0x20] sm:$0xff]
        %v4076 = vld [vmem:[#allocation2 + $0x28] sm:$0xff]
        %v4077 = vld [vmem:[#allocation2 + $0x30] sm:$0xff]
        %v4078 = vld [vmem:[#allocation2 + $0x38] sm:$0xff]
        %v4079 = vld [vmem:[#allocation2 + $0x40] sm:$0xff]
        %v4080 = vld [vmem:[#allocation2 + $0x48] sm:$0xff]
        %v4081 = vld [vmem:[#allocation2 + $0x50] sm:$0xff]
        %v4082 = vld [vmem:[#allocation2 + $0x58] sm:$0xff]
        %v4083 = vld [vmem:[#allocation2 + $0x60] sm:$0xff]
        %v4084 = vld [vmem:[#allocation2 + $0x68] sm:$0xff]
        %v4085 = vld [vmem:[#allocation2 + $0x70] sm:$0xff]
        %v4086 = vld [vmem:[#allocation2 + $0x78] sm:$0xff]
        %v4087 = vld [vmem:[#allocation2 + $0x80] sm:$0xff]
        %v4088 = vld [vmem:[#allocation2 + $0x88] sm:$0xff]
        %v4089 = vld [vmem:[#allocation2 + $0x90] sm:$0xff]
        %v4090 = vld [vmem:[#allocation2 + $0x98] sm:$0xff]
        %v4091 = vld [vmem:[#allocation2 + $0xa0] sm:$0xff]
        %v4092 = vld [vmem:[#allocation2 + $0xa8] sm:$0xff]
        %v4093 = vld [vmem:[#allocation2 + $0xb0] sm:$0xff]
        %v4094 = vld [vmem:[#allocation2 + $0xb8] sm:$0xff]
        %v4095 = vld [vmem:[#allocation2 + $0xc0] sm:$0xff]
        %v4096 = vld [vmem:[#allocation2 + $0xc8] sm:$0xff]
        %v4097 = vld [vmem:[#allocation2 + $0xd0] sm:$0xff]
        %v4098 = vld [vmem:[#allocation2 + $0xd8] sm:$0xff]
        %v4099 = vld [vmem:[#allocation2 + $0xe0] sm:$0xff]
        %v4100 = vld [vmem:[#allocation2 + $0xe8] sm:$0xff]
        %v4101 = vld [vmem:[#allocation2 + $0xf0] sm:$0xff]
        %v4102 = vld [vmem:[#allocation2 + $0xf8] sm:$0xff]
        %v4103 = vadd.f32 %v4071, %v3913
        %v4104 = vadd.f32 %v4072, %v3918
        %v4105 = vadd.f32 %v4073, %v3923
        %v4106 = vadd.f32 %v4074, %v3928
        %v4107 = vadd.f32 %v4075, %v3933
        %v4108 = vadd.f32 %v4076, %v3938
        %v4109 = vadd.f32 %v4077, %v3943
        %v4110 = vadd.f32 %v4078, %v3948
        %v4111 = vadd.f32 %v4079, %v3953
        %v4112 = vadd.f32 %v4080, %v3958
        %v4113 = vadd.f32 %v4081, %v3963
        %v4114 = vadd.f32 %v4082, %v3968
        %v4115 = vadd.f32 %v4083, %v3973
        %v4116 = vadd.f32 %v4084, %v3978
        %v4117 = vadd.f32 %v4085, %v3983
        %v4118 = vadd.f32 %v4086, %v3988
        %v4119 = vadd.f32 %v4087, %v3993
        %v4120 = vadd.f32 %v4088, %v3998
        %v4121 = vadd.f32 %v4089, %v4003
        %v4122 = vadd.f32 %v4090, %v4008
        %v4123 = vadd.f32 %v4091, %v4013
        %v4124 = vadd.f32 %v4092, %v4018
        %v4125 = vadd.f32 %v4093, %v4023
        %v4126 = vadd.f32 %v4094, %v4028
        %v4127 = vadd.f32 %v4095, %v4033
        %v4128 = vadd.f32 %v4096, %v4038
        %v4129 = vadd.f32 %v4097, %v4043
        %v4130 = vadd.f32 %v4098, %v4048
        %v4131 = vadd.f32 %v4099, %v4053
        %v4132 = vadd.f32 %v4100, %v4058
        %v4133 = vadd.f32 %v4101, %v4063
        %v4134 = vadd.f32 %v4102, %v4068
        %4135 = vst [vmem:[#allocation2] sm:$0xff] %v4103
        %4136 = vst [vmem:[#allocation2 + $0x8] sm:$0xff] %v4104
        %4137 = vst [vmem:[#allocation2 + $0x10] sm:$0xff] %v4105
        %4138 = vst [vmem:[#allocation2 + $0x18] sm:$0xff] %v4106
        %4139 = vst [vmem:[#allocation2 + $0x20] sm:$0xff] %v4107
        %4140 = vst [vmem:[#allocation2 + $0x28] sm:$0xff] %v4108
        %4141 = vst [vmem:[#allocation2 + $0x30] sm:$0xff] %v4109
        %4142 = vst [vmem:[#allocation2 + $0x38] sm:$0xff] %v4110
        %4143 = vst [vmem:[#allocation2 + $0x40] sm:$0xff] %v4111
        %4144 = vst [vmem:[#allocation2 + $0x48] sm:$0xff] %v4112
        %4145 = vst [vmem:[#allocation2 + $0x50] sm:$0xff] %v4113
        %4146 = vst [vmem:[#allocation2 + $0x58] sm:$0xff] %v4114
        %4147 = vst [vmem:[#allocation2 + $0x60] sm:$0xff] %v4115
        %4148 = vst [vmem:[#allocation2 + $0x68] sm:$0xff] %v4116
        %4149 = vst [vmem:[#allocation2 + $0x70] sm:$0xff] %v4117
        %4150 = vst [vmem:[#allocation2 + $0x78] sm:$0xff] %v4118
        %4151 = vst [vmem:[#allocation2 + $0x80] sm:$0xff] %v4119
        %4152 = vst [vmem:[#allocation2 + $0x88] sm:$0xff] %v4120
        %4153 = vst [vmem:[#allocation2 + $0x90] sm:$0xff] %v4121
        %4154 = vst [vmem:[#allocation2 + $0x98] sm:$0xff] %v4122
        %4155 = vst [vmem:[#allocation2 + $0xa0] sm:$0xff] %v4123
        %4156 = vst [vmem:[#allocation2 + $0xa8] sm:$0xff] %v4124
        %4157 = vst [vmem:[#allocation2 + $0xb0] sm:$0xff] %v4125
        %4158 = vst [vmem:[#allocation2 + $0xb8] sm:$0xff] %v4126
        %4159 = vst [vmem:[#allocation2 + $0xc0] sm:$0xff] %v4127
        %4160 = vst [vmem:[#allocation2 + $0xc8] sm:$0xff] %v4128
        %4161 = vst [vmem:[#allocation2 + $0xd0] sm:$0xff] %v4129
        %4162 = vst [vmem:[#allocation2 + $0xd8] sm:$0xff] %v4130
        %4163 = vst [vmem:[#allocation2 + $0xe0] sm:$0xff] %v4131
        %4164 = vst [vmem:[#allocation2 + $0xe8] sm:$0xff] %v4132
        %4165 = vst [vmem:[#allocation2 + $0xf0] sm:$0xff] %v4133
        %4166 = vst [vmem:[#allocation2 + $0xf8] sm:$0xff] %v4134
        %v4167 = vld [vmem:[#allocation2] sm:$0xff]
        %v4168 = vld [vmem:[#allocation2 + $0x8] sm:$0xff]
        %v4169 = vld [vmem:[#allocation2 + $0x10] sm:$0xff]
        %v4170 = vld [vmem:[#allocation2 + $0x18] sm:$0xff]
        %v4171 = vld [vmem:[#allocation2 + $0x20] sm:$0xff]
        %v4172 = vld [vmem:[#allocation2 + $0x28] sm:$0xff]
        %v4173 = vld [vmem:[#allocation2 + $0x30] sm:$0xff]
        %v4174 = vld [vmem:[#allocation2 + $0x38] sm:$0xff]
        %v4175 = vld [vmem:[#allocation2 + $0x40] sm:$0xff]
        %v4176 = vld [vmem:[#allocation2 + $0x48] sm:$0xff]
        %v4177 = vld [vmem:[#allocation2 + $0x50] sm:$0xff]
        %v4178 = vld [vmem:[#allocation2 + $0x58] sm:$0xff]
        %v4179 = vld [vmem:[#allocation2 + $0x60] sm:$0xff]
        %v4180 = vld [vmem:[#allocation2 + $0x68] sm:$0xff]
        %v4181 = vld [vmem:[#allocation2 + $0x70] sm:$0xff]
        %v4182 = vld [vmem:[#allocation2 + $0x78] sm:$0xff]
        %v4183 = vld [vmem:[#allocation2 + $0x80] sm:$0xff]
        %v4184 = vld [vmem:[#allocation2 + $0x88] sm:$0xff]
        %v4185 = vld [vmem:[#allocation2 + $0x90] sm:$0xff]
        %v4186 = vld [vmem:[#allocation2 + $0x98] sm:$0xff]
        %v4187 = vld [vmem:[#allocation2 + $0xa0] sm:$0xff]
        %v4188 = vld [vmem:[#allocation2 + $0xa8] sm:$0xff]
        %v4189 = vld [vmem:[#allocation2 + $0xb0] sm:$0xff]
        %v4190 = vld [vmem:[#allocation2 + $0xb8] sm:$0xff]
        %v4191 = vld [vmem:[#allocation2 + $0xc0] sm:$0xff]
        %v4192 = vld [vmem:[#allocation2 + $0xc8] sm:$0xff]
        %v4193 = vld [vmem:[#allocation2 + $0xd0] sm:$0xff]
        %v4194 = vld [vmem:[#allocation2 + $0xd8] sm:$0xff]
        %v4195 = vld [vmem:[#allocation2 + $0xe0] sm:$0xff]
        %v4196 = vld [vmem:[#allocation2 + $0xe8] sm:$0xff]
        %v4197 = vld [vmem:[#allocation2 + $0xf0] sm:$0xff]
        %v4198 = vld [vmem:[#allocation2 + $0xf8] sm:$0xff]
        %v4199 = vadd.f32 %v4167, %v4168
        %v4200 = vadd.f32 %v4199, %v4169
        %v4201 = vadd.f32 %v4200, %v4170
        %v4202 = vadd.f32 %v4201, %v4171
        %v4203 = vadd.f32 %v4202, %v4172
        %v4204 = vadd.f32 %v4203, %v4173
        %v4205 = vadd.f32 %v4204, %v4174
        %v4206 = vadd.f32 %v4205, %v4175
        %v4207 = vadd.f32 %v4206, %v4176
        %v4208 = vadd.f32 %v4207, %v4177
        %v4209 = vadd.f32 %v4208, %v4178
        %v4210 = vadd.f32 %v4209, %v4179
        %v4211 = vadd.f32 %v4210, %v4180
        %v4212 = vadd.f32 %v4211, %v4181
        %v4213 = vadd.f32 %v4212, %v4182
        %v4214 = vadd.f32 %v4213, %v4183
        %v4215 = vadd.f32 %v4214, %v4184
        %v4216 = vadd.f32 %v4215, %v4185
        %v4217 = vadd.f32 %v4216, %v4186
        %v4218 = vadd.f32 %v4217, %v4187
        %v4219 = vadd.f32 %v4218, %v4188
        %v4220 = vadd.f32 %v4219, %v4189
        %v4221 = vadd.f32 %v4220, %v4190
        %v4222 = vadd.f32 %v4221, %v4191
        %v4223 = vadd.f32 %v4222, %v4192
        %v4224 = vadd.f32 %v4223, %v4193
        %v4225 = vadd.f32 %v4224, %v4194
        %v4226 = vadd.f32 %v4225, %v4195
        %v4227 = vadd.f32 %v4226, %v4196
        %v4228 = vadd.f32 %v4227, %v4197
        %v4229 = vadd.f32 %v4228, %v4198
        %v4230 = vrot.slane %v4229, 4
        %v4231 = vadd.f32 %v4229, %v4230
        %v4232 = vrot.slane %v4231, 2
        %v4233 = vadd.f32 %v4231, %v4232
        %v4234 = vrot.slane %v4233, 1
        %v4235 = vadd.f32 %v4233, %v4234
        %4236 = vst [vmem:[%s136] sm:$0x1] %v4235
        %v4237 = vmul.f32 %v4167, %v4167
        %v4238 = vmul.f32 %v4168, %v4168
        %v4239 = vmul.f32 %v4169, %v4169
        %v4240 = vmul.f32 %v4170, %v4170
        %v4241 = vmul.f32 %v4171, %v4171
        %v4242 = vmul.f32 %v4172, %v4172
        %v4243 = vmul.f32 %v4173, %v4173
        %v4244 = vmul.f32 %v4174, %v4174
        %v4245 = vmul.f32 %v4175, %v4175
        %v4246 = vmul.f32 %v4176, %v4176
        %v4247 = vmul.f32 %v4177, %v4177
        %v4248 = vmul.f32 %v4178, %v4178
        %v4249 = vmul.f32 %v4179, %v4179
        %v4250 = vmul.f32 %v4180, %v4180
        %v4251 = vmul.f32 %v4181, %v4181
        %v4252 = vmul.f32 %v4182, %v4182
        %v4253 = vmul.f32 %v4183, %v4183
        %v4254 = vmul.f32 %v4184, %v4184
        %v4255 = vmul.f32 %v4185, %v4185
        %v4256 = vmul.f32 %v4186, %v4186
        %v4257 = vmul.f32 %v4187, %v4187
        %v4258 = vmul.f32 %v4188, %v4188
        %v4259 = vmul.f32 %v4189, %v4189
        %v4260 = vmul.f32 %v4190, %v4190
        %v4261 = vmul.f32 %v4191, %v4191
        %v4262 = vmul.f32 %v4192, %v4192
        %v4263 = vmul.f32 %v4193, %v4193
        %v4264 = vmul.f32 %v4194, %v4194
        %v4265 = vmul.f32 %v4195, %v4195
        %v4266 = vmul.f32 %v4196, %v4196
        %v4267 = vmul.f32 %v4197, %v4197
        %v4268 = vmul.f32 %v4198, %v4198
        %v4269 = vadd.f32 %v4237, %v4238
        %v4270 = vadd.f32 %v4269, %v4239
        %v4271 = vadd.f32 %v4270, %v4240
        %v4272 = vadd.f32 %v4271, %v4241
        %v4273 = vadd.f32 %v4272, %v4242
        %v4274 = vadd.f32 %v4273, %v4243
        %v4275 = vadd.f32 %v4274, %v4244
        %v4276 = vadd.f32 %v4275, %v4245
        %v4277 = vadd.f32 %v4276, %v4246
        %v4278 = vadd.f32 %v4277, %v4247
        %v4279 = vadd.f32 %v4278, %v4248
        %v4280 = vadd.f32 %v4279, %v4249
        %v4281 = vadd.f32 %v4280, %v4250
        %v4282 = vadd.f32 %v4281, %v4251
        %v4283 = vadd.f32 %v4282, %v4252
        %v4284 = vadd.f32 %v4283, %v4253
        %v4285 = vadd.f32 %v4284, %v4254
        %v4286 = vadd.f32 %v4285, %v4255
        %v4287 = vadd.f32 %v4286, %v4256
        %v4288 = vadd.f32 %v4287, %v4257
        %v4289 = vadd.f32 %v4288, %v4258
        %v4290 = vadd.f32 %v4289, %v4259
        %v4291 = vadd.f32 %v4290, %v4260
        %v4292 = vadd.f32 %v4291, %v4261
        %v4293 = vadd.f32 %v4292, %v4262
        %v4294 = vadd.f32 %v4293, %v4263
        %v4295 = vadd.f32 %v4294, %v4264
        %v4296 = vadd.f32 %v4295, %v4265
        %v4297 = vadd.f32 %v4296, %v4266
        %v4298 = vadd.f32 %v4297, %v4267
        %v4299 = vadd.f32 %v4298, %v4268
        %v4300 = vrot.slane %v4299, 4
        %v4301 = vadd.f32 %v4299, %v4300
        %v4302 = vrot.slane %v4301, 2
        %v4303 = vadd.f32 %v4301, %v4302
        %v4304 = vrot.slane %v4303, 1
        %v4305 = vadd.f32 %v4303, %v4304
        %4306 = vst [vmem:[%s136 + $0x1] sm:$0x1] %v4305
        %s4307 = sand.u32 %s71, 1
        %s4308 = scalar_lea.sflag [#allocation4], %s4307
        %s4309 = sand.u32 %s71, 1
        %s4310 = smul.addr %s4309, 2
        %s4311 = scalar_lea.vmem [#allocation3], %s4310
        // Predicated region
        $region29: #{tpu_custom_call.1} parent=27 // pred_check
          %p4312 = pneg %p81
        $region30: #{tpu_custom_call.1} parent=27 // pred_check_branch
          %4314 = sbr.rel (%p4312) target = $region32
        $region31: #{tpu_custom_call.1} parent=27 // pred_region
          %s4316 = ssub.s32 32, 32
          %4317 = vsyncadd %s4308, %s4316
          %s4318 = smul.addr %s16, 32
          %s4319 = scalar_lea.hbm %s2, %s4318
          %s4321 = sshll.u32 %s4311, 4
          %s4322 = int_to_ptr.vmem [resolvable:$true] %s4321
          %4324 = dma.vmem_to_hbm [thread:$0]  %s4322, 32, %s4319, %s4308
        $region32: #{tpu_custom_call.1} parent=27 // pred_fallthru
          _
      $region28: #{tpu_custom_call.1} parent=5 // pred_fallthru
        _
      %p4325 = scmp.le.s32.totalorder 2, %s11
      // Predicated region
      $region33: #{tpu_custom_call.1} parent=5 // pred_check
        %p4326 = pneg %p4325
      $region34: #{tpu_custom_call.1} parent=5 // pred_check_branch
        %4328 = sbr.rel (%p4326) target = $region36
      $region35: #{tpu_custom_call.1} parent=5 // pred_region
        %s4329 = ssub.s32 %s11, 2
        // Predicated region
        $region37: #{tpu_custom_call.1} parent=35 // pred_check
          %p4330 = pneg %p87
        $region38: #{tpu_custom_call.1} parent=35 // pred_check_branch
          %4332 = sbr.rel (%p4330) target = $region40
        $region39: #{tpu_custom_call.1} parent=35 // pred_region
          %s4333 = sand.u32 %s72, 1
          %s4334 = scalar_lea.sflag [#allocation4], %s4333
          %s4335 = sand.u32 %s72, 1
          %s4336 = smul.addr %s4335, 2
          %s4337 = scalar_lea.vmem [#allocation3], %s4336
          %4338 = dma.done %s4334, 32
        $region40: #{tpu_custom_call.1} parent=35 // pred_fallthru
          _
      $region36: #{tpu_custom_call.1} parent=5 // pred_fallthru
        _
    $region6: #{tpu_custom_call.1} parent=1 // loop_footer
      %s15 = sadd.s32 1, %s11
    $region7: #{tpu_custom_call.1} parent=1 // loop_footer_branch
      %10 = sbr.rel target = $region3
    $region8: #{tpu_custom_call.1} parent=1 // loop_exit
      _
    %4339 = vsyncpa [#allocation4], 1
    %s4340 = scalar_lea.sflag [#allocation4], 1
    %4341 = vsyncpa %s4340, 1

</llo_original>
